<compile_context>
chip_gen: v7x
topology: tpu7x:2x2x1
jax: 0.10.0
libtpu: 0.0.40
codegen_flags: <defaults>
</compile_context>

<pallas_src>
import jax
import jax.numpy as jnp
from jax.experimental import pallas as pl
from jax.experimental.pallas import tpu as pltpu

LANE = 128


def _round_up(x, m):
    return (x + m - 1) // m * m


def _pad_channels(c):
    # Lane-dense (128) padding only pays off for wide layers; small-channel
    # layers keep a narrow lane footprint (16x less MXU work / HBM traffic).
    if c % LANE == 0:
        return c
    if c >= 64:
        return _round_up(c, LANE)
    return _round_up(c, 8)


def conv_layer_kernel(x_ref, w1_ref, sh1_ref, w2_ref, sh2_ref, o_ref, hpad_ref):
    # x_ref:    (1, H+2, W+2, Cin_p)   zero-padded input tile (one batch element)
    # w1_ref:   (9, Cin_p, Cout_p)     conv1 weights (BN folded), tap-major
    # sh1_ref:  (1, Cout_p)            conv1 folded bias+BN shift (f32)
    # w2_ref:   (9, Cout_p, Cout_p)    conv2 weights (BN folded), tap-major
    # sh2_ref:  (1, Cout_p)            conv2 folded bias+BN shift (f32)
    # o_ref:    (1, H, W, Cout_p)
    # hpad_ref: (H+2, W+2, Cout_p)     VMEM scratch: zero-halo intermediate
    H, W = o_ref.shape[1], o_ref.shape[2]
    Cout_p = o_ref.shape[3]

    # Zero only the 1-pixel halo of the scratch, and only on the first grid
    # step: the scratch persists across grid iterations, the interior is fully
    # overwritten every step, and the halo is never written afterwards.
    @pl.when(pl.program_id(0) == 0)
    def _zero_halo():
        z_row = jnp.zeros((1, W + 2, Cout_p), hpad_ref.dtype)
        z_col = jnp.zeros((H + 2, 1, Cout_p), hpad_ref.dtype)
        hpad_ref[0:1, :, :] = z_row
        hpad_ref[H + 1:H + 2, :, :] = z_row
        hpad_ref[:, 0:1, :] = z_col
        hpad_ref[:, W + 1:W + 2, :] = z_col

    # Row bands keep the f32 accumulator register-resident (M ~= band_h * W).
    band_h = max(1, min(H, 256 // max(W, 1)))

    def conv_band(src_ref, is_batched, w_ref, sh_ref, r0, bh):
        acc = jnp.zeros((bh * W, Cout_p), jnp.float32)
        # dx-outer / dy-inner: stage 3 column-shifted slabs per band (instead
        # of 9 misaligned slice+reshape copies); dy slices are leading-axis
        # views of the staged slab.
        for dx in range(3):
            if is_batched:
                xs = src_ref[0, r0:r0 + bh + 2, dx:dx + W, :]
            else:
                xs = src_ref[r0:r0 + bh + 2, dx:dx + W, :]
            k_ch = xs.shape[-1]
            for dy in range(3):
                patch = xs[dy:dy + bh].reshape(bh * W, k_ch)
                acc += jnp.dot(patch, w_ref[3 * dy + dx],
                               preferred_element_type=jnp.float32)
        return jnp.maximum(acc + sh_ref[...], 0.0)

    # ---- conv1 (3x3, pad=1) + folded BN + ReLU -> scratch interior ----------
    for r0 in range(0, H, band_h):
        bh = min(band_h, H - r0)
        h1 = conv_band(x_ref, True, w1_ref, sh1_ref, r0, bh)
        hpad_ref[1 + r0:1 + r0 + bh, 1:1 + W, :] = (
            h1.reshape(bh, W, Cout_p).astype(hpad_ref.dtype))

    # ---- conv2 (3x3, pad=1) + folded BN + ReLU -> output --------------------
    for r0 in range(0, H, band_h):
        bh = min(band_h, H - r0)
        h2 = conv_band(hpad_ref, False, w2_ref, sh2_ref, r0, bh)
        o_ref[0, r0:r0 + bh, :, :] = (
            h2.reshape(bh, W, Cout_p).astype(o_ref.dtype))


def conv_layer_forward_nhwc(x_nhwc, params):
    """x_nhwc: (B, H, W, Cin) -> (B, H, W, Cout).  Preferred entry point when
    chaining ConvLayers: avoids the NCHW<->NHWC transpose round trip."""
    w1, b1, s1, t1, w2, b2, s2, t2 = params
    B, H, W, Cin = x_nhwc.shape
    Cout = w1.shape[-1]
    Cin_p = _pad_channels(Cin)
    Cout_p = _pad_channels(Cout)
    compute_dtype = x_nhwc.dtype

    # Fold BN (eval-mode scale/shift) into the conv weights and bias in f32:
    #   (conv(x, w) + b) * s + t  ==  conv(x, w * s) + (b * s + t)
    w1f = w1.astype(jnp.float32) * s1[None, None, None, :]
    sh1 = (b1 * s1 + t1).astype(jnp.float32)
    w2f = w2.astype(jnp.float32) * s2[None, None, None, :]
    sh2 = (b2 * s2 + t2).astype(jnp.float32)

    # Zero-pad channels (padded input channels carry zero weights, padded
    # output channels produce ReLU(0) = 0 and carry zero weights into conv2).
    w1p = jnp.zeros((3, 3, Cin_p, Cout_p), jnp.float32).at[:, :, :Cin, :Cout].set(w1f)
    w2p = jnp.zeros((3, 3, Cout_p, Cout_p), jnp.float32).at[:, :, :Cout, :Cout].set(w2f)
    sh1p = jnp.zeros((1, Cout_p), jnp.float32).at[0, :Cout].set(sh1)
    sh2p = jnp.zeros((1, Cout_p), jnp.float32).at[0, :Cout].set(sh2)

    # Tap-major weights; MXU operands match the activation dtype (bf16 inputs
    # get bf16 weights; accumulation stays f32 via preferred_element_type).
    w1p = w1p.reshape(9, Cin_p, Cout_p).astype(compute_dtype)
    w2p = w2p.reshape(9, Cout_p, Cout_p).astype(compute_dtype)

    # Channel padding + 1-pixel zero halo for conv1.
    x = jnp.pad(x_nhwc, ((0, 0), (1, 1), (1, 1), (0, Cin_p - Cin)))

    # Explicit scoped-VMEM limit sized from the actual block/scratch bytes.
    itemsize = jnp.dtype(compute_dtype).itemsize
    blk_bytes = ((H + 2) * (W + 2) * Cin_p + H * W * Cout_p) * itemsize
    w_bytes = (9 * Cin_p * Cout_p + 9 * Cout_p * Cout_p) * itemsize + 2 * Cout_p * 4
    scratch_bytes = (H + 2) * (W + 2) * Cout_p * itemsize
    needed = 2 * (blk_bytes + w_bytes) + scratch_bytes      # double-buffered blocks
    vmem_limit = int(min(max(2 * needed + (8 << 20), 32 << 20), 100 << 20))
    # TODO(synk): cap nearer ~48-56 MiB on v7x (64 MiB physical VMEM).

    out = pl.pallas_call(
        conv_layer_kernel,
        out_shape=jax.ShapeDtypeStruct((B, H, W, Cout_p), x_nhwc.dtype),
        grid_spec=pltpu.PrefetchScalarGridSpec(
            num_scalar_prefetch=0,
            grid=(B,),
            in_specs=[
                pl.BlockSpec((1, H + 2, W + 2, Cin_p), lambda b: (b, 0, 0, 0)),
                pl.BlockSpec((9, Cin_p, Cout_p), lambda b: (0, 0, 0)),
                pl.BlockSpec((1, Cout_p), lambda b: (0, 0)),
                pl.BlockSpec((9, Cout_p, Cout_p), lambda b: (0, 0, 0)),
                pl.BlockSpec((1, Cout_p), lambda b: (0, 0)),
            ],
            out_specs=pl.BlockSpec((1, H, W, Cout_p), lambda b: (b, 0, 0, 0)),
            scratch_shapes=[pltpu.VMEM((H + 2, W + 2, Cout_p), compute_dtype)],
        ),
        compiler_params=pltpu.CompilerParams(
            dimension_semantics=("parallel",),
            vmem_limit_bytes=vmem_limit,
        ),
    )(x, w1p, sh1p, w2p, sh2p)

    if Cout_p != Cout:
        out = out[:, :, :, :Cout]
    return out


def conv_layer_forward(x_nchw, params):
    """Module-boundary entry point: (B, Cin, H, W) -> (B, Cout, H, W)."""
    x = jnp.transpose(x_nchw, (0, 2, 3, 1))            # NCHW -> NHWC
    out = conv_layer_forward_nhwc(x, params)
    return jnp.transpose(out, (0, 3, 1, 2))            # NHWC -> NCHW


def make_params(key, in_channels, out_channels, eps=1e-5):
    """Deterministic synthetic parameters (conv weights HWIO, BN as scale/shift)."""
    ks = jax.random.split(key, 10)
    w1 = 0.1 * jax.random.normal(ks[0], (3, 3, in_channels, out_channels), jnp.float32)
    b1 = 0.1 * jax.random.normal(ks[1], (out_channels,), jnp.float32)
    g1 = 1.0 + 0.1 * jax.random.normal(ks[2], (out_channels,), jnp.float32)
    be1 = 0.1 * jax.random.normal(ks[3], (out_channels,), jnp.float32)
    m1 = 0.1 * jax.random.normal(ks[4], (out_channels,), jnp.float32)
    v1 = jnp.abs(1.0 + 0.1 * jax.random.normal(ks[5], (out_channels,), jnp.float32))

    w2 = 0.1 * jax.random.normal(ks[6], (3, 3, out_channels, out_channels), jnp.float32)
    b2 = 0.1 * jax.random.normal(ks[7], (out_channels,), jnp.float32)
    g2 = 1.0 + 0.1 * jax.random.normal(ks[8], (out_channels,), jnp.float32)
    be2 = 0.1 * jax.random.normal(ks[9], (out_channels,), jnp.float32)
    m2 = jnp.zeros((out_channels,), jnp.float32)
    v2 = jnp.ones((out_channels,), jnp.float32)

    s1 = g1 / jnp.sqrt(v1 + eps)
    t1 = be1 - m1 * s1
    s2 = g2 / jnp.sqrt(v2 + eps)
    t2 = be2 - m2 * s2
    return (w1, b1, s1, t1, w2, b2, s2, t2)


def reference_forward(x_nchw, params):
    """Pure-JAX reference (lax conv) for validation."""
    w1, b1, s1, t1, w2, b2, s2, t2 = params

    def conv_bn_relu(x, w, b, s, t):
        y = jax.lax.conv_general_dilated(
            x, w, window_strides=(1, 1), padding="SAME",
            dimension_numbers=("NCHW", "HWIO", "NCHW"))
        y = (y + b[None, :, None, None]) * s[None, :, None, None] + t[None, :, None, None]
        return jnp.maximum(y, 0.0)

    return conv_bn_relu(conv_bn_relu(x_nchw, w1, b1, s1, t1), w2, b2, s2, t2)


if __name__ == "__main__":
    B, Cin, Cout, H, W = 2, 4, 8, 16, 16
    key = jax.random.PRNGKey(0)
    kx, kp = jax.random.split(key)
    x = jax.random.normal(kx, (B, Cin, H, W), jnp.float32)
    params = make_params(kp, Cin, Cout)

    out = jax.block_until_ready(conv_layer_forward(x, params))
    ref = jax.block_until_ready(reference_forward(x, params))

    assert out.shape == (B, Cout, H, W)
    assert jnp.allclose(out, ref, atol=1e-4, rtol=1e-4), float(jnp.max(jnp.abs(out - ref)))

    print("KERNEL_OK")
</pallas_src>

<mosaic_0001>
module attributes {stable_mosaic.version = 11 : i64} {
  func.func @conv_layer_kernel(%arg0: i32, %arg1: memref<1x18x18x8xf32, #tpu.memory_space<vmem>>, %arg2: memref<9x8x8xf32, #tpu.memory_space<vmem>>, %arg3: memref<1x8xf32, #tpu.memory_space<vmem>>, %arg4: memref<9x8x8xf32, #tpu.memory_space<vmem>>, %arg5: memref<1x8xf32, #tpu.memory_space<vmem>>, %arg6: memref<1x16x16x8xf32, #tpu.memory_space<vmem>>, %arg7: memref<18x18x8xf32, #tpu.memory_space<vmem>>) attributes {dimension_semantics = [#tpu.dimension_semantics<parallel>], iteration_bounds = array<i64: 2>, scalar_prefetch = 0 : i64, scratch_operands = 1 : i64, tpu.core_type = #tpu.core_type<tc>, window_params = [{transform_indices = @transform_0, window_bounds = array<i64: 1, 18, 18, 8>}, {pipeline_mode = #tpu.pipeline_mode<synchronous>, transform_indices = @transform_1, window_bounds = array<i64: 9, 8, 8>}, {pipeline_mode = #tpu.pipeline_mode<synchronous>, transform_indices = @transform_2, window_bounds = array<i64: 1, 8>}, {pipeline_mode = #tpu.pipeline_mode<synchronous>, transform_indices = @transform_3, window_bounds = array<i64: 9, 8, 8>}, {pipeline_mode = #tpu.pipeline_mode<synchronous>, transform_indices = @transform_4, window_bounds = array<i64: 1, 8>}, {transform_indices = @transform_5, window_bounds = array<i64: 1, 16, 16, 8>}]} {
    %c0_i32 = arith.constant 0 : i32
    %0 = arith.cmpi eq, %arg0, %c0_i32 : i32
    %1 = arith.extui %0 : i1 to i32
    %c0_i32_0 = arith.constant 0 : i32
    %2 = arith.cmpi ne, %1, %c0_i32_0 : i32
    scf.if %2 {
      %cst_99 = arith.constant 0.000000e+00 : f32
      %138 = vector.broadcast %cst_99 : f32 to vector<1x18x8xf32>
      %cst_100 = arith.constant 0.000000e+00 : f32
      %139 = vector.broadcast %cst_100 : f32 to vector<18x1x8xf32>
      %c0_101 = arith.constant 0 : index
      %c0_102 = arith.constant 0 : index
      %c0_103 = arith.constant 0 : index
      %140 = vector.load %arg7[%c0_101, %c0_102, %c0_103] : memref<18x18x8xf32, #tpu.memory_space<vmem>>, vector<1x18x8xf32>
      tpu.vector_store %arg7[%c0_101, %c0_102, %c0_103], %138 {strides = array<i32>} : memref<18x18x8xf32, #tpu.memory_space<vmem>>, vector<1x18x8xf32>,
      %c17 = arith.constant 17 : index
      %c0_104 = arith.constant 0 : index
      %c0_105 = arith.constant 0 : index
      %141 = vector.load %arg7[%c17, %c0_104, %c0_105] : memref<18x18x8xf32, #tpu.memory_space<vmem>>, vector<1x18x8xf32>
      tpu.vector_store %arg7[%c17, %c0_104, %c0_105], %138 {strides = array<i32>} : memref<18x18x8xf32, #tpu.memory_space<vmem>>, vector<1x18x8xf32>,
      %c0_106 = arith.constant 0 : index
      %c0_107 = arith.constant 0 : index
      %c0_108 = arith.constant 0 : index
      %142 = vector.load %arg7[%c0_106, %c0_107, %c0_108] : memref<18x18x8xf32, #tpu.memory_space<vmem>>, vector<18x1x8xf32>
      tpu.vector_store %arg7[%c0_106, %c0_107, %c0_108], %139 {strides = array<i32>} : memref<18x18x8xf32, #tpu.memory_space<vmem>>, vector<18x1x8xf32>,
      %c0_109 = arith.constant 0 : index
      %c17_110 = arith.constant 17 : index
      %c0_111 = arith.constant 0 : index
      %143 = vector.load %arg7[%c0_109, %c17_110, %c0_111] : memref<18x18x8xf32, #tpu.memory_space<vmem>>, vector<18x1x8xf32>
      tpu.vector_store %arg7[%c0_109, %c17_110, %c0_111], %139 {strides = array<i32>} : memref<18x18x8xf32, #tpu.memory_space<vmem>>, vector<18x1x8xf32>,
    } else {
    }
    %cst = arith.constant 0.000000e+00 : f32
    %3 = vector.broadcast %cst : f32 to vector<256x8xf32>
    %c0 = arith.constant 0 : index
    %c0_1 = arith.constant 0 : index
    %c0_2 = arith.constant 0 : index
    %c0_3 = arith.constant 0 : index
    %4 = vector.load %arg1[%c0, %c0_1, %c0_2, %c0_3] : memref<1x18x18x8xf32, #tpu.memory_space<vmem>>, vector<1x18x16x8xf32>
    %5 = vector.shape_cast %4 : vector<1x18x16x8xf32> to vector<18x16x8xf32>
    %6 = vector.extract_strided_slice %5 {offsets = [0, 0, 0], sizes = [16, 16, 8], strides = [1, 1, 1]} : vector<18x16x8xf32> to vector<16x16x8xf32>
    %7 = vector.shape_cast %6 : vector<16x16x8xf32> to vector<256x8xf32>
    %c0_4 = arith.constant 0 : index
    %c0_5 = arith.constant 0 : index
    %c0_6 = arith.constant 0 : index
    %8 = vector.load %arg2[%c0_4, %c0_5, %c0_6] : memref<9x8x8xf32, #tpu.memory_space<vmem>>, vector<1x8x8xf32>
    %9 = vector.shape_cast %8 : vector<1x8x8xf32> to vector<8x8xf32>
    %cst_7 = arith.constant dense<0.000000e+00> : vector<256x8xf32>
    %10 = tpu.matmul %7, %9, %cst_7 {dimension_numbers = #tpu.dot_dimension_numbers<[1], [0], [0], [1], [0, 0, 1, 1], [], []>} : vector<256x8xf32>, vector<8x8xf32>, vector<256x8xf32> -> vector<256x8xf32>
    %11 = arith.addf %3, %10 : vector<256x8xf32>
    %12 = vector.extract_strided_slice %5 {offsets = [1, 0, 0], sizes = [16, 16, 8], strides = [1, 1, 1]} : vector<18x16x8xf32> to vector<16x16x8xf32>
    %13 = vector.shape_cast %12 : vector<16x16x8xf32> to vector<256x8xf32>
    %c3 = arith.constant 3 : index
    %c0_8 = arith.constant 0 : index
    %c0_9 = arith.constant 0 : index
    %14 = vector.load %arg2[%c3, %c0_8, %c0_9] : memref<9x8x8xf32, #tpu.memory_space<vmem>>, vector<1x8x8xf32>
    %15 = vector.shape_cast %14 : vector<1x8x8xf32> to vector<8x8xf32>
    %cst_10 = arith.constant dense<0.000000e+00> : vector<256x8xf32>
    %16 = tpu.matmul %13, %15, %cst_10 {dimension_numbers = #tpu.dot_dimension_numbers<[1], [0], [0], [1], [0, 0, 1, 1], [], []>} : vector<256x8xf32>, vector<8x8xf32>, vector<256x8xf32> -> vector<256x8xf32>
    %17 = arith.addf %11, %16 : vector<256x8xf32>
    %18 = vector.extract_strided_slice %5 {offsets = [2, 0, 0], sizes = [16, 16, 8], strides = [1, 1, 1]} : vector<18x16x8xf32> to vector<16x16x8xf32>
    %19 = vector.shape_cast %18 : vector<16x16x8xf32> to vector<256x8xf32>
    %c6 = arith.constant 6 : index
    %c0_11 = arith.constant 0 : index
    %c0_12 = arith.constant 0 : index
    %20 = vector.load %arg2[%c6, %c0_11, %c0_12] : memref<9x8x8xf32, #tpu.memory_space<vmem>>, vector<1x8x8xf32>
    %21 = vector.shape_cast %20 : vector<1x8x8xf32> to vector<8x8xf32>
    %cst_13 = arith.constant dense<0.000000e+00> : vector<256x8xf32>
    %22 = tpu.matmul %19, %21, %cst_13 {dimension_numbers = #tpu.dot_dimension_numbers<[1], [0], [0], [1], [0, 0, 1, 1], [], []>} : vector<256x8xf32>, vector<8x8xf32>, vector<256x8xf32> -> vector<256x8xf32>
    %23 = arith.addf %17, %22 : vector<256x8xf32>
    %c0_14 = arith.constant 0 : index
    %c0_15 = arith.constant 0 : index
    %c1 = arith.constant 1 : index
    %c0_16 = arith.constant 0 : index
    %24 = vector.load %arg1[%c0_14, %c0_15, %c1, %c0_16] : memref<1x18x18x8xf32, #tpu.memory_space<vmem>>, vector<1x18x16x8xf32>
    %25 = vector.shape_cast %24 : vector<1x18x16x8xf32> to vector<18x16x8xf32>
    %26 = vector.extract_strided_slice %25 {offsets = [0, 0, 0], sizes = [16, 16, 8], strides = [1, 1, 1]} : vector<18x16x8xf32> to vector<16x16x8xf32>
    %27 = vector.shape_cast %26 : vector<16x16x8xf32> to vector<256x8xf32>
    %c1_17 = arith.constant 1 : index
    %c0_18 = arith.constant 0 : index
    %c0_19 = arith.constant 0 : index
    %28 = vector.load %arg2[%c1_17, %c0_18, %c0_19] : memref<9x8x8xf32, #tpu.memory_space<vmem>>, vector<1x8x8xf32>
    %29 = vector.shape_cast %28 : vector<1x8x8xf32> to vector<8x8xf32>
    %cst_20 = arith.constant dense<0.000000e+00> : vector<256x8xf32>
    %30 = tpu.matmul %27, %29, %cst_20 {dimension_numbers = #tpu.dot_dimension_numbers<[1], [0], [0], [1], [0, 0, 1, 1], [], []>} : vector<256x8xf32>, vector<8x8xf32>, vector<256x8xf32> -> vector<256x8xf32>
    %31 = arith.addf %23, %30 : vector<256x8xf32>
    %32 = vector.extract_strided_slice %25 {offsets = [1, 0, 0], sizes = [16, 16, 8], strides = [1, 1, 1]} : vector<18x16x8xf32> to vector<16x16x8xf32>
    %33 = vector.shape_cast %32 : vector<16x16x8xf32> to vector<256x8xf32>
    %c4 = arith.constant 4 : index
    %c0_21 = arith.constant 0 : index
    %c0_22 = arith.constant 0 : index
    %34 = vector.load %arg2[%c4, %c0_21, %c0_22] : memref<9x8x8xf32, #tpu.memory_space<vmem>>, vector<1x8x8xf32>
    %35 = vector.shape_cast %34 : vector<1x8x8xf32> to vector<8x8xf32>
    %cst_23 = arith.constant dense<0.000000e+00> : vector<256x8xf32>
    %36 = tpu.matmul %33, %35, %cst_23 {dimension_numbers = #tpu.dot_dimension_numbers<[1], [0], [0], [1], [0, 0, 1, 1], [], []>} : vector<256x8xf32>, vector<8x8xf32>, vector<256x8xf32> -> vector<256x8xf32>
    %37 = arith.addf %31, %36 : vector<256x8xf32>
    %38 = vector.extract_strided_slice %25 {offsets = [2, 0, 0], sizes = [16, 16, 8], strides = [1, 1, 1]} : vector<18x16x8xf32> to vector<16x16x8xf32>
    %39 = vector.shape_cast %38 : vector<16x16x8xf32> to vector<256x8xf32>
    %c7 = arith.constant 7 : index
    %c0_24 = arith.constant 0 : index
    %c0_25 = arith.constant 0 : index
    %40 = vector.load %arg2[%c7, %c0_24, %c0_25] : memref<9x8x8xf32, #tpu.memory_space<vmem>>, vector<1x8x8xf32>
    %41 = vector.shape_cast %40 : vector<1x8x8xf32> to vector<8x8xf32>
    %cst_26 = arith.constant dense<0.000000e+00> : vector<256x8xf32>
    %42 = tpu.matmul %39, %41, %cst_26 {dimension_numbers = #tpu.dot_dimension_numbers<[1], [0], [0], [1], [0, 0, 1, 1], [], []>} : vector<256x8xf32>, vector<8x8xf32>, vector<256x8xf32> -> vector<256x8xf32>
    %43 = arith.addf %37, %42 : vector<256x8xf32>
    %c0_27 = arith.constant 0 : index
    %c0_28 = arith.constant 0 : index
    %c2 = arith.constant 2 : index
    %c0_29 = arith.constant 0 : index
    %44 = vector.load %arg1[%c0_27, %c0_28, %c2, %c0_29] : memref<1x18x18x8xf32, #tpu.memory_space<vmem>>, vector<1x18x16x8xf32>
    %45 = vector.shape_cast %44 : vector<1x18x16x8xf32> to vector<18x16x8xf32>
    %46 = vector.extract_strided_slice %45 {offsets = [0, 0, 0], sizes = [16, 16, 8], strides = [1, 1, 1]} : vector<18x16x8xf32> to vector<16x16x8xf32>
    %47 = vector.shape_cast %46 : vector<16x16x8xf32> to vector<256x8xf32>
    %c2_30 = arith.constant 2 : index
    %c0_31 = arith.constant 0 : index
    %c0_32 = arith.constant 0 : index
    %48 = vector.load %arg2[%c2_30, %c0_31, %c0_32] : memref<9x8x8xf32, #tpu.memory_space<vmem>>, vector<1x8x8xf32>
    %49 = vector.shape_cast %48 : vector<1x8x8xf32> to vector<8x8xf32>
    %cst_33 = arith.constant dense<0.000000e+00> : vector<256x8xf32>
    %50 = tpu.matmul %47, %49, %cst_33 {dimension_numbers = #tpu.dot_dimension_numbers<[1], [0], [0], [1], [0, 0, 1, 1], [], []>} : vector<256x8xf32>, vector<8x8xf32>, vector<256x8xf32> -> vector<256x8xf32>
    %51 = arith.addf %43, %50 : vector<256x8xf32>
    %52 = vector.extract_strided_slice %45 {offsets = [1, 0, 0], sizes = [16, 16, 8], strides = [1, 1, 1]} : vector<18x16x8xf32> to vector<16x16x8xf32>
    %53 = vector.shape_cast %52 : vector<16x16x8xf32> to vector<256x8xf32>
    %c5 = arith.constant 5 : index
    %c0_34 = arith.constant 0 : index
    %c0_35 = arith.constant 0 : index
    %54 = vector.load %arg2[%c5, %c0_34, %c0_35] : memref<9x8x8xf32, #tpu.memory_space<vmem>>, vector<1x8x8xf32>
    %55 = vector.shape_cast %54 : vector<1x8x8xf32> to vector<8x8xf32>
    %cst_36 = arith.constant dense<0.000000e+00> : vector<256x8xf32>
    %56 = tpu.matmul %53, %55, %cst_36 {dimension_numbers = #tpu.dot_dimension_numbers<[1], [0], [0], [1], [0, 0, 1, 1], [], []>} : vector<256x8xf32>, vector<8x8xf32>, vector<256x8xf32> -> vector<256x8xf32>
    %57 = arith.addf %51, %56 : vector<256x8xf32>
    %58 = vector.extract_strided_slice %45 {offsets = [2, 0, 0], sizes = [16, 16, 8], strides = [1, 1, 1]} : vector<18x16x8xf32> to vector<16x16x8xf32>
    %59 = vector.shape_cast %58 : vector<16x16x8xf32> to vector<256x8xf32>
    %c8 = arith.constant 8 : index
    %c0_37 = arith.constant 0 : index
    %c0_38 = arith.constant 0 : index
    %60 = vector.load %arg2[%c8, %c0_37, %c0_38] : memref<9x8x8xf32, #tpu.memory_space<vmem>>, vector<1x8x8xf32>
    %61 = vector.shape_cast %60 : vector<1x8x8xf32> to vector<8x8xf32>
    %cst_39 = arith.constant dense<0.000000e+00> : vector<256x8xf32>
    %62 = tpu.matmul %59, %61, %cst_39 {dimension_numbers = #tpu.dot_dimension_numbers<[1], [0], [0], [1], [0, 0, 1, 1], [], []>} : vector<256x8xf32>, vector<8x8xf32>, vector<256x8xf32> -> vector<256x8xf32>
    %63 = arith.addf %57, %62 : vector<256x8xf32>
    %c0_40 = arith.constant 0 : index
    %c0_41 = arith.constant 0 : index
    %64 = vector.load %arg3[%c0_40, %c0_41] : memref<1x8xf32, #tpu.memory_space<vmem>>, vector<1x8xf32>
    %65 = vector.broadcast %64 : vector<1x8xf32> to vector<256x8xf32>
    %66 = arith.addf %63, %65 : vector<256x8xf32>
    %cst_42 = arith.constant 0.000000e+00 : f32
    %67 = vector.broadcast %cst_42 : f32 to vector<256x8xf32>
    %68 = arith.maximumf %66, %67 : vector<256x8xf32>
    %69 = vector.shape_cast %68 : vector<256x8xf32> to vector<16x16x8xf32>
    %c1_43 = arith.constant 1 : index
    %c1_44 = arith.constant 1 : index
    %c0_45 = arith.constant 0 : index
    %70 = vector.load %arg7[%c1_43, %c1_44, %c0_45] : memref<18x18x8xf32, #tpu.memory_space<vmem>>, vector<16x16x8xf32>
    tpu.vector_store %arg7[%c1_43, %c1_44, %c0_45], %69 {strides = array<i32>} : memref<18x18x8xf32, #tpu.memory_space<vmem>>, vector<16x16x8xf32>,
    %cst_46 = arith.constant 0.000000e+00 : f32
    %71 = vector.broadcast %cst_46 : f32 to vector<256x8xf32>
    %c0_47 = arith.constant 0 : index
    %c0_48 = arith.constant 0 : index
    %c0_49 = arith.constant 0 : index
    %72 = vector.load %arg7[%c0_47, %c0_48, %c0_49] : memref<18x18x8xf32, #tpu.memory_space<vmem>>, vector<18x16x8xf32>
    %73 = vector.extract_strided_slice %72 {offsets = [0, 0, 0], sizes = [16, 16, 8], strides = [1, 1, 1]} : vector<18x16x8xf32> to vector<16x16x8xf32>
    %74 = vector.shape_cast %73 : vector<16x16x8xf32> to vector<256x8xf32>
    %c0_50 = arith.constant 0 : index
    %c0_51 = arith.constant 0 : index
    %c0_52 = arith.constant 0 : index
    %75 = vector.load %arg4[%c0_50, %c0_51, %c0_52] : memref<9x8x8xf32, #tpu.memory_space<vmem>>, vector<1x8x8xf32>
    %76 = vector.shape_cast %75 : vector<1x8x8xf32> to vector<8x8xf32>
    %cst_53 = arith.constant dense<0.000000e+00> : vector<256x8xf32>
    %77 = tpu.matmul %74, %76, %cst_53 {dimension_numbers = #tpu.dot_dimension_numbers<[1], [0], [0], [1], [0, 0, 1, 1], [], []>} : vector<256x8xf32>, vector<8x8xf32>, vector<256x8xf32> -> vector<256x8xf32>
    %78 = arith.addf %71, %77 : vector<256x8xf32>
    %79 = vector.extract_strided_slice %72 {offsets = [1, 0, 0], sizes = [16, 16, 8], strides = [1, 1, 1]} : vector<18x16x8xf32> to vector<16x16x8xf32>
    %80 = vector.shape_cast %79 : vector<16x16x8xf32> to vector<256x8xf32>
    %c3_54 = arith.constant 3 : index
    %c0_55 = arith.constant 0 : index
    %c0_56 = arith.constant 0 : index
    %81 = vector.load %arg4[%c3_54, %c0_55, %c0_56] : memref<9x8x8xf32, #tpu.memory_space<vmem>>, vector<1x8x8xf32>
    %82 = vector.shape_cast %81 : vector<1x8x8xf32> to vector<8x8xf32>
    %cst_57 = arith.constant dense<0.000000e+00> : vector<256x8xf32>
    %83 = tpu.matmul %80, %82, %cst_57 {dimension_numbers = #tpu.dot_dimension_numbers<[1], [0], [0], [1], [0, 0, 1, 1], [], []>} : vector<256x8xf32>, vector<8x8xf32>, vector<256x8xf32> -> vector<256x8xf32>
    %84 = arith.addf %78, %83 : vector<256x8xf32>
    %85 = vector.extract_strided_slice %72 {offsets = [2, 0, 0], sizes = [16, 16, 8], strides = [1, 1, 1]} : vector<18x16x8xf32> to vector<16x16x8xf32>
    %86 = vector.shape_cast %85 : vector<16x16x8xf32> to vector<256x8xf32>
    %c6_58 = arith.constant 6 : index
    %c0_59 = arith.constant 0 : index
    %c0_60 = arith.constant 0 : index
    %87 = vector.load %arg4[%c6_58, %c0_59, %c0_60] : memref<9x8x8xf32, #tpu.memory_space<vmem>>, vector<1x8x8xf32>
    %88 = vector.shape_cast %87 : vector<1x8x8xf32> to vector<8x8xf32>
    %cst_61 = arith.constant dense<0.000000e+00> : vector<256x8xf32>
    %89 = tpu.matmul %86, %88, %cst_61 {dimension_numbers = #tpu.dot_dimension_numbers<[1], [0], [0], [1], [0, 0, 1, 1], [], []>} : vector<256x8xf32>, vector<8x8xf32>, vector<256x8xf32> -> vector<256x8xf32>
    %90 = arith.addf %84, %89 : vector<256x8xf32>
    %c0_62 = arith.constant 0 : index
    %c1_63 = arith.constant 1 : index
    %c0_64 = arith.constant 0 : index
    %91 = vector.load %arg7[%c0_62, %c1_63, %c0_64] : memref<18x18x8xf32, #tpu.memory_space<vmem>>, vector<18x16x8xf32>
    %92 = vector.extract_strided_slice %91 {offsets = [0, 0, 0], sizes = [16, 16, 8], strides = [1, 1, 1]} : vector<18x16x8xf32> to vector<16x16x8xf32>
    %93 = vector.shape_cast %92 : vector<16x16x8xf32> to vector<256x8xf32>
    %c1_65 = arith.constant 1 : index
    %c0_66 = arith.constant 0 : index
    %c0_67 = arith.constant 0 : index
    %94 = vector.load %arg4[%c1_65, %c0_66, %c0_67] : memref<9x8x8xf32, #tpu.memory_space<vmem>>, vector<1x8x8xf32>
    %95 = vector.shape_cast %94 : vector<1x8x8xf32> to vector<8x8xf32>
    %cst_68 = arith.constant dense<0.000000e+00> : vector<256x8xf32>
    %96 = tpu.matmul %93, %95, %cst_68 {dimension_numbers = #tpu.dot_dimension_numbers<[1], [0], [0], [1], [0, 0, 1, 1], [], []>} : vector<256x8xf32>, vector<8x8xf32>, vector<256x8xf32> -> vector<256x8xf32>
    %97 = arith.addf %90, %96 : vector<256x8xf32>
    %98 = vector.extract_strided_slice %91 {offsets = [1, 0, 0], sizes = [16, 16, 8], strides = [1, 1, 1]} : vector<18x16x8xf32> to vector<16x16x8xf32>
    %99 = vector.shape_cast %98 : vector<16x16x8xf32> to vector<256x8xf32>
    %c4_69 = arith.constant 4 : index
    %c0_70 = arith.constant 0 : index
    %c0_71 = arith.constant 0 : index
    %100 = vector.load %arg4[%c4_69, %c0_70, %c0_71] : memref<9x8x8xf32, #tpu.memory_space<vmem>>, vector<1x8x8xf32>
    %101 = vector.shape_cast %100 : vector<1x8x8xf32> to vector<8x8xf32>
    %cst_72 = arith.constant dense<0.000000e+00> : vector<256x8xf32>
    %102 = tpu.matmul %99, %101, %cst_72 {dimension_numbers = #tpu.dot_dimension_numbers<[1], [0], [0], [1], [0, 0, 1, 1], [], []>} : vector<256x8xf32>, vector<8x8xf32>, vector<256x8xf32> -> vector<256x8xf32>
    %103 = arith.addf %97, %102 : vector<256x8xf32>
    %104 = vector.extract_strided_slice %91 {offsets = [2, 0, 0], sizes = [16, 16, 8], strides = [1, 1, 1]} : vector<18x16x8xf32> to vector<16x16x8xf32>
    %105 = vector.shape_cast %104 : vector<16x16x8xf32> to vector<256x8xf32>
    %c7_73 = arith.constant 7 : index
    %c0_74 = arith.constant 0 : index
    %c0_75 = arith.constant 0 : index
    %106 = vector.load %arg4[%c7_73, %c0_74, %c0_75] : memref<9x8x8xf32, #tpu.memory_space<vmem>>, vector<1x8x8xf32>
    %107 = vector.shape_cast %106 : vector<1x8x8xf32> to vector<8x8xf32>
    %cst_76 = arith.constant dense<0.000000e+00> : vector<256x8xf32>
    %108 = tpu.matmul %105, %107, %cst_76 {dimension_numbers = #tpu.dot_dimension_numbers<[1], [0], [0], [1], [0, 0, 1, 1], [], []>} : vector<256x8xf32>, vector<8x8xf32>, vector<256x8xf32> -> vector<256x8xf32>
    %109 = arith.addf %103, %108 : vector<256x8xf32>
    %c0_77 = arith.constant 0 : index
    %c2_78 = arith.constant 2 : index
    %c0_79 = arith.constant 0 : index
    %110 = vector.load %arg7[%c0_77, %c2_78, %c0_79] : memref<18x18x8xf32, #tpu.memory_space<vmem>>, vector<18x16x8xf32>
    %111 = vector.extract_strided_slice %110 {offsets = [0, 0, 0], sizes = [16, 16, 8], strides = [1, 1, 1]} : vector<18x16x8xf32> to vector<16x16x8xf32>
    %112 = vector.shape_cast %111 : vector<16x16x8xf32> to vector<256x8xf32>
    %c2_80 = arith.constant 2 : index
    %c0_81 = arith.constant 0 : index
    %c0_82 = arith.constant 0 : index
    %113 = vector.load %arg4[%c2_80, %c0_81, %c0_82] : memref<9x8x8xf32, #tpu.memory_space<vmem>>, vector<1x8x8xf32>
    %114 = vector.shape_cast %113 : vector<1x8x8xf32> to vector<8x8xf32>
    %cst_83 = arith.constant dense<0.000000e+00> : vector<256x8xf32>
    %115 = tpu.matmul %112, %114, %cst_83 {dimension_numbers = #tpu.dot_dimension_numbers<[1], [0], [0], [1], [0, 0, 1, 1], [], []>} : vector<256x8xf32>, vector<8x8xf32>, vector<256x8xf32> -> vector<256x8xf32>
    %116 = arith.addf %109, %115 : vector<256x8xf32>
    %117 = vector.extract_strided_slice %110 {offsets = [1, 0, 0], sizes = [16, 16, 8], strides = [1, 1, 1]} : vector<18x16x8xf32> to vector<16x16x8xf32>
    %118 = vector.shape_cast %117 : vector<16x16x8xf32> to vector<256x8xf32>
    %c5_84 = arith.constant 5 : index
    %c0_85 = arith.constant 0 : index
    %c0_86 = arith.constant 0 : index
    %119 = vector.load %arg4[%c5_84, %c0_85, %c0_86] : memref<9x8x8xf32, #tpu.memory_space<vmem>>, vector<1x8x8xf32>
    %120 = vector.shape_cast %119 : vector<1x8x8xf32> to vector<8x8xf32>
    %cst_87 = arith.constant dense<0.000000e+00> : vector<256x8xf32>
    %121 = tpu.matmul %118, %120, %cst_87 {dimension_numbers = #tpu.dot_dimension_numbers<[1], [0], [0], [1], [0, 0, 1, 1], [], []>} : vector<256x8xf32>, vector<8x8xf32>, vector<256x8xf32> -> vector<256x8xf32>
    %122 = arith.addf %116, %121 : vector<256x8xf32>
    %123 = vector.extract_strided_slice %110 {offsets = [2, 0, 0], sizes = [16, 16, 8], strides = [1, 1, 1]} : vector<18x16x8xf32> to vector<16x16x8xf32>
    %124 = vector.shape_cast %123 : vector<16x16x8xf32> to vector<256x8xf32>
    %c8_88 = arith.constant 8 : index
    %c0_89 = arith.constant 0 : index
    %c0_90 = arith.constant 0 : index
    %125 = vector.load %arg4[%c8_88, %c0_89, %c0_90] : memref<9x8x8xf32, #tpu.memory_space<vmem>>, vector<1x8x8xf32>
    %126 = vector.shape_cast %125 : vector<1x8x8xf32> to vector<8x8xf32>
    %cst_91 = arith.constant dense<0.000000e+00> : vector<256x8xf32>
    %127 = tpu.matmul %124, %126, %cst_91 {dimension_numbers = #tpu.dot_dimension_numbers<[1], [0], [0], [1], [0, 0, 1, 1], [], []>} : vector<256x8xf32>, vector<8x8xf32>, vector<256x8xf32> -> vector<256x8xf32>
    %128 = arith.addf %122, %127 : vector<256x8xf32>
    %c0_92 = arith.constant 0 : index
    %c0_93 = arith.constant 0 : index
    %129 = vector.load %arg5[%c0_92, %c0_93] : memref<1x8xf32, #tpu.memory_space<vmem>>, vector<1x8xf32>
    %130 = vector.broadcast %129 : vector<1x8xf32> to vector<256x8xf32>
    %131 = arith.addf %128, %130 : vector<256x8xf32>
    %cst_94 = arith.constant 0.000000e+00 : f32
    %132 = vector.broadcast %cst_94 : f32 to vector<256x8xf32>
    %133 = arith.maximumf %131, %132 : vector<256x8xf32>
    %134 = vector.shape_cast %133 : vector<256x8xf32> to vector<16x16x8xf32>
    %c0_95 = arith.constant 0 : index
    %c0_96 = arith.constant 0 : index
    %c0_97 = arith.constant 0 : index
    %c0_98 = arith.constant 0 : index
    %135 = vector.load %arg6[%c0_95, %c0_96, %c0_97, %c0_98] : memref<1x16x16x8xf32, #tpu.memory_space<vmem>>, vector<1x16x16x8xf32>
    %136 = vector.shape_cast %135 : vector<1x16x16x8xf32> to vector<16x16x8xf32>
    %137 = vector.shape_cast %134 : vector<16x16x8xf32> to vector<1x16x16x8xf32>
    tpu.vector_store %arg6[%c0_95, %c0_96, %c0_97, %c0_98], %137 {strides = array<i32>} : memref<1x16x16x8xf32, #tpu.memory_space<vmem>>, vector<1x16x16x8xf32>,
    return
  }
  func.func @transform_0(%arg0: i32) -> (i32, i32, i32, i32) {
    %c0_i32 = arith.constant 0 : i32
    %c0_i32_0 = arith.constant 0 : i32
    %c0_i32_1 = arith.constant 0 : i32
    %c0_i32_2 = arith.constant 0 : i32
    return %arg0, %c0_i32, %c0_i32_0, %c0_i32_1 : i32, i32, i32, i32
  }
  func.func @transform_1(%arg0: i32) -> (i32, i32, i32) {
    %c0_i32 = arith.constant 0 : i32
    %c0_i32_0 = arith.constant 0 : i32
    %c0_i32_1 = arith.constant 0 : i32
    %c0_i32_2 = arith.constant 0 : i32
    return %c0_i32, %c0_i32_0, %c0_i32_1 : i32, i32, i32
  }
  func.func @transform_2(%arg0: i32) -> (i32, i32) {
    %c0_i32 = arith.constant 0 : i32
    %c0_i32_0 = arith.constant 0 : i32
    %c0_i32_1 = arith.constant 0 : i32
    return %c0_i32, %c0_i32_0 : i32, i32
  }
  func.func @transform_3(%arg0: i32) -> (i32, i32, i32) {
    %c0_i32 = arith.constant 0 : i32
    %c0_i32_0 = arith.constant 0 : i32
    %c0_i32_1 = arith.constant 0 : i32
    %c0_i32_2 = arith.constant 0 : i32
    return %c0_i32, %c0_i32_0, %c0_i32_1 : i32, i32, i32
  }
  func.func @transform_4(%arg0: i32) -> (i32, i32) {
    %c0_i32 = arith.constant 0 : i32
    %c0_i32_0 = arith.constant 0 : i32
    %c0_i32_1 = arith.constant 0 : i32
    return %c0_i32, %c0_i32_0 : i32, i32
  }
  func.func @transform_5(%arg0: i32) -> (i32, i32, i32, i32) {
    %c0_i32 = arith.constant 0 : i32
    %c0_i32_0 = arith.constant 0 : i32
    %c0_i32_1 = arith.constant 0 : i32
    %c0_i32_2 = arith.constant 0 : i32
    return %arg0, %c0_i32, %c0_i32_0, %c0_i32_1 : i32, i32, i32, i32
  }
}

</mosaic_0001>

<llo_original>
// kernel: tpu_custom_call.1
$region0: #{tpu_custom_call.1}
  #allocation0 [shape = 'u32[]', space=smem, size = 0x4, offset = 0x4, fixed_abs, tag = 'smem constant byte address 0x4 - core index']
  #allocation1 [shape = 'u32[144,128]{1,0:T(1,128)}', space=vmem, size = 0x12000, scoped, tag = 'internal scratch']
  #allocation2 [shape = 'f32[18,18,8]{2,1,0:T(8,128)}', space=vmem, size = 0x36000, scoped, tag = 'scratch operand']
  %s0 = inlined_call_operand.vmem [shape: f32[2,18,18,8], index: 0, kind: input, shape index: {}]
  %s1 = inlined_call_operand.vmem [shape: f32[9,8,8], index: 1, kind: input, shape index: {}]
  %s2 = inlined_call_operand.vmem [shape: f32[1,8], index: 2, kind: input, shape index: {}]
  %s3 = inlined_call_operand.vmem [shape: f32[9,8,8], index: 3, kind: input, shape index: {}]
  %s4 = inlined_call_operand.vmem [shape: f32[1,8], index: 4, kind: input, shape index: {}]
  %s5 = inlined_call_operand.vmem [shape: f32[2,16,16,8], index: 5, kind: output, shape index: {}]
  %s6 = sld [smem:[#allocation0]]
  $region57: #{tpu_custom_call.1} parent=0
    _
  %s8 = ssub.s32 1, %s6
  %s9 = scalar_select 0, %s8, %s6
  loop: start=0, step=1, limit=4
  $region2: #{tpu_custom_call.1} parent=0 // loop_pre_header
    _
  $region3: #{tpu_custom_call.1} parent=0 // loop_header
    %s11 = sphi 0, %s15
    %p12 = scmp.ge.s32.totalorder %s11, 4
    %s21 = sphi 0, %s23
    %s24 = sphi 0, %s21
    %s25 = sphi 0, %s24
    %s41 = sphi 0, %s25
    %s45 = sphi 0, %s45
    %s47 = sphi 0, %s45
    %s48 = sphi 0, %s47
    %s62 = sphi 0, %s48
    %s66 = sphi 0, %s66
    %s68 = sphi 0, %s66
    %s69 = sphi 0, %s68
    %s83 = sphi 0, %s69
    %s87 = sphi 0, %s87
    %s89 = sphi 0, %s87
    %s90 = sphi 0, %s89
    %s104 = sphi 0, %s90
    %s108 = sphi 0, %s108
    %s110 = sphi 0, %s108
    %s111 = sphi 0, %s110
    %s125 = sphi 0, %s111
    %s131 = sphi 0, %s133
    %s134 = sphi 0, %s131
    %s135 = sphi 0, %s134
    %s151 = sphi 0, %s135
  $region4: #{tpu_custom_call.1} parent=0 // loop_header_branch
    %14 = sbr.rel (%p12) target = $region8
  $region5: #{tpu_custom_call.1} parent=0 // loop_body
    %s16 = ssub.s32 %s11, 1
    %s17 = ssub.s32 %s11, 2
    %s18 = sadd.s32 %s11, 1
    %s19 = ssub.s32 %s11, %s18
    %p20 = scmp.eq.s32.totalorder %s19, 0
    %s22 = sadd.s32 %s21, 1
    %s23 = scalar_select %p20, %s21, %s22
    %p26 = pneg %p20
    %p27 = scmp.eq.s32.totalorder %s11, 1
    %p28 = por %p26, %p27
    %p29 = scmp.ne.s32.totalorder %s21, %s24
    %p30 = scmp.eq.s32.totalorder %s11, 0
    %p31 = por %p29, %p30
    %p32 = scmp.ne.s32.totalorder %s21, %s24
    %p33 = scmp.eq.s32.totalorder %s16, 1
    %p34 = por %p32, %p33
    %p35 = scmp.ne.s32.totalorder %s24, %s25
    %p36 = scmp.eq.s32.totalorder %s16, 0
    %p37 = por %p35, %p36
    %p38 = scmp.ne.s32.totalorder %s24, %s25
    %p39 = scmp.eq.s32.totalorder %s17, 1
    %p40 = por %p38, %p39
    %p42 = scmp.ne.s32.totalorder %s25, %s41
    %p43 = scmp.eq.s32.totalorder %s17, 0
    %p44 = por %p42, %p43
    %s46 = sadd.s32 %s45, 1
    %p49 = scmp.eq.s32.totalorder %s11, 1
    %p50 = scmp.ne.s32.totalorder %s45, %s47
    %p51 = scmp.eq.s32.totalorder %s11, 0
    %p52 = por %p50, %p51
    %p53 = scmp.ne.s32.totalorder %s45, %s47
    %p54 = scmp.eq.s32.totalorder %s16, 1
    %p55 = por %p53, %p54
    %p56 = scmp.ne.s32.totalorder %s47, %s48
    %p57 = scmp.eq.s32.totalorder %s16, 0
    %p58 = por %p56, %p57
    %p59 = scmp.ne.s32.totalorder %s47, %s48
    %p60 = scmp.eq.s32.totalorder %s17, 1
    %p61 = por %p59, %p60
    %p63 = scmp.ne.s32.totalorder %s48, %s62
    %p64 = scmp.eq.s32.totalorder %s17, 0
    %p65 = por %p63, %p64
    %s67 = sadd.s32 %s66, 1
    %p70 = scmp.eq.s32.totalorder %s11, 1
    %p71 = scmp.ne.s32.totalorder %s66, %s68
    %p72 = scmp.eq.s32.totalorder %s11, 0
    %p73 = por %p71, %p72
    %p74 = scmp.ne.s32.totalorder %s66, %s68
    %p75 = scmp.eq.s32.totalorder %s16, 1
    %p76 = por %p74, %p75
    %p77 = scmp.ne.s32.totalorder %s68, %s69
    %p78 = scmp.eq.s32.totalorder %s16, 0
    %p79 = por %p77, %p78
    %p80 = scmp.ne.s32.totalorder %s68, %s69
    %p81 = scmp.eq.s32.totalorder %s17, 1
    %p82 = por %p80, %p81
    %p84 = scmp.ne.s32.totalorder %s69, %s83
    %p85 = scmp.eq.s32.totalorder %s17, 0
    %p86 = por %p84, %p85
    %s88 = sadd.s32 %s87, 1
    %p91 = scmp.eq.s32.totalorder %s11, 1
    %p92 = scmp.ne.s32.totalorder %s87, %s89
    %p93 = scmp.eq.s32.totalorder %s11, 0
    %p94 = por %p92, %p93
    %p95 = scmp.ne.s32.totalorder %s87, %s89
    %p96 = scmp.eq.s32.totalorder %s16, 1
    %p97 = por %p95, %p96
    %p98 = scmp.ne.s32.totalorder %s89, %s90
    %p99 = scmp.eq.s32.totalorder %s16, 0
    %p100 = por %p98, %p99
    %p101 = scmp.ne.s32.totalorder %s89, %s90
    %p102 = scmp.eq.s32.totalorder %s17, 1
    %p103 = por %p101, %p102
    %p105 = scmp.ne.s32.totalorder %s90, %s104
    %p106 = scmp.eq.s32.totalorder %s17, 0
    %p107 = por %p105, %p106
    %s109 = sadd.s32 %s108, 1
    %p112 = scmp.eq.s32.totalorder %s11, 1
    %p113 = scmp.ne.s32.totalorder %s108, %s110
    %p114 = scmp.eq.s32.totalorder %s11, 0
    %p115 = por %p113, %p114
    %p116 = scmp.ne.s32.totalorder %s108, %s110
    %p117 = scmp.eq.s32.totalorder %s16, 1
    %p118 = por %p116, %p117
    %p119 = scmp.ne.s32.totalorder %s110, %s111
    %p120 = scmp.eq.s32.totalorder %s16, 0
    %p121 = por %p119, %p120
    %p122 = scmp.ne.s32.totalorder %s110, %s111
    %p123 = scmp.eq.s32.totalorder %s17, 1
    %p124 = por %p122, %p123
    %p126 = scmp.ne.s32.totalorder %s111, %s125
    %p127 = scmp.eq.s32.totalorder %s17, 0
    %p128 = por %p126, %p127
    %s129 = ssub.s32 %s11, %s18
    %p130 = scmp.eq.s32.totalorder %s129, 0
    %s132 = sadd.s32 %s131, 1
    %s133 = scalar_select %p130, %s131, %s132
    %p136 = pneg %p130
    %p137 = scmp.eq.s32.totalorder %s11, 1
    %p138 = por %p136, %p137
    %p139 = scmp.ne.s32.totalorder %s131, %s134
    %p140 = scmp.eq.s32.totalorder %s11, 0
    %p141 = por %p139, %p140
    %p142 = scmp.ne.s32.totalorder %s131, %s134
    %p143 = scmp.eq.s32.totalorder %s16, 1
    %p144 = por %p142, %p143
    %p145 = scmp.ne.s32.totalorder %s134, %s135
    %p146 = scmp.eq.s32.totalorder %s16, 0
    %p147 = por %p145, %p146
    %p148 = scmp.ne.s32.totalorder %s134, %s135
    %p149 = scmp.eq.s32.totalorder %s17, 1
    %p150 = por %p148, %p149
    %p152 = scmp.ne.s32.totalorder %s135, %s151
    %p153 = scmp.eq.s32.totalorder %s17, 0
    %p154 = por %p152, %p153
    %p155 = scmp.le.s32.totalorder 1, %s11
    %p156 = scmp.lt.s32.totalorder %s11, 3
    %p157 = pnand %p155, %p156
    %p158 = pneg %p157
    // Predicated region
    $region9: #{tpu_custom_call.1} parent=5 // pred_check
      _
    $region10: #{tpu_custom_call.1} parent=5 // pred_check_branch
      %160 = sbr.rel (%p157) target = $region12
    $region11: #{tpu_custom_call.1} parent=5 // pred_region
      %s161 = ssub.s32 %s11, 1
      // Predicated region
      $region13: #{tpu_custom_call.1} parent=11 // pred_check
        %p162 = pneg %p58
      $region14: #{tpu_custom_call.1} parent=11 // pred_check_branch
        %164 = sbr.rel (%p162) target = $region16
      $region15: #{tpu_custom_call.1} parent=11 // pred_region
        _
      $region16: #{tpu_custom_call.1} parent=11 // pred_fallthru
        _
      // Predicated region
      $region17: #{tpu_custom_call.1} parent=11 // pred_check
        %p165 = pneg %p79
      $region18: #{tpu_custom_call.1} parent=11 // pred_check_branch
        %167 = sbr.rel (%p165) target = $region20
      $region19: #{tpu_custom_call.1} parent=11 // pred_region
        _
      $region20: #{tpu_custom_call.1} parent=11 // pred_fallthru
        _
      // Predicated region
      $region21: #{tpu_custom_call.1} parent=11 // pred_check
        %p168 = pneg %p100
      $region22: #{tpu_custom_call.1} parent=11 // pred_check_branch
        %170 = sbr.rel (%p168) target = $region24
      $region23: #{tpu_custom_call.1} parent=11 // pred_region
        _
      $region24: #{tpu_custom_call.1} parent=11 // pred_fallthru
        _
      // Predicated region
      $region25: #{tpu_custom_call.1} parent=11 // pred_check
        %p171 = pneg %p121
      $region26: #{tpu_custom_call.1} parent=11 // pred_check_branch
        %173 = sbr.rel (%p171) target = $region28
      $region27: #{tpu_custom_call.1} parent=11 // pred_region
        _
      $region28: #{tpu_custom_call.1} parent=11 // pred_fallthru
        _
    $region12: #{tpu_custom_call.1} parent=5 // pred_fallthru
      _
    %p174 = scmp.lt.s32.totalorder %s11, 2
    // Predicated region
    $region29: #{tpu_custom_call.1} parent=5 // pred_check
      %p175 = pneg %p174
    $region30: #{tpu_custom_call.1} parent=5 // pred_check_branch
      %177 = sbr.rel (%p175) target = $region32
    $region31: #{tpu_custom_call.1} parent=5 // pred_region
      // Predicated region
      $region33: #{tpu_custom_call.1} parent=31 // pred_check
        %p178 = pneg %p31
      $region34: #{tpu_custom_call.1} parent=31 // pred_check_branch
        %180 = sbr.rel (%p178) target = $region36
      $region35: #{tpu_custom_call.1} parent=31 // pred_region
        %p181 = scmp.lt.s32.totalorder %s11, 1
        %s182 = scalar_select %p181, %s11, 1
        %s183 = smul.addr %s182, 54
        %s184 = smul.addr %s183, 8
        %s185 = scalar_lea.vmem %s0, %s184
      $region36: #{tpu_custom_call.1} parent=31 // pred_fallthru
        _
    $region32: #{tpu_custom_call.1} parent=5 // pred_fallthru
      _
    %p186 = scmp.le.s32.totalorder 1, %s11
    %p187 = scmp.lt.s32.totalorder %s11, 3
    %p188 = pnand %p186, %p187
    %p189 = pneg %p188
    // Predicated region
    $region37: #{tpu_custom_call.1} parent=5 // pred_check
      _
    $region38: #{tpu_custom_call.1} parent=5 // pred_check_branch
      %191 = sbr.rel (%p188) target = $region40
    $region39: #{tpu_custom_call.1} parent=5 // pred_region
      %s192 = ssub.s32 %s11, 1
      %p193 = scmp.lt.s32.totalorder %s16, 1
      %s194 = scalar_select %p193, %s16, 1
      %s195 = smul.addr %s194, 54
      %s196 = smul.addr %s195, 8
      %s197 = scalar_lea.vmem %s0, %s196
      %p198 = pneg %p37
      %p199 = pneg %p34
      %p200 = pneg %p58
      %p201 = pneg %p55
      %p202 = pneg %p79
      %p203 = pneg %p76
      %p204 = pneg %p100
      %p205 = pneg %p97
      %p206 = pneg %p121
      %p207 = pneg %p118
      %p208 = pneg %p147
      %p209 = pneg %p144
      %p210 = scmp.lt.s32.totalorder %s16, 1
      %s211 = scalar_select %p210, %s16, 1
      %s212 = smul.addr %s211, 32
      %s213 = smul.addr %s212, 8
      %s214 = scalar_lea.vmem %s5, %s213
      %p215 = scmp.lt.s32.totalorder %s16, 1
      %s216 = scalar_select %p215, %s16, 1
      %s217 = smul.addr %s216, 54
      %s218 = smul.addr %s217, 8
      %s219 = scalar_lea.vmem %s0, %s218
      %p220 = scmp.lt.s32.totalorder %s16, 1
      %s221 = scalar_select %p220, %s16, 1
      %s222 = smul.addr %s221, 32
      %s223 = smul.addr %s222, 8
      %s224 = scalar_lea.vmem %s5, %s223
      %p225 = scmp.eq.s32.totalorder %s16, 0
      // Predicated region
      $region41: #{tpu_custom_call.1} parent=39 // pred_check
        %p226 = pneg %p225
      $region42: #{tpu_custom_call.1} parent=39 // pred_check_branch
        %228 = sbr.rel (%p226) target = $region44
      $region43: #{tpu_custom_call.1} parent=39 // pred_region
        %vm229 = vcmask 64512
        %230 = vst.msk [vmem:[#allocation2] sm:$0xff] %vm229, 0.0
        %231 = vst.msk [vmem:[#allocation2 + $0x8] sm:$0xff] %vm229, 0.0
        %vm232 = vcmask 58368
        %233 = vst.msk [vmem:[#allocation2 + $0x10] sm:$0x3] %vm232, 0.0
        %s234 = scalar_lea.vmem [#allocation2], 408
        %235 = vst.msk [vmem:[%s234] sm:$0xff] %vm229, 0.0
        %236 = vst.msk [vmem:[%s234 + $0x8] sm:$0xff] %vm229, 0.0
        %237 = vst.msk [vmem:[%s234 + $0x10] sm:$0x3] %vm232, 0.0
        %vm238 = vcmask 57344
        %239 = vst.msk [vmem:[#allocation2] sm:$0x1] %vm238, 0.0
        %240 = vst.msk [vmem:[#allocation2 + $0x18] sm:$0x1] %vm238, 0.0
        %241 = vst.msk [vmem:[#allocation2 + $0x30] sm:$0x1] %vm238, 0.0
        %242 = vst.msk [vmem:[#allocation2 + $0x48] sm:$0x1] %vm238, 0.0
        %243 = vst.msk [vmem:[#allocation2 + $0x60] sm:$0x1] %vm238, 0.0
        %244 = vst.msk [vmem:[#allocation2 + $0x78] sm:$0x1] %vm238, 0.0
        %245 = vst.msk [vmem:[#allocation2 + $0x90] sm:$0x1] %vm238, 0.0
        %246 = vst.msk [vmem:[#allocation2 + $0xa8] sm:$0x1] %vm238, 0.0
        %247 = vst.msk [vmem:[#allocation2 + $0xc0] sm:$0x1] %vm238, 0.0
        %248 = vst.msk [vmem:[#allocation2 + $0xd8] sm:$0x1] %vm238, 0.0
        %249 = vst.msk [vmem:[#allocation2 + $0xf0] sm:$0x1] %vm238, 0.0
        %250 = vst.msk [vmem:[#allocation2 + $0x108] sm:$0x1] %vm238, 0.0
        %251 = vst.msk [vmem:[#allocation2 + $0x120] sm:$0x1] %vm238, 0.0
        %252 = vst.msk [vmem:[#allocation2 + $0x138] sm:$0x1] %vm238, 0.0
        %253 = vst.msk [vmem:[#allocation2 + $0x150] sm:$0x1] %vm238, 0.0
        %254 = vst.msk [vmem:[#allocation2 + $0x168] sm:$0x1] %vm238, 0.0
        %255 = vst.msk [vmem:[#allocation2 + $0x180] sm:$0x1] %vm238, 0.0
        %256 = vst.msk [vmem:[#allocation2 + $0x198] sm:$0x1] %vm238, 0.0
        %257 = vst.msk [vmem:[#allocation2 + $0x11] sm:$0x1] %vm238, 0.0
        %258 = vst.msk [vmem:[#allocation2 + $0x29] sm:$0x1] %vm238, 0.0
        %259 = vst.msk [vmem:[#allocation2 + $0x41] sm:$0x1] %vm238, 0.0
        %260 = vst.msk [vmem:[#allocation2 + $0x59] sm:$0x1] %vm238, 0.0
        %261 = vst.msk [vmem:[#allocation2 + $0x71] sm:$0x1] %vm238, 0.0
        %262 = vst.msk [vmem:[#allocation2 + $0x89] sm:$0x1] %vm238, 0.0
        %263 = vst.msk [vmem:[#allocation2 + $0xa1] sm:$0x1] %vm238, 0.0
        %264 = vst.msk [vmem:[#allocation2 + $0xb9] sm:$0x1] %vm238, 0.0
        %265 = vst.msk [vmem:[#allocation2 + $0xd1] sm:$0x1] %vm238, 0.0
        %266 = vst.msk [vmem:[#allocation2 + $0xe9] sm:$0x1] %vm238, 0.0
        %267 = vst.msk [vmem:[#allocation2 + $0x101] sm:$0x1] %vm238, 0.0
        %268 = vst.msk [vmem:[#allocation2 + $0x119] sm:$0x1] %vm238, 0.0
        %269 = vst.msk [vmem:[#allocation2 + $0x131] sm:$0x1] %vm238, 0.0
        %270 = vst.msk [vmem:[#allocation2 + $0x149] sm:$0x1] %vm238, 0.0
        %271 = vst.msk [vmem:[#allocation2 + $0x161] sm:$0x1] %vm238, 0.0
        %272 = vst.msk [vmem:[#allocation2 + $0x179] sm:$0x1] %vm238, 0.0
        %273 = vst.msk [vmem:[#allocation2 + $0x191] sm:$0x1] %vm238, 0.0
        %274 = vst.msk [vmem:[#allocation2 + $0x1a9] sm:$0x1] %vm238, 0.0
      $region44: #{tpu_custom_call.1} parent=39 // pred_fallthru
        _
      %v275 = vld [vmem:[%s219] sm:$0xff]
      %v276 = vld [vmem:[%s219 + $0x8] sm:$0xff]
      %v277 = vld [vmem:[%s219 + $0x18] sm:$0xff]
      %v278 = vld [vmem:[%s219 + $0x20] sm:$0xff]
      %v279 = vld [vmem:[%s219 + $0x30] sm:$0xff]
      %v280 = vld [vmem:[%s219 + $0x38] sm:$0xff]
      %v281 = vld [vmem:[%s219 + $0x48] sm:$0xff]
      %v282 = vld [vmem:[%s219 + $0x50] sm:$0xff]
      %v283 = vld [vmem:[%s219 + $0x60] sm:$0xff]
      %v284 = vld [vmem:[%s219 + $0x68] sm:$0xff]
      %v285 = vld [vmem:[%s219 + $0x78] sm:$0xff]
      %v286 = vld [vmem:[%s219 + $0x80] sm:$0xff]
      %v287 = vld [vmem:[%s219 + $0x90] sm:$0xff]
      %v288 = vld [vmem:[%s219 + $0x98] sm:$0xff]
      %v289 = vld [vmem:[%s219 + $0xa8] sm:$0xff]
      %v290 = vld [vmem:[%s219 + $0xb0] sm:$0xff]
      %v291 = vld [vmem:[%s219 + $0xc0] sm:$0xff]
      %v292 = vld [vmem:[%s219 + $0xc8] sm:$0xff]
      %v293 = vld [vmem:[%s219 + $0xd8] sm:$0xff]
      %v294 = vld [vmem:[%s219 + $0xe0] sm:$0xff]
      %v295 = vld [vmem:[%s219 + $0xf0] sm:$0xff]
      %v296 = vld [vmem:[%s219 + $0xf8] sm:$0xff]
      %v297 = vld [vmem:[%s219 + $0x108] sm:$0xff]
      %v298 = vld [vmem:[%s219 + $0x110] sm:$0xff]
      %v299 = vld [vmem:[%s219 + $0x120] sm:$0xff]
      %v300 = vld [vmem:[%s219 + $0x128] sm:$0xff]
      %v301 = vld [vmem:[%s219 + $0x138] sm:$0xff]
      %v302 = vld [vmem:[%s219 + $0x140] sm:$0xff]
      %v303 = vld [vmem:[%s219 + $0x150] sm:$0xff]
      %v304 = vld [vmem:[%s219 + $0x158] sm:$0xff]
      %v305 = vld [vmem:[%s219 + $0x168] sm:$0xff]
      %v306 = vld [vmem:[%s219 + $0x170] sm:$0xff]
      %v307 = vld [vmem:[%s219 + $0x180] sm:$0xff]
      %v308 = vld [vmem:[%s219 + $0x188] sm:$0xff]
      %v309 = vld [vmem:[%s219 + $0x198] sm:$0xff]
      %v310 = vld [vmem:[%s219 + $0x1a0] sm:$0xff]
      %v311 = vld [vmem:[%s1] sm:$0xff]
      %s312 = scalar_lea.vmem %s1, 24
      %v313 = vld [vmem:[%s312] sm:$0xff]
      %vm314 = vcmask 64512
      %v316 = vsel %vm314, %v277, 0
      %v319 = vsel %vm314, %v278, 0
      %v322 = vsel %vm314, %v279, 0
      %v325 = vsel %vm314, %v280, 0
      %v328 = vsel %vm314, %v281, 0
      %v331 = vsel %vm314, %v282, 0
      %v334 = vsel %vm314, %v283, 0
      %v337 = vsel %vm314, %v284, 0
      %v340 = vsel %vm314, %v285, 0
      %v343 = vsel %vm314, %v286, 0
      %v346 = vsel %vm314, %v287, 0
      %v349 = vsel %vm314, %v288, 0
      %v352 = vsel %vm314, %v289, 0
      %v355 = vsel %vm314, %v290, 0
      %v358 = vsel %vm314, %v291, 0
      %v361 = vsel %vm314, %v292, 0
      %v364 = vsel %vm314, %v293, 0
      %v367 = vsel %vm314, %v294, 0
      %v370 = vsel %vm314, %v295, 0
      %v373 = vsel %vm314, %v296, 0
      %v376 = vsel %vm314, %v297, 0
      %v379 = vsel %vm314, %v298, 0
      %v382 = vsel %vm314, %v299, 0
      %v385 = vsel %vm314, %v300, 0
      %v388 = vsel %vm314, %v301, 0
      %v391 = vsel %vm314, %v302, 0
      %v394 = vsel %vm314, %v303, 0
      %v397 = vsel %vm314, %v304, 0
      %v400 = vsel %vm314, %v305, 0
      %v403 = vsel %vm314, %v306, 0
      %v406 = vsel %vm314, %v307, 0
      %v409 = vsel %vm314, %v308, 0
      %411 = vmatprep.subr.mxu0 0.0
      %412 = vmatpush1.msra.mxu0 %v313
      %413 = vmatprep.subr.mxu0 0.0
      %414 = vmatpush1.msra.mxu0 0.0
      %415 = vmatprep.subr.mxu0 0.0
      %416 = vmatpush1.msra.mxu0 0.0
      %417 = vmatprep.subr.mxu0 0.0
      %418 = vmatpush1.msra.mxu0 0.0
      %419 = vmatprep.subr.mxu0 0.0
      %420 = vmatpush1.msra.mxu0 0.0
      %421 = vmatprep.subr.mxu0 0.0
      %422 = vmatpush1.msra.mxu0 0.0
      %423 = vmatprep.subr.mxu0 0.0
      %424 = vmatpush1.msra.mxu0 0.0
      %425 = vmatprep.subr.mxu0 0.0
      %426 = vmatpush1.msra.mxu0 0.0
      %427 = vmatprep.subr.mxu0 0.0
      %428 = vmatpush1.msra.mxu0 0.0
      %429 = vmatprep.subr.mxu0 0.0
      %430 = vmatpush1.msra.mxu0 0.0
      %431 = vmatprep.subr.mxu0 0.0
      %432 = vmatpush1.msra.mxu0 0.0
      %433 = vmatprep.subr.mxu0 0.0
      %434 = vmatpush1.msra.mxu0 0.0
      %435 = vmatprep.subr.mxu0 0.0
      %436 = vmatpush1.msra.mxu0 0.0
      %437 = vmatprep.subr.mxu0 0.0
      %438 = vmatpush1.msra.mxu0 0.0
      %439 = vmatprep.subr.mxu0 0.0
      %440 = vmatpush1.msra.mxu0 0.0
      %441 = vmatprep.subr.mxu0 0.0
      %442 = vmatpush1.msra.mxu0 0.0
      %443 = vmatprep.subr.mxu0 0.0
      %444 = vmatpush1.msra.mxu0 0.0
      %445 = vmatprep.subr.mxu0 0.0
      %446 = vmatpush1.msra.mxu0 0.0
      %447 = vmatprep.subr.mxu0 0.0
      %448 = vmatpush1.msra.mxu0 0.0
      %449 = vmatprep.subr.mxu0 0.0
      %450 = vmatpush1.msra.mxu0 0.0
      %451 = vmatprep.subr.mxu0 0.0
      %452 = vmatpush1.msra.mxu0 0.0
      %453 = vmatprep.subr.mxu0 0.0
      %454 = vmatpush1.msra.mxu0 0.0
      %455 = vmatprep.subr.mxu0 0.0
      %456 = vmatpush1.msra.mxu0 0.0
      %457 = vmatprep.subr.mxu0 0.0
      %458 = vmatpush1.msra.mxu0 0.0
      %459 = vmatprep.subr.mxu0 0.0
      %460 = vmatpush1.msra.mxu0 0.0
      %461 = vmatprep.subr.mxu0 0.0
      %462 = vmatpush1.msra.mxu0 0.0
      %463 = vmatprep.subr.mxu0 0.0
      %464 = vmatpush1.msra.mxu0 0.0
      %465 = vmatprep.subr.mxu0 0.0
      %466 = vmatpush1.msra.mxu0 0.0
      %467 = vmatprep.subr.mxu0 0.0
      %468 = vmatpush1.msra.mxu0 0.0
      %469 = vmatprep.subr.mxu0 0.0
      %470 = vmatpush1.msra.mxu0 0.0
      %471 = vmatprep.subr.mxu0 0.0
      %472 = vmatpush1.msra.mxu0 0.0
      %473 = vmatprep.subr.mxu0 0.0
      %474 = vmatpush1.msra.mxu0 0.0
      %475 = vmatprep.mubr.f32.mxu0 0.0
      %476 = vmatmul.mubr.f32.gmra.mrb[0].mxu0 %v316
      %v477 = vpop.f32.mrb[0].mxu0
      %v478 = vadd.f32 0.0, %v477
      %v479 = vpop.f32.mrb[0].mxu0
      %480 = vmatprep.mubr.f32.mxu0 0.0
      %481 = vmatmul.mubr.f32.gmra.mrb[0].mxu0 %v319
      %v482 = vpop.f32.mrb[0].mxu0
      %v483 = vadd.f32 0.0, %v482
      %v484 = vpop.f32.mrb[0].mxu0
      %485 = vmatprep.mubr.f32.mxu0 0.0
      %486 = vmatmul.mubr.f32.gmra.mrb[0].mxu0 %v322
      %v487 = vpop.f32.mrb[0].mxu0
      %v488 = vadd.f32 0.0, %v487
      %v489 = vpop.f32.mrb[0].mxu0
      %490 = vmatprep.mubr.f32.mxu0 0.0
      %491 = vmatmul.mubr.f32.gmra.mrb[0].mxu0 %v325
      %v492 = vpop.f32.mrb[0].mxu0
      %v493 = vadd.f32 0.0, %v492
      %v494 = vpop.f32.mrb[0].mxu0
      %495 = vmatprep.mubr.f32.mxu0 0.0
      %496 = vmatmul.mubr.f32.gmra.mrb[0].mxu0 %v328
      %v497 = vpop.f32.mrb[0].mxu0
      %v498 = vadd.f32 0.0, %v497
      %v499 = vpop.f32.mrb[0].mxu0
      %500 = vmatprep.mubr.f32.mxu0 0.0
      %501 = vmatmul.mubr.f32.gmra.mrb[0].mxu0 %v331
      %v502 = vpop.f32.mrb[0].mxu0
      %v503 = vadd.f32 0.0, %v502
      %v504 = vpop.f32.mrb[0].mxu0
      %505 = vmatprep.mubr.f32.mxu0 0.0
      %506 = vmatmul.mubr.f32.gmra.mrb[0].mxu0 %v334
      %v507 = vpop.f32.mrb[0].mxu0
      %v508 = vadd.f32 0.0, %v507
      %v509 = vpop.f32.mrb[0].mxu0
      %510 = vmatprep.mubr.f32.mxu0 0.0
      %511 = vmatmul.mubr.f32.gmra.mrb[0].mxu0 %v337
      %v512 = vpop.f32.mrb[0].mxu0
      %v513 = vadd.f32 0.0, %v512
      %v514 = vpop.f32.mrb[0].mxu0
      %515 = vmatprep.mubr.f32.mxu0 0.0
      %516 = vmatmul.mubr.f32.gmra.mrb[0].mxu0 %v340
      %v517 = vpop.f32.mrb[0].mxu0
      %v518 = vadd.f32 0.0, %v517
      %v519 = vpop.f32.mrb[0].mxu0
      %520 = vmatprep.mubr.f32.mxu0 0.0
      %521 = vmatmul.mubr.f32.gmra.mrb[0].mxu0 %v343
      %v522 = vpop.f32.mrb[0].mxu0
      %v523 = vadd.f32 0.0, %v522
      %v524 = vpop.f32.mrb[0].mxu0
      %525 = vmatprep.mubr.f32.mxu0 0.0
      %526 = vmatmul.mubr.f32.gmra.mrb[0].mxu0 %v346
      %v527 = vpop.f32.mrb[0].mxu0
      %v528 = vadd.f32 0.0, %v527
      %v529 = vpop.f32.mrb[0].mxu0
      %530 = vmatprep.mubr.f32.mxu0 0.0
      %531 = vmatmul.mubr.f32.gmra.mrb[0].mxu0 %v349
      %v532 = vpop.f32.mrb[0].mxu0
      %v533 = vadd.f32 0.0, %v532
      %v534 = vpop.f32.mrb[0].mxu0
      %535 = vmatprep.mubr.f32.mxu0 0.0
      %536 = vmatmul.mubr.f32.gmra.mrb[0].mxu0 %v352
      %v537 = vpop.f32.mrb[0].mxu0
      %v538 = vadd.f32 0.0, %v537
      %v539 = vpop.f32.mrb[0].mxu0
      %540 = vmatprep.mubr.f32.mxu0 0.0
      %541 = vmatmul.mubr.f32.gmra.mrb[0].mxu0 %v355
      %v542 = vpop.f32.mrb[0].mxu0
      %v543 = vadd.f32 0.0, %v542
      %v544 = vpop.f32.mrb[0].mxu0
      %545 = vmatprep.mubr.f32.mxu0 0.0
      %546 = vmatmul.mubr.f32.gmra.mrb[0].mxu0 %v358
      %v547 = vpop.f32.mrb[0].mxu0
      %v548 = vadd.f32 0.0, %v547
      %v549 = vpop.f32.mrb[0].mxu0
      %550 = vmatprep.mubr.f32.mxu0 0.0
      %551 = vmatmul.mubr.f32.gmra.mrb[0].mxu0 %v361
      %v552 = vpop.f32.mrb[0].mxu0
      %v553 = vadd.f32 0.0, %v552
      %v554 = vpop.f32.mrb[0].mxu0
      %555 = vmatprep.mubr.f32.mxu0 0.0
      %556 = vmatmul.mubr.f32.gmra.mrb[0].mxu0 %v364
      %v557 = vpop.f32.mrb[0].mxu0
      %v558 = vadd.f32 0.0, %v557
      %v559 = vpop.f32.mrb[0].mxu0
      %560 = vmatprep.mubr.f32.mxu0 0.0
      %561 = vmatmul.mubr.f32.gmra.mrb[0].mxu0 %v367
      %v562 = vpop.f32.mrb[0].mxu0
      %v563 = vadd.f32 0.0, %v562
      %v564 = vpop.f32.mrb[0].mxu0
      %565 = vmatprep.mubr.f32.mxu0 0.0
      %566 = vmatmul.mubr.f32.gmra.mrb[0].mxu0 %v370
      %v567 = vpop.f32.mrb[0].mxu0
      %v568 = vadd.f32 0.0, %v567
      %v569 = vpop.f32.mrb[0].mxu0
      %570 = vmatprep.mubr.f32.mxu0 0.0
      %571 = vmatmul.mubr.f32.gmra.mrb[0].mxu0 %v373
      %v572 = vpop.f32.mrb[0].mxu0
      %v573 = vadd.f32 0.0, %v572
      %v574 = vpop.f32.mrb[0].mxu0
      %575 = vmatprep.mubr.f32.mxu0 0.0
      %576 = vmatmul.mubr.f32.gmra.mrb[0].mxu0 %v376
      %v577 = vpop.f32.mrb[0].mxu0
      %v578 = vadd.f32 0.0, %v577
      %v579 = vpop.f32.mrb[0].mxu0
      %580 = vmatprep.mubr.f32.mxu0 0.0
      %581 = vmatmul.mubr.f32.gmra.mrb[0].mxu0 %v379
      %v582 = vpop.f32.mrb[0].mxu0
      %v583 = vadd.f32 0.0, %v582
      %v584 = vpop.f32.mrb[0].mxu0
      %585 = vmatprep.mubr.f32.mxu0 0.0
      %586 = vmatmul.mubr.f32.gmra.mrb[0].mxu0 %v382
      %v587 = vpop.f32.mrb[0].mxu0
      %v588 = vadd.f32 0.0, %v587
      %v589 = vpop.f32.mrb[0].mxu0
      %590 = vmatprep.mubr.f32.mxu0 0.0
      %591 = vmatmul.mubr.f32.gmra.mrb[0].mxu0 %v385
      %v592 = vpop.f32.mrb[0].mxu0
      %v593 = vadd.f32 0.0, %v592
      %v594 = vpop.f32.mrb[0].mxu0
      %595 = vmatprep.mubr.f32.mxu0 0.0
      %596 = vmatmul.mubr.f32.gmra.mrb[0].mxu0 %v388
      %v597 = vpop.f32.mrb[0].mxu0
      %v598 = vadd.f32 0.0, %v597
      %v599 = vpop.f32.mrb[0].mxu0
      %600 = vmatprep.mubr.f32.mxu0 0.0
      %601 = vmatmul.mubr.f32.gmra.mrb[0].mxu0 %v391
      %v602 = vpop.f32.mrb[0].mxu0
      %v603 = vadd.f32 0.0, %v602
      %v604 = vpop.f32.mrb[0].mxu0
      %605 = vmatprep.mubr.f32.mxu0 0.0
      %606 = vmatmul.mubr.f32.gmra.mrb[0].mxu0 %v394
      %v607 = vpop.f32.mrb[0].mxu0
      %v608 = vadd.f32 0.0, %v607
      %v609 = vpop.f32.mrb[0].mxu0
      %610 = vmatprep.mubr.f32.mxu0 0.0
      %611 = vmatmul.mubr.f32.gmra.mrb[0].mxu0 %v397
      %v612 = vpop.f32.mrb[0].mxu0
      %v613 = vadd.f32 0.0, %v612
      %v614 = vpop.f32.mrb[0].mxu0
      %615 = vmatprep.mubr.f32.mxu0 0.0
      %616 = vmatmul.mubr.f32.gmra.mrb[0].mxu0 %v400
      %v617 = vpop.f32.mrb[0].mxu0
      %v618 = vadd.f32 0.0, %v617
      %v619 = vpop.f32.mrb[0].mxu0
      %620 = vmatprep.mubr.f32.mxu0 0.0
      %621 = vmatmul.mubr.f32.gmra.mrb[0].mxu0 %v403
      %v622 = vpop.f32.mrb[0].mxu0
      %v623 = vadd.f32 0.0, %v622
      %v624 = vpop.f32.mrb[0].mxu0
      %625 = vmatprep.mubr.f32.mxu0 0.0
      %626 = vmatmul.mubr.f32.gmra.mrb[0].mxu0 %v406
      %v627 = vpop.f32.mrb[0].mxu0
      %v628 = vadd.f32 0.0, %v627
      %v629 = vpop.f32.mrb[0].mxu0
      %630 = vmatprep.mubr.f32.mxu0 0.0
      %631 = vmatmul.mubr.f32.gmra.mrb[0].mxu0 %v409
      %v632 = vpop.f32.mrb[0].mxu0
      %v633 = vadd.f32 0.0, %v632
      %v634 = vpop.f32.mrb[0].mxu0
      %635 = vdwg.mxu0
      %v637 = vsel %vm314, %v275, 0
      %v640 = vsel %vm314, %v276, 0
      %642 = vmatprep.subr.mxu0 0.0
      %643 = vmatpush1.msra.mxu0 %v311
      %644 = vmatprep.subr.mxu0 0.0
      %645 = vmatpush1.msra.mxu0 0.0
      %646 = vmatprep.subr.mxu0 0.0
      %647 = vmatpush1.msra.mxu0 0.0
      %648 = vmatprep.subr.mxu0 0.0
      %649 = vmatpush1.msra.mxu0 0.0
      %650 = vmatprep.subr.mxu0 0.0
      %651 = vmatpush1.msra.mxu0 0.0
      %652 = vmatprep.subr.mxu0 0.0
      %653 = vmatpush1.msra.mxu0 0.0
      %654 = vmatprep.subr.mxu0 0.0
      %655 = vmatpush1.msra.mxu0 0.0
      %656 = vmatprep.subr.mxu0 0.0
      %657 = vmatpush1.msra.mxu0 0.0
      %658 = vmatprep.subr.mxu0 0.0
      %659 = vmatpush1.msra.mxu0 0.0
      %660 = vmatprep.subr.mxu0 0.0
      %661 = vmatpush1.msra.mxu0 0.0
      %662 = vmatprep.subr.mxu0 0.0
      %663 = vmatpush1.msra.mxu0 0.0
      %664 = vmatprep.subr.mxu0 0.0
      %665 = vmatpush1.msra.mxu0 0.0
      %666 = vmatprep.subr.mxu0 0.0
      %667 = vmatpush1.msra.mxu0 0.0
      %668 = vmatprep.subr.mxu0 0.0
      %669 = vmatpush1.msra.mxu0 0.0
      %670 = vmatprep.subr.mxu0 0.0
      %671 = vmatpush1.msra.mxu0 0.0
      %672 = vmatprep.subr.mxu0 0.0
      %673 = vmatpush1.msra.mxu0 0.0
      %674 = vmatprep.subr.mxu0 0.0
      %675 = vmatpush1.msra.mxu0 0.0
      %676 = vmatprep.subr.mxu0 0.0
      %677 = vmatpush1.msra.mxu0 0.0
      %678 = vmatprep.subr.mxu0 0.0
      %679 = vmatpush1.msra.mxu0 0.0
      %680 = vmatprep.subr.mxu0 0.0
      %681 = vmatpush1.msra.mxu0 0.0
      %682 = vmatprep.subr.mxu0 0.0
      %683 = vmatpush1.msra.mxu0 0.0
      %684 = vmatprep.subr.mxu0 0.0
      %685 = vmatpush1.msra.mxu0 0.0
      %686 = vmatprep.subr.mxu0 0.0
      %687 = vmatpush1.msra.mxu0 0.0
      %688 = vmatprep.subr.mxu0 0.0
      %689 = vmatpush1.msra.mxu0 0.0
      %690 = vmatprep.subr.mxu0 0.0
      %691 = vmatpush1.msra.mxu0 0.0
      %692 = vmatprep.subr.mxu0 0.0
      %693 = vmatpush1.msra.mxu0 0.0
      %694 = vmatprep.subr.mxu0 0.0
      %695 = vmatpush1.msra.mxu0 0.0
      %696 = vmatprep.subr.mxu0 0.0
      %697 = vmatpush1.msra.mxu0 0.0
      %698 = vmatprep.subr.mxu0 0.0
      %699 = vmatpush1.msra.mxu0 0.0
      %700 = vmatprep.subr.mxu0 0.0
      %701 = vmatpush1.msra.mxu0 0.0
      %702 = vmatprep.subr.mxu0 0.0
      %703 = vmatpush1.msra.mxu0 0.0
      %704 = vmatprep.subr.mxu0 0.0
      %705 = vmatpush1.msra.mxu0 0.0
      %706 = vmatprep.mubr.f32.mxu0 0.0
      %707 = vmatmul.mubr.f32.gmra.mrb[0].mxu0 %v637
      %v708 = vpop.f32.mrb[0].mxu0
      %v709 = vadd.f32 %v478, %v708
      %v710 = vpop.f32.mrb[0].mxu0
      %711 = vmatprep.mubr.f32.mxu0 0.0
      %712 = vmatmul.mubr.f32.gmra.mrb[0].mxu0 %v640
      %v713 = vpop.f32.mrb[0].mxu0
      %v714 = vadd.f32 %v483, %v713
      %v715 = vpop.f32.mrb[0].mxu0
      %716 = vmatprep.mubr.f32.mxu0 0.0
      %717 = vmatmul.mubr.f32.gmra.mrb[0].mxu0 %v316
      %v718 = vpop.f32.mrb[0].mxu0
      %v719 = vadd.f32 %v488, %v718
      %v720 = vpop.f32.mrb[0].mxu0
      %721 = vmatprep.mubr.f32.mxu0 0.0
      %722 = vmatmul.mubr.f32.gmra.mrb[0].mxu0 %v319
      %v723 = vpop.f32.mrb[0].mxu0
      %v724 = vadd.f32 %v493, %v723
      %v725 = vpop.f32.mrb[0].mxu0
      %726 = vmatprep.mubr.f32.mxu0 0.0
      %727 = vmatmul.mubr.f32.gmra.mrb[0].mxu0 %v322
      %v728 = vpop.f32.mrb[0].mxu0
      %v729 = vadd.f32 %v498, %v728
      %v730 = vpop.f32.mrb[0].mxu0
      %731 = vmatprep.mubr.f32.mxu0 0.0
      %732 = vmatmul.mubr.f32.gmra.mrb[0].mxu0 %v325
      %v733 = vpop.f32.mrb[0].mxu0
      %v734 = vadd.f32 %v503, %v733
      %v735 = vpop.f32.mrb[0].mxu0
      %736 = vmatprep.mubr.f32.mxu0 0.0
      %737 = vmatmul.mubr.f32.gmra.mrb[0].mxu0 %v328
      %v738 = vpop.f32.mrb[0].mxu0
      %v739 = vadd.f32 %v508, %v738
      %v740 = vpop.f32.mrb[0].mxu0
      %741 = vmatprep.mubr.f32.mxu0 0.0
      %742 = vmatmul.mubr.f32.gmra.mrb[0].mxu0 %v331
      %v743 = vpop.f32.mrb[0].mxu0
      %v744 = vadd.f32 %v513, %v743
      %v745 = vpop.f32.mrb[0].mxu0
      %746 = vmatprep.mubr.f32.mxu0 0.0
      %747 = vmatmul.mubr.f32.gmra.mrb[0].mxu0 %v334
      %v748 = vpop.f32.mrb[0].mxu0
      %v749 = vadd.f32 %v518, %v748
      %v750 = vpop.f32.mrb[0].mxu0
      %751 = vmatprep.mubr.f32.mxu0 0.0
      %752 = vmatmul.mubr.f32.gmra.mrb[0].mxu0 %v337
      %v753 = vpop.f32.mrb[0].mxu0
      %v754 = vadd.f32 %v523, %v753
      %v755 = vpop.f32.mrb[0].mxu0
      %756 = vmatprep.mubr.f32.mxu0 0.0
      %757 = vmatmul.mubr.f32.gmra.mrb[0].mxu0 %v340
      %v758 = vpop.f32.mrb[0].mxu0
      %v759 = vadd.f32 %v528, %v758
      %v760 = vpop.f32.mrb[0].mxu0
      %761 = vmatprep.mubr.f32.mxu0 0.0
      %762 = vmatmul.mubr.f32.gmra.mrb[0].mxu0 %v343
      %v763 = vpop.f32.mrb[0].mxu0
      %v764 = vadd.f32 %v533, %v763
      %v765 = vpop.f32.mrb[0].mxu0
      %766 = vmatprep.mubr.f32.mxu0 0.0
      %767 = vmatmul.mubr.f32.gmra.mrb[0].mxu0 %v346
      %v768 = vpop.f32.mrb[0].mxu0
      %v769 = vadd.f32 %v538, %v768
      %v770 = vpop.f32.mrb[0].mxu0
      %771 = vmatprep.mubr.f32.mxu0 0.0
      %772 = vmatmul.mubr.f32.gmra.mrb[0].mxu0 %v349
      %v773 = vpop.f32.mrb[0].mxu0
      %v774 = vadd.f32 %v543, %v773
      %v775 = vpop.f32.mrb[0].mxu0
      %776 = vmatprep.mubr.f32.mxu0 0.0
      %777 = vmatmul.mubr.f32.gmra.mrb[0].mxu0 %v352
      %v778 = vpop.f32.mrb[0].mxu0
      %v779 = vadd.f32 %v548, %v778
      %v780 = vpop.f32.mrb[0].mxu0
      %781 = vmatprep.mubr.f32.mxu0 0.0
      %782 = vmatmul.mubr.f32.gmra.mrb[0].mxu0 %v355
      %v783 = vpop.f32.mrb[0].mxu0
      %v784 = vadd.f32 %v553, %v783
      %v785 = vpop.f32.mrb[0].mxu0
      %786 = vmatprep.mubr.f32.mxu0 0.0
      %787 = vmatmul.mubr.f32.gmra.mrb[0].mxu0 %v358
      %v788 = vpop.f32.mrb[0].mxu0
      %v789 = vadd.f32 %v558, %v788
      %v790 = vpop.f32.mrb[0].mxu0
      %791 = vmatprep.mubr.f32.mxu0 0.0
      %792 = vmatmul.mubr.f32.gmra.mrb[0].mxu0 %v361
      %v793 = vpop.f32.mrb[0].mxu0
      %v794 = vadd.f32 %v563, %v793
      %v795 = vpop.f32.mrb[0].mxu0
      %796 = vmatprep.mubr.f32.mxu0 0.0
      %797 = vmatmul.mubr.f32.gmra.mrb[0].mxu0 %v364
      %v798 = vpop.f32.mrb[0].mxu0
      %v799 = vadd.f32 %v568, %v798
      %v800 = vpop.f32.mrb[0].mxu0
      %801 = vmatprep.mubr.f32.mxu0 0.0
      %802 = vmatmul.mubr.f32.gmra.mrb[0].mxu0 %v367
      %v803 = vpop.f32.mrb[0].mxu0
      %v804 = vadd.f32 %v573, %v803
      %v805 = vpop.f32.mrb[0].mxu0
      %806 = vmatprep.mubr.f32.mxu0 0.0
      %807 = vmatmul.mubr.f32.gmra.mrb[0].mxu0 %v370
      %v808 = vpop.f32.mrb[0].mxu0
      %v809 = vadd.f32 %v578, %v808
      %v810 = vpop.f32.mrb[0].mxu0
      %811 = vmatprep.mubr.f32.mxu0 0.0
      %812 = vmatmul.mubr.f32.gmra.mrb[0].mxu0 %v373
      %v813 = vpop.f32.mrb[0].mxu0
      %v814 = vadd.f32 %v583, %v813
      %v815 = vpop.f32.mrb[0].mxu0
      %816 = vmatprep.mubr.f32.mxu0 0.0
      %817 = vmatmul.mubr.f32.gmra.mrb[0].mxu0 %v376
      %v818 = vpop.f32.mrb[0].mxu0
      %v819 = vadd.f32 %v588, %v818
      %v820 = vpop.f32.mrb[0].mxu0
      %821 = vmatprep.mubr.f32.mxu0 0.0
      %822 = vmatmul.mubr.f32.gmra.mrb[0].mxu0 %v379
      %v823 = vpop.f32.mrb[0].mxu0
      %v824 = vadd.f32 %v593, %v823
      %v825 = vpop.f32.mrb[0].mxu0
      %826 = vmatprep.mubr.f32.mxu0 0.0
      %827 = vmatmul.mubr.f32.gmra.mrb[0].mxu0 %v382
      %v828 = vpop.f32.mrb[0].mxu0
      %v829 = vadd.f32 %v598, %v828
      %v830 = vpop.f32.mrb[0].mxu0
      %831 = vmatprep.mubr.f32.mxu0 0.0
      %832 = vmatmul.mubr.f32.gmra.mrb[0].mxu0 %v385
      %v833 = vpop.f32.mrb[0].mxu0
      %v834 = vadd.f32 %v603, %v833
      %v835 = vpop.f32.mrb[0].mxu0
      %836 = vmatprep.mubr.f32.mxu0 0.0
      %837 = vmatmul.mubr.f32.gmra.mrb[0].mxu0 %v388
      %v838 = vpop.f32.mrb[0].mxu0
      %v839 = vadd.f32 %v608, %v838
      %v840 = vpop.f32.mrb[0].mxu0
      %841 = vmatprep.mubr.f32.mxu0 0.0
      %842 = vmatmul.mubr.f32.gmra.mrb[0].mxu0 %v391
      %v843 = vpop.f32.mrb[0].mxu0
      %v844 = vadd.f32 %v613, %v843
      %v845 = vpop.f32.mrb[0].mxu0
      %846 = vmatprep.mubr.f32.mxu0 0.0
      %847 = vmatmul.mubr.f32.gmra.mrb[0].mxu0 %v394
      %v848 = vpop.f32.mrb[0].mxu0
      %v849 = vadd.f32 %v618, %v848
      %v850 = vpop.f32.mrb[0].mxu0
      %851 = vmatprep.mubr.f32.mxu0 0.0
      %852 = vmatmul.mubr.f32.gmra.mrb[0].mxu0 %v397
      %v853 = vpop.f32.mrb[0].mxu0
      %v854 = vadd.f32 %v623, %v853
      %v855 = vpop.f32.mrb[0].mxu0
      %856 = vmatprep.mubr.f32.mxu0 0.0
      %857 = vmatmul.mubr.f32.gmra.mrb[0].mxu0 %v400
      %v858 = vpop.f32.mrb[0].mxu0
      %v859 = vadd.f32 %v628, %v858
      %v860 = vpop.f32.mrb[0].mxu0
      %861 = vmatprep.mubr.f32.mxu0 0.0
      %862 = vmatmul.mubr.f32.gmra.mrb[0].mxu0 %v403
      %v863 = vpop.f32.mrb[0].mxu0
      %v864 = vadd.f32 %v633, %v863
      %v865 = vpop.f32.mrb[0].mxu0
      %866 = vdwg.mxu0
      %s867 = scalar_lea.vmem %s1, 48
      %v868 = vld [vmem:[%s867] sm:$0xff]
      %v870 = vsel %vm314, %v309, 0
      %v873 = vsel %vm314, %v310, 0
      %875 = vmatprep.subr.mxu0 0.0
      %876 = vmatpush1.msra.mxu0 %v868
      %877 = vmatprep.subr.mxu0 0.0
      %878 = vmatpush1.msra.mxu0 0.0
      %879 = vmatprep.subr.mxu0 0.0
      %880 = vmatpush1.msra.mxu0 0.0
      %881 = vmatprep.subr.mxu0 0.0
      %882 = vmatpush1.msra.mxu0 0.0
      %883 = vmatprep.subr.mxu0 0.0
      %884 = vmatpush1.msra.mxu0 0.0
      %885 = vmatprep.subr.mxu0 0.0
      %886 = vmatpush1.msra.mxu0 0.0
      %887 = vmatprep.subr.mxu0 0.0
      %888 = vmatpush1.msra.mxu0 0.0
      %889 = vmatprep.subr.mxu0 0.0
      %890 = vmatpush1.msra.mxu0 0.0
      %891 = vmatprep.subr.mxu0 0.0
      %892 = vmatpush1.msra.mxu0 0.0
      %893 = vmatprep.subr.mxu0 0.0
      %894 = vmatpush1.msra.mxu0 0.0
      %895 = vmatprep.subr.mxu0 0.0
      %896 = vmatpush1.msra.mxu0 0.0
      %897 = vmatprep.subr.mxu0 0.0
      %898 = vmatpush1.msra.mxu0 0.0
      %899 = vmatprep.subr.mxu0 0.0
      %900 = vmatpush1.msra.mxu0 0.0
      %901 = vmatprep.subr.mxu0 0.0
      %902 = vmatpush1.msra.mxu0 0.0
      %903 = vmatprep.subr.mxu0 0.0
      %904 = vmatpush1.msra.mxu0 0.0
      %905 = vmatprep.subr.mxu0 0.0
      %906 = vmatpush1.msra.mxu0 0.0
      %907 = vmatprep.subr.mxu0 0.0
      %908 = vmatpush1.msra.mxu0 0.0
      %909 = vmatprep.subr.mxu0 0.0
      %910 = vmatpush1.msra.mxu0 0.0
      %911 = vmatprep.subr.mxu0 0.0
      %912 = vmatpush1.msra.mxu0 0.0
      %913 = vmatprep.subr.mxu0 0.0
      %914 = vmatpush1.msra.mxu0 0.0
      %915 = vmatprep.subr.mxu0 0.0
      %916 = vmatpush1.msra.mxu0 0.0
      %917 = vmatprep.subr.mxu0 0.0
      %918 = vmatpush1.msra.mxu0 0.0
      %919 = vmatprep.subr.mxu0 0.0
      %920 = vmatpush1.msra.mxu0 0.0
      %921 = vmatprep.subr.mxu0 0.0
      %922 = vmatpush1.msra.mxu0 0.0
      %923 = vmatprep.subr.mxu0 0.0
      %924 = vmatpush1.msra.mxu0 0.0
      %925 = vmatprep.subr.mxu0 0.0
      %926 = vmatpush1.msra.mxu0 0.0
      %927 = vmatprep.subr.mxu0 0.0
      %928 = vmatpush1.msra.mxu0 0.0
      %929 = vmatprep.subr.mxu0 0.0
      %930 = vmatpush1.msra.mxu0 0.0
      %931 = vmatprep.subr.mxu0 0.0
      %932 = vmatpush1.msra.mxu0 0.0
      %933 = vmatprep.subr.mxu0 0.0
      %934 = vmatpush1.msra.mxu0 0.0
      %935 = vmatprep.subr.mxu0 0.0
      %936 = vmatpush1.msra.mxu0 0.0
      %937 = vmatprep.subr.mxu0 0.0
      %938 = vmatpush1.msra.mxu0 0.0
      %939 = vmatprep.mubr.f32.mxu0 0.0
      %940 = vmatmul.mubr.f32.gmra.mrb[0].mxu0 %v322
      %v941 = vpop.f32.mrb[0].mxu0
      %v942 = vadd.f32 0.0, %v941
      %v943 = vpop.f32.mrb[0].mxu0
      %944 = vmatprep.mubr.f32.mxu0 0.0
      %945 = vmatmul.mubr.f32.gmra.mrb[0].mxu0 %v325
      %v946 = vpop.f32.mrb[0].mxu0
      %v947 = vadd.f32 0.0, %v946
      %v948 = vpop.f32.mrb[0].mxu0
      %949 = vmatprep.mubr.f32.mxu0 0.0
      %950 = vmatmul.mubr.f32.gmra.mrb[0].mxu0 %v328
      %v951 = vpop.f32.mrb[0].mxu0
      %v952 = vadd.f32 0.0, %v951
      %v953 = vpop.f32.mrb[0].mxu0
      %954 = vmatprep.mubr.f32.mxu0 0.0
      %955 = vmatmul.mubr.f32.gmra.mrb[0].mxu0 %v331
      %v956 = vpop.f32.mrb[0].mxu0
      %v957 = vadd.f32 0.0, %v956
      %v958 = vpop.f32.mrb[0].mxu0
      %959 = vmatprep.mubr.f32.mxu0 0.0
      %960 = vmatmul.mubr.f32.gmra.mrb[0].mxu0 %v334
      %v961 = vpop.f32.mrb[0].mxu0
      %v962 = vadd.f32 0.0, %v961
      %v963 = vpop.f32.mrb[0].mxu0
      %964 = vmatprep.mubr.f32.mxu0 0.0
      %965 = vmatmul.mubr.f32.gmra.mrb[0].mxu0 %v337
      %v966 = vpop.f32.mrb[0].mxu0
      %v967 = vadd.f32 0.0, %v966
      %v968 = vpop.f32.mrb[0].mxu0
      %969 = vmatprep.mubr.f32.mxu0 0.0
      %970 = vmatmul.mubr.f32.gmra.mrb[0].mxu0 %v340
      %v971 = vpop.f32.mrb[0].mxu0
      %v972 = vadd.f32 0.0, %v971
      %v973 = vpop.f32.mrb[0].mxu0
      %974 = vmatprep.mubr.f32.mxu0 0.0
      %975 = vmatmul.mubr.f32.gmra.mrb[0].mxu0 %v343
      %v976 = vpop.f32.mrb[0].mxu0
      %v977 = vadd.f32 0.0, %v976
      %v978 = vpop.f32.mrb[0].mxu0
      %979 = vmatprep.mubr.f32.mxu0 0.0
      %980 = vmatmul.mubr.f32.gmra.mrb[0].mxu0 %v346
      %v981 = vpop.f32.mrb[0].mxu0
      %v982 = vadd.f32 0.0, %v981
      %v983 = vpop.f32.mrb[0].mxu0
      %984 = vmatprep.mubr.f32.mxu0 0.0
      %985 = vmatmul.mubr.f32.gmra.mrb[0].mxu0 %v349
      %v986 = vpop.f32.mrb[0].mxu0
      %v987 = vadd.f32 0.0, %v986
      %v988 = vpop.f32.mrb[0].mxu0
      %989 = vmatprep.mubr.f32.mxu0 0.0
      %990 = vmatmul.mubr.f32.gmra.mrb[0].mxu0 %v352
      %v991 = vpop.f32.mrb[0].mxu0
      %v992 = vadd.f32 0.0, %v991
      %v993 = vpop.f32.mrb[0].mxu0
      %994 = vmatprep.mubr.f32.mxu0 0.0
      %995 = vmatmul.mubr.f32.gmra.mrb[0].mxu0 %v355
      %v996 = vpop.f32.mrb[0].mxu0
      %v997 = vadd.f32 0.0, %v996
      %v998 = vpop.f32.mrb[0].mxu0
      %999 = vmatprep.mubr.f32.mxu0 0.0
      %1000 = vmatmul.mubr.f32.gmra.mrb[0].mxu0 %v358
      %v1001 = vpop.f32.mrb[0].mxu0
      %v1002 = vadd.f32 0.0, %v1001
      %v1003 = vpop.f32.mrb[0].mxu0
      %1004 = vmatprep.mubr.f32.mxu0 0.0
      %1005 = vmatmul.mubr.f32.gmra.mrb[0].mxu0 %v361
      %v1006 = vpop.f32.mrb[0].mxu0
      %v1007 = vadd.f32 0.0, %v1006
      %v1008 = vpop.f32.mrb[0].mxu0
      %1009 = vmatprep.mubr.f32.mxu0 0.0
      %1010 = vmatmul.mubr.f32.gmra.mrb[0].mxu0 %v364
      %v1011 = vpop.f32.mrb[0].mxu0
      %v1012 = vadd.f32 0.0, %v1011
      %v1013 = vpop.f32.mrb[0].mxu0
      %1014 = vmatprep.mubr.f32.mxu0 0.0
      %1015 = vmatmul.mubr.f32.gmra.mrb[0].mxu0 %v367
      %v1016 = vpop.f32.mrb[0].mxu0
      %v1017 = vadd.f32 0.0, %v1016
      %v1018 = vpop.f32.mrb[0].mxu0
      %1019 = vmatprep.mubr.f32.mxu0 0.0
      %1020 = vmatmul.mubr.f32.gmra.mrb[0].mxu0 %v370
      %v1021 = vpop.f32.mrb[0].mxu0
      %v1022 = vadd.f32 0.0, %v1021
      %v1023 = vpop.f32.mrb[0].mxu0
      %1024 = vmatprep.mubr.f32.mxu0 0.0
      %1025 = vmatmul.mubr.f32.gmra.mrb[0].mxu0 %v373
      %v1026 = vpop.f32.mrb[0].mxu0
      %v1027 = vadd.f32 0.0, %v1026
      %v1028 = vpop.f32.mrb[0].mxu0
      %1029 = vmatprep.mubr.f32.mxu0 0.0
      %1030 = vmatmul.mubr.f32.gmra.mrb[0].mxu0 %v376
      %v1031 = vpop.f32.mrb[0].mxu0
      %v1032 = vadd.f32 0.0, %v1031
      %v1033 = vpop.f32.mrb[0].mxu0
      %1034 = vmatprep.mubr.f32.mxu0 0.0
      %1035 = vmatmul.mubr.f32.gmra.mrb[0].mxu0 %v379
      %v1036 = vpop.f32.mrb[0].mxu0
      %v1037 = vadd.f32 0.0, %v1036
      %v1038 = vpop.f32.mrb[0].mxu0
      %1039 = vmatprep.mubr.f32.mxu0 0.0
      %1040 = vmatmul.mubr.f32.gmra.mrb[0].mxu0 %v382
      %v1041 = vpop.f32.mrb[0].mxu0
      %v1042 = vadd.f32 0.0, %v1041
      %v1043 = vpop.f32.mrb[0].mxu0
      %1044 = vmatprep.mubr.f32.mxu0 0.0
      %1045 = vmatmul.mubr.f32.gmra.mrb[0].mxu0 %v385
      %v1046 = vpop.f32.mrb[0].mxu0
      %v1047 = vadd.f32 0.0, %v1046
      %v1048 = vpop.f32.mrb[0].mxu0
      %1049 = vmatprep.mubr.f32.mxu0 0.0
      %1050 = vmatmul.mubr.f32.gmra.mrb[0].mxu0 %v388
      %v1051 = vpop.f32.mrb[0].mxu0
      %v1052 = vadd.f32 0.0, %v1051
      %v1053 = vpop.f32.mrb[0].mxu0
      %1054 = vmatprep.mubr.f32.mxu0 0.0
      %1055 = vmatmul.mubr.f32.gmra.mrb[0].mxu0 %v391
      %v1056 = vpop.f32.mrb[0].mxu0
      %v1057 = vadd.f32 0.0, %v1056
      %v1058 = vpop.f32.mrb[0].mxu0
      %1059 = vmatprep.mubr.f32.mxu0 0.0
      %1060 = vmatmul.mubr.f32.gmra.mrb[0].mxu0 %v394
      %v1061 = vpop.f32.mrb[0].mxu0
      %v1062 = vadd.f32 0.0, %v1061
      %v1063 = vpop.f32.mrb[0].mxu0
      %1064 = vmatprep.mubr.f32.mxu0 0.0
      %1065 = vmatmul.mubr.f32.gmra.mrb[0].mxu0 %v397
      %v1066 = vpop.f32.mrb[0].mxu0
      %v1067 = vadd.f32 0.0, %v1066
      %v1068 = vpop.f32.mrb[0].mxu0
      %1069 = vmatprep.mubr.f32.mxu0 0.0
      %1070 = vmatmul.mubr.f32.gmra.mrb[0].mxu0 %v400
      %v1071 = vpop.f32.mrb[0].mxu0
      %v1072 = vadd.f32 0.0, %v1071
      %v1073 = vpop.f32.mrb[0].mxu0
      %1074 = vmatprep.mubr.f32.mxu0 0.0
      %1075 = vmatmul.mubr.f32.gmra.mrb[0].mxu0 %v403
      %v1076 = vpop.f32.mrb[0].mxu0
      %v1077 = vadd.f32 0.0, %v1076
      %v1078 = vpop.f32.mrb[0].mxu0
      %1079 = vmatprep.mubr.f32.mxu0 0.0
      %1080 = vmatmul.mubr.f32.gmra.mrb[0].mxu0 %v406
      %v1081 = vpop.f32.mrb[0].mxu0
      %v1082 = vadd.f32 0.0, %v1081
      %v1083 = vpop.f32.mrb[0].mxu0
      %1084 = vmatprep.mubr.f32.mxu0 0.0
      %1085 = vmatmul.mubr.f32.gmra.mrb[0].mxu0 %v409
      %v1086 = vpop.f32.mrb[0].mxu0
      %v1087 = vadd.f32 0.0, %v1086
      %v1088 = vpop.f32.mrb[0].mxu0
      %1089 = vmatprep.mubr.f32.mxu0 0.0
      %1090 = vmatmul.mubr.f32.gmra.mrb[0].mxu0 %v870
      %v1091 = vpop.f32.mrb[0].mxu0
      %v1092 = vadd.f32 0.0, %v1091
      %v1093 = vpop.f32.mrb[0].mxu0
      %1094 = vmatprep.mubr.f32.mxu0 0.0
      %1095 = vmatmul.mubr.f32.gmra.mrb[0].mxu0 %v873
      %v1096 = vpop.f32.mrb[0].mxu0
      %v1097 = vadd.f32 0.0, %v1096
      %v1098 = vpop.f32.mrb[0].mxu0
      %1099 = vdwg.mxu0
      %v1100 = vadd.f32 %v709, %v942
      %v1101 = vadd.f32 %v714, %v947
      %v1102 = vadd.f32 %v719, %v952
      %v1103 = vadd.f32 %v724, %v957
      %v1104 = vadd.f32 %v729, %v962
      %v1105 = vadd.f32 %v734, %v967
      %v1106 = vadd.f32 %v739, %v972
      %v1107 = vadd.f32 %v744, %v977
      %v1108 = vadd.f32 %v749, %v982
      %v1109 = vadd.f32 %v754, %v987
      %v1110 = vadd.f32 %v759, %v992
      %v1111 = vadd.f32 %v764, %v997
      %v1112 = vadd.f32 %v769, %v1002
      %v1113 = vadd.f32 %v774, %v1007
      %v1114 = vadd.f32 %v779, %v1012
      %v1115 = vadd.f32 %v784, %v1017
      %v1116 = vadd.f32 %v789, %v1022
      %v1117 = vadd.f32 %v794, %v1027
      %v1118 = vadd.f32 %v799, %v1032
      %v1119 = vadd.f32 %v804, %v1037
      %v1120 = vadd.f32 %v809, %v1042
      %v1121 = vadd.f32 %v814, %v1047
      %v1122 = vadd.f32 %v819, %v1052
      %v1123 = vadd.f32 %v824, %v1057
      %v1124 = vadd.f32 %v829, %v1062
      %v1125 = vadd.f32 %v834, %v1067
      %v1126 = vadd.f32 %v839, %v1072
      %v1127 = vadd.f32 %v844, %v1077
      %v1128 = vadd.f32 %v849, %v1082
      %v1129 = vadd.f32 %v854, %v1087
      %v1130 = vadd.f32 %v859, %v1092
      %v1131 = vadd.f32 %v864, %v1097
      %v1132 = vld [vmem:[%s219 + $0x1] sm:$0xff]
      %v1133 = vld [vmem:[%s219 + $0x9] sm:$0xff]
      %v1134 = vld [vmem:[%s219 + $0x19] sm:$0xff]
      %v1135 = vld [vmem:[%s219 + $0x21] sm:$0xff]
      %v1136 = vld [vmem:[%s219 + $0x31] sm:$0xff]
      %v1137 = vld [vmem:[%s219 + $0x39] sm:$0xff]
      %v1138 = vld [vmem:[%s219 + $0x49] sm:$0xff]
      %v1139 = vld [vmem:[%s219 + $0x51] sm:$0xff]
      %v1140 = vld [vmem:[%s219 + $0x61] sm:$0xff]
      %v1141 = vld [vmem:[%s219 + $0x69] sm:$0xff]
      %v1142 = vld [vmem:[%s219 + $0x79] sm:$0xff]
      %v1143 = vld [vmem:[%s219 + $0x81] sm:$0xff]
      %v1144 = vld [vmem:[%s219 + $0x91] sm:$0xff]
      %v1145 = vld [vmem:[%s219 + $0x99] sm:$0xff]
      %v1146 = vld [vmem:[%s219 + $0xa9] sm:$0xff]
      %v1147 = vld [vmem:[%s219 + $0xb1] sm:$0xff]
      %v1148 = vld [vmem:[%s219 + $0xc1] sm:$0xff]
      %v1149 = vld [vmem:[%s219 + $0xc9] sm:$0xff]
      %v1150 = vld [vmem:[%s219 + $0xd9] sm:$0xff]
      %v1151 = vld [vmem:[%s219 + $0xe1] sm:$0xff]
      %v1152 = vld [vmem:[%s219 + $0xf1] sm:$0xff]
      %v1153 = vld [vmem:[%s219 + $0xf9] sm:$0xff]
      %v1154 = vld [vmem:[%s219 + $0x109] sm:$0xff]
      %v1155 = vld [vmem:[%s219 + $0x111] sm:$0xff]
      %v1156 = vld [vmem:[%s219 + $0x121] sm:$0xff]
      %v1157 = vld [vmem:[%s219 + $0x129] sm:$0xff]
      %v1158 = vld [vmem:[%s219 + $0x139] sm:$0xff]
      %v1159 = vld [vmem:[%s219 + $0x141] sm:$0xff]
      %v1160 = vld [vmem:[%s219 + $0x151] sm:$0xff]
      %v1161 = vld [vmem:[%s219 + $0x159] sm:$0xff]
      %v1162 = vld [vmem:[%s219 + $0x169] sm:$0xff]
      %v1163 = vld [vmem:[%s219 + $0x171] sm:$0xff]
      %v1164 = vld [vmem:[%s219 + $0x181] sm:$0xff]
      %v1165 = vld [vmem:[%s219 + $0x189] sm:$0xff]
      %v1166 = vld [vmem:[%s219 + $0x199] sm:$0xff]
      %v1167 = vld [vmem:[%s219 + $0x1a1] sm:$0xff]
      %s1168 = scalar_lea.vmem %s1, 8
      %v1169 = vld [vmem:[%s1168] sm:$0xff]
      %v1171 = vsel %vm314, %v1132, 0
      %v1174 = vsel %vm314, %v1133, 0
      %v1177 = vsel %vm314, %v1134, 0
      %v1180 = vsel %vm314, %v1135, 0
      %v1183 = vsel %vm314, %v1136, 0
      %v1186 = vsel %vm314, %v1137, 0
      %v1189 = vsel %vm314, %v1138, 0
      %v1192 = vsel %vm314, %v1139, 0
      %v1195 = vsel %vm314, %v1140, 0
      %v1198 = vsel %vm314, %v1141, 0
      %v1201 = vsel %vm314, %v1142, 0
      %v1204 = vsel %vm314, %v1143, 0
      %v1207 = vsel %vm314, %v1144, 0
      %v1210 = vsel %vm314, %v1145, 0
      %v1213 = vsel %vm314, %v1146, 0
      %v1216 = vsel %vm314, %v1147, 0
      %v1219 = vsel %vm314, %v1148, 0
      %v1222 = vsel %vm314, %v1149, 0
      %v1225 = vsel %vm314, %v1150, 0
      %v1228 = vsel %vm314, %v1151, 0
      %v1231 = vsel %vm314, %v1152, 0
      %v1234 = vsel %vm314, %v1153, 0
      %v1237 = vsel %vm314, %v1154, 0
      %v1240 = vsel %vm314, %v1155, 0
      %v1243 = vsel %vm314, %v1156, 0
      %v1246 = vsel %vm314, %v1157, 0
      %v1249 = vsel %vm314, %v1158, 0
      %v1252 = vsel %vm314, %v1159, 0
      %v1255 = vsel %vm314, %v1160, 0
      %v1258 = vsel %vm314, %v1161, 0
      %v1261 = vsel %vm314, %v1162, 0
      %v1264 = vsel %vm314, %v1163, 0
      %1266 = vmatprep.subr.mxu0 0.0
      %1267 = vmatpush1.msra.mxu0 %v1169
      %1268 = vmatprep.subr.mxu0 0.0
      %1269 = vmatpush1.msra.mxu0 0.0
      %1270 = vmatprep.subr.mxu0 0.0
      %1271 = vmatpush1.msra.mxu0 0.0
      %1272 = vmatprep.subr.mxu0 0.0
      %1273 = vmatpush1.msra.mxu0 0.0
      %1274 = vmatprep.subr.mxu0 0.0
      %1275 = vmatpush1.msra.mxu0 0.0
      %1276 = vmatprep.subr.mxu0 0.0
      %1277 = vmatpush1.msra.mxu0 0.0
      %1278 = vmatprep.subr.mxu0 0.0
      %1279 = vmatpush1.msra.mxu0 0.0
      %1280 = vmatprep.subr.mxu0 0.0
      %1281 = vmatpush1.msra.mxu0 0.0
      %1282 = vmatprep.subr.mxu0 0.0
      %1283 = vmatpush1.msra.mxu0 0.0
      %1284 = vmatprep.subr.mxu0 0.0
      %1285 = vmatpush1.msra.mxu0 0.0
      %1286 = vmatprep.subr.mxu0 0.0
      %1287 = vmatpush1.msra.mxu0 0.0
      %1288 = vmatprep.subr.mxu0 0.0
      %1289 = vmatpush1.msra.mxu0 0.0
      %1290 = vmatprep.subr.mxu0 0.0
      %1291 = vmatpush1.msra.mxu0 0.0
      %1292 = vmatprep.subr.mxu0 0.0
      %1293 = vmatpush1.msra.mxu0 0.0
      %1294 = vmatprep.subr.mxu0 0.0
      %1295 = vmatpush1.msra.mxu0 0.0
      %1296 = vmatprep.subr.mxu0 0.0
      %1297 = vmatpush1.msra.mxu0 0.0
      %1298 = vmatprep.subr.mxu0 0.0
      %1299 = vmatpush1.msra.mxu0 0.0
      %1300 = vmatprep.subr.mxu0 0.0
      %1301 = vmatpush1.msra.mxu0 0.0
      %1302 = vmatprep.subr.mxu0 0.0
      %1303 = vmatpush1.msra.mxu0 0.0
      %1304 = vmatprep.subr.mxu0 0.0
      %1305 = vmatpush1.msra.mxu0 0.0
      %1306 = vmatprep.subr.mxu0 0.0
      %1307 = vmatpush1.msra.mxu0 0.0
      %1308 = vmatprep.subr.mxu0 0.0
      %1309 = vmatpush1.msra.mxu0 0.0
      %1310 = vmatprep.subr.mxu0 0.0
      %1311 = vmatpush1.msra.mxu0 0.0
      %1312 = vmatprep.subr.mxu0 0.0
      %1313 = vmatpush1.msra.mxu0 0.0
      %1314 = vmatprep.subr.mxu0 0.0
      %1315 = vmatpush1.msra.mxu0 0.0
      %1316 = vmatprep.subr.mxu0 0.0
      %1317 = vmatpush1.msra.mxu0 0.0
      %1318 = vmatprep.subr.mxu0 0.0
      %1319 = vmatpush1.msra.mxu0 0.0
      %1320 = vmatprep.subr.mxu0 0.0
      %1321 = vmatpush1.msra.mxu0 0.0
      %1322 = vmatprep.subr.mxu0 0.0
      %1323 = vmatpush1.msra.mxu0 0.0
      %1324 = vmatprep.subr.mxu0 0.0
      %1325 = vmatpush1.msra.mxu0 0.0
      %1326 = vmatprep.subr.mxu0 0.0
      %1327 = vmatpush1.msra.mxu0 0.0
      %1328 = vmatprep.subr.mxu0 0.0
      %1329 = vmatpush1.msra.mxu0 0.0
      %1330 = vmatprep.mubr.f32.mxu0 0.0
      %1331 = vmatmul.mubr.f32.gmra.mrb[0].mxu0 %v1171
      %v1332 = vpop.f32.mrb[0].mxu0
      %v1333 = vadd.f32 0.0, %v1332
      %v1334 = vpop.f32.mrb[0].mxu0
      %1335 = vmatprep.mubr.f32.mxu0 0.0
      %1336 = vmatmul.mubr.f32.gmra.mrb[0].mxu0 %v1174
      %v1337 = vpop.f32.mrb[0].mxu0
      %v1338 = vadd.f32 0.0, %v1337
      %v1339 = vpop.f32.mrb[0].mxu0
      %1340 = vmatprep.mubr.f32.mxu0 0.0
      %1341 = vmatmul.mubr.f32.gmra.mrb[0].mxu0 %v1177
      %v1342 = vpop.f32.mrb[0].mxu0
      %v1343 = vadd.f32 0.0, %v1342
      %v1344 = vpop.f32.mrb[0].mxu0
      %1345 = vmatprep.mubr.f32.mxu0 0.0
      %1346 = vmatmul.mubr.f32.gmra.mrb[0].mxu0 %v1180
      %v1347 = vpop.f32.mrb[0].mxu0
      %v1348 = vadd.f32 0.0, %v1347
      %v1349 = vpop.f32.mrb[0].mxu0
      %1350 = vmatprep.mubr.f32.mxu0 0.0
      %1351 = vmatmul.mubr.f32.gmra.mrb[0].mxu0 %v1183
      %v1352 = vpop.f32.mrb[0].mxu0
      %v1353 = vadd.f32 0.0, %v1352
      %v1354 = vpop.f32.mrb[0].mxu0
      %1355 = vmatprep.mubr.f32.mxu0 0.0
      %1356 = vmatmul.mubr.f32.gmra.mrb[0].mxu0 %v1186
      %v1357 = vpop.f32.mrb[0].mxu0
      %v1358 = vadd.f32 0.0, %v1357
      %v1359 = vpop.f32.mrb[0].mxu0
      %1360 = vmatprep.mubr.f32.mxu0 0.0
      %1361 = vmatmul.mubr.f32.gmra.mrb[0].mxu0 %v1189
      %v1362 = vpop.f32.mrb[0].mxu0
      %v1363 = vadd.f32 0.0, %v1362
      %v1364 = vpop.f32.mrb[0].mxu0
      %1365 = vmatprep.mubr.f32.mxu0 0.0
      %1366 = vmatmul.mubr.f32.gmra.mrb[0].mxu0 %v1192
      %v1367 = vpop.f32.mrb[0].mxu0
      %v1368 = vadd.f32 0.0, %v1367
      %v1369 = vpop.f32.mrb[0].mxu0
      %1370 = vmatprep.mubr.f32.mxu0 0.0
      %1371 = vmatmul.mubr.f32.gmra.mrb[0].mxu0 %v1195
      %v1372 = vpop.f32.mrb[0].mxu0
      %v1373 = vadd.f32 0.0, %v1372
      %v1374 = vpop.f32.mrb[0].mxu0
      %1375 = vmatprep.mubr.f32.mxu0 0.0
      %1376 = vmatmul.mubr.f32.gmra.mrb[0].mxu0 %v1198
      %v1377 = vpop.f32.mrb[0].mxu0
      %v1378 = vadd.f32 0.0, %v1377
      %v1379 = vpop.f32.mrb[0].mxu0
      %1380 = vmatprep.mubr.f32.mxu0 0.0
      %1381 = vmatmul.mubr.f32.gmra.mrb[0].mxu0 %v1201
      %v1382 = vpop.f32.mrb[0].mxu0
      %v1383 = vadd.f32 0.0, %v1382
      %v1384 = vpop.f32.mrb[0].mxu0
      %1385 = vmatprep.mubr.f32.mxu0 0.0
      %1386 = vmatmul.mubr.f32.gmra.mrb[0].mxu0 %v1204
      %v1387 = vpop.f32.mrb[0].mxu0
      %v1388 = vadd.f32 0.0, %v1387
      %v1389 = vpop.f32.mrb[0].mxu0
      %1390 = vmatprep.mubr.f32.mxu0 0.0
      %1391 = vmatmul.mubr.f32.gmra.mrb[0].mxu0 %v1207
      %v1392 = vpop.f32.mrb[0].mxu0
      %v1393 = vadd.f32 0.0, %v1392
      %v1394 = vpop.f32.mrb[0].mxu0
      %1395 = vmatprep.mubr.f32.mxu0 0.0
      %1396 = vmatmul.mubr.f32.gmra.mrb[0].mxu0 %v1210
      %v1397 = vpop.f32.mrb[0].mxu0
      %v1398 = vadd.f32 0.0, %v1397
      %v1399 = vpop.f32.mrb[0].mxu0
      %1400 = vmatprep.mubr.f32.mxu0 0.0
      %1401 = vmatmul.mubr.f32.gmra.mrb[0].mxu0 %v1213
      %v1402 = vpop.f32.mrb[0].mxu0
      %v1403 = vadd.f32 0.0, %v1402
      %v1404 = vpop.f32.mrb[0].mxu0
      %1405 = vmatprep.mubr.f32.mxu0 0.0
      %1406 = vmatmul.mubr.f32.gmra.mrb[0].mxu0 %v1216
      %v1407 = vpop.f32.mrb[0].mxu0
      %v1408 = vadd.f32 0.0, %v1407
      %v1409 = vpop.f32.mrb[0].mxu0
      %1410 = vmatprep.mubr.f32.mxu0 0.0
      %1411 = vmatmul.mubr.f32.gmra.mrb[0].mxu0 %v1219
      %v1412 = vpop.f32.mrb[0].mxu0
      %v1413 = vadd.f32 0.0, %v1412
      %v1414 = vpop.f32.mrb[0].mxu0
      %1415 = vmatprep.mubr.f32.mxu0 0.0
      %1416 = vmatmul.mubr.f32.gmra.mrb[0].mxu0 %v1222
      %v1417 = vpop.f32.mrb[0].mxu0
      %v1418 = vadd.f32 0.0, %v1417
      %v1419 = vpop.f32.mrb[0].mxu0
      %1420 = vmatprep.mubr.f32.mxu0 0.0
      %1421 = vmatmul.mubr.f32.gmra.mrb[0].mxu0 %v1225
      %v1422 = vpop.f32.mrb[0].mxu0
      %v1423 = vadd.f32 0.0, %v1422
      %v1424 = vpop.f32.mrb[0].mxu0
      %1425 = vmatprep.mubr.f32.mxu0 0.0
      %1426 = vmatmul.mubr.f32.gmra.mrb[0].mxu0 %v1228
      %v1427 = vpop.f32.mrb[0].mxu0
      %v1428 = vadd.f32 0.0, %v1427
      %v1429 = vpop.f32.mrb[0].mxu0
      %1430 = vmatprep.mubr.f32.mxu0 0.0
      %1431 = vmatmul.mubr.f32.gmra.mrb[0].mxu0 %v1231
      %v1432 = vpop.f32.mrb[0].mxu0
      %v1433 = vadd.f32 0.0, %v1432
      %v1434 = vpop.f32.mrb[0].mxu0
      %1435 = vmatprep.mubr.f32.mxu0 0.0
      %1436 = vmatmul.mubr.f32.gmra.mrb[0].mxu0 %v1234
      %v1437 = vpop.f32.mrb[0].mxu0
      %v1438 = vadd.f32 0.0, %v1437
      %v1439 = vpop.f32.mrb[0].mxu0
      %1440 = vmatprep.mubr.f32.mxu0 0.0
      %1441 = vmatmul.mubr.f32.gmra.mrb[0].mxu0 %v1237
      %v1442 = vpop.f32.mrb[0].mxu0
      %v1443 = vadd.f32 0.0, %v1442
      %v1444 = vpop.f32.mrb[0].mxu0
      %1445 = vmatprep.mubr.f32.mxu0 0.0
      %1446 = vmatmul.mubr.f32.gmra.mrb[0].mxu0 %v1240
      %v1447 = vpop.f32.mrb[0].mxu0
      %v1448 = vadd.f32 0.0, %v1447
      %v1449 = vpop.f32.mrb[0].mxu0
      %1450 = vmatprep.mubr.f32.mxu0 0.0
      %1451 = vmatmul.mubr.f32.gmra.mrb[0].mxu0 %v1243
      %v1452 = vpop.f32.mrb[0].mxu0
      %v1453 = vadd.f32 0.0, %v1452
      %v1454 = vpop.f32.mrb[0].mxu0
      %1455 = vmatprep.mubr.f32.mxu0 0.0
      %1456 = vmatmul.mubr.f32.gmra.mrb[0].mxu0 %v1246
      %v1457 = vpop.f32.mrb[0].mxu0
      %v1458 = vadd.f32 0.0, %v1457
      %v1459 = vpop.f32.mrb[0].mxu0
      %1460 = vmatprep.mubr.f32.mxu0 0.0
      %1461 = vmatmul.mubr.f32.gmra.mrb[0].mxu0 %v1249
      %v1462 = vpop.f32.mrb[0].mxu0
      %v1463 = vadd.f32 0.0, %v1462
      %v1464 = vpop.f32.mrb[0].mxu0
      %1465 = vmatprep.mubr.f32.mxu0 0.0
      %1466 = vmatmul.mubr.f32.gmra.mrb[0].mxu0 %v1252
      %v1467 = vpop.f32.mrb[0].mxu0
      %v1468 = vadd.f32 0.0, %v1467
      %v1469 = vpop.f32.mrb[0].mxu0
      %1470 = vmatprep.mubr.f32.mxu0 0.0
      %1471 = vmatmul.mubr.f32.gmra.mrb[0].mxu0 %v1255
      %v1472 = vpop.f32.mrb[0].mxu0
      %v1473 = vadd.f32 0.0, %v1472
      %v1474 = vpop.f32.mrb[0].mxu0
      %1475 = vmatprep.mubr.f32.mxu0 0.0
      %1476 = vmatmul.mubr.f32.gmra.mrb[0].mxu0 %v1258
      %v1477 = vpop.f32.mrb[0].mxu0
      %v1478 = vadd.f32 0.0, %v1477
      %v1479 = vpop.f32.mrb[0].mxu0
      %1480 = vmatprep.mubr.f32.mxu0 0.0
      %1481 = vmatmul.mubr.f32.gmra.mrb[0].mxu0 %v1261
      %v1482 = vpop.f32.mrb[0].mxu0
      %v1483 = vadd.f32 0.0, %v1482
      %v1484 = vpop.f32.mrb[0].mxu0
      %1485 = vmatprep.mubr.f32.mxu0 0.0
      %1486 = vmatmul.mubr.f32.gmra.mrb[0].mxu0 %v1264
      %v1487 = vpop.f32.mrb[0].mxu0
      %v1488 = vadd.f32 0.0, %v1487
      %v1489 = vpop.f32.mrb[0].mxu0
      %1490 = vdwg.mxu0
      %v1491 = vadd.f32 %v1100, %v1333
      %v1492 = vadd.f32 %v1101, %v1338
      %v1493 = vadd.f32 %v1102, %v1343
      %v1494 = vadd.f32 %v1103, %v1348
      %v1495 = vadd.f32 %v1104, %v1353
      %v1496 = vadd.f32 %v1105, %v1358
      %v1497 = vadd.f32 %v1106, %v1363
      %v1498 = vadd.f32 %v1107, %v1368
      %v1499 = vadd.f32 %v1108, %v1373
      %v1500 = vadd.f32 %v1109, %v1378
      %v1501 = vadd.f32 %v1110, %v1383
      %v1502 = vadd.f32 %v1111, %v1388
      %v1503 = vadd.f32 %v1112, %v1393
      %v1504 = vadd.f32 %v1113, %v1398
      %v1505 = vadd.f32 %v1114, %v1403
      %v1506 = vadd.f32 %v1115, %v1408
      %v1507 = vadd.f32 %v1116, %v1413
      %v1508 = vadd.f32 %v1117, %v1418
      %v1509 = vadd.f32 %v1118, %v1423
      %v1510 = vadd.f32 %v1119, %v1428
      %v1511 = vadd.f32 %v1120, %v1433
      %v1512 = vadd.f32 %v1121, %v1438
      %v1513 = vadd.f32 %v1122, %v1443
      %v1514 = vadd.f32 %v1123, %v1448
      %v1515 = vadd.f32 %v1124, %v1453
      %v1516 = vadd.f32 %v1125, %v1458
      %v1517 = vadd.f32 %v1126, %v1463
      %v1518 = vadd.f32 %v1127, %v1468
      %v1519 = vadd.f32 %v1128, %v1473
      %v1520 = vadd.f32 %v1129, %v1478
      %v1521 = vadd.f32 %v1130, %v1483
      %v1522 = vadd.f32 %v1131, %v1488
      %s1523 = scalar_lea.vmem %s1, 32
      %v1524 = vld [vmem:[%s1523] sm:$0xff]
      %v1526 = vsel %vm314, %v1164, 0
      %v1529 = vsel %vm314, %v1165, 0
      %1531 = vmatprep.subr.mxu0 0.0
      %1532 = vmatpush1.msra.mxu0 %v1524
      %1533 = vmatprep.subr.mxu0 0.0
      %1534 = vmatpush1.msra.mxu0 0.0
      %1535 = vmatprep.subr.mxu0 0.0
      %1536 = vmatpush1.msra.mxu0 0.0
      %1537 = vmatprep.subr.mxu0 0.0
      %1538 = vmatpush1.msra.mxu0 0.0
      %1539 = vmatprep.subr.mxu0 0.0
      %1540 = vmatpush1.msra.mxu0 0.0
      %1541 = vmatprep.subr.mxu0 0.0
      %1542 = vmatpush1.msra.mxu0 0.0
      %1543 = vmatprep.subr.mxu0 0.0
      %1544 = vmatpush1.msra.mxu0 0.0
      %1545 = vmatprep.subr.mxu0 0.0
      %1546 = vmatpush1.msra.mxu0 0.0
      %1547 = vmatprep.subr.mxu0 0.0
      %1548 = vmatpush1.msra.mxu0 0.0
      %1549 = vmatprep.subr.mxu0 0.0
      %1550 = vmatpush1.msra.mxu0 0.0
      %1551 = vmatprep.subr.mxu0 0.0
      %1552 = vmatpush1.msra.mxu0 0.0
      %1553 = vmatprep.subr.mxu0 0.0
      %1554 = vmatpush1.msra.mxu0 0.0
      %1555 = vmatprep.subr.mxu0 0.0
      %1556 = vmatpush1.msra.mxu0 0.0
      %1557 = vmatprep.subr.mxu0 0.0
      %1558 = vmatpush1.msra.mxu0 0.0
      %1559 = vmatprep.subr.mxu0 0.0
      %1560 = vmatpush1.msra.mxu0 0.0
      %1561 = vmatprep.subr.mxu0 0.0
      %1562 = vmatpush1.msra.mxu0 0.0
      %1563 = vmatprep.subr.mxu0 0.0
      %1564 = vmatpush1.msra.mxu0 0.0
      %1565 = vmatprep.subr.mxu0 0.0
      %1566 = vmatpush1.msra.mxu0 0.0
      %1567 = vmatprep.subr.mxu0 0.0
      %1568 = vmatpush1.msra.mxu0 0.0
      %1569 = vmatprep.subr.mxu0 0.0
      %1570 = vmatpush1.msra.mxu0 0.0
      %1571 = vmatprep.subr.mxu0 0.0
      %1572 = vmatpush1.msra.mxu0 0.0
      %1573 = vmatprep.subr.mxu0 0.0
      %1574 = vmatpush1.msra.mxu0 0.0
      %1575 = vmatprep.subr.mxu0 0.0
      %1576 = vmatpush1.msra.mxu0 0.0
      %1577 = vmatprep.subr.mxu0 0.0
      %1578 = vmatpush1.msra.mxu0 0.0
      %1579 = vmatprep.subr.mxu0 0.0
      %1580 = vmatpush1.msra.mxu0 0.0
      %1581 = vmatprep.subr.mxu0 0.0
      %1582 = vmatpush1.msra.mxu0 0.0
      %1583 = vmatprep.subr.mxu0 0.0
      %1584 = vmatpush1.msra.mxu0 0.0
      %1585 = vmatprep.subr.mxu0 0.0
      %1586 = vmatpush1.msra.mxu0 0.0
      %1587 = vmatprep.subr.mxu0 0.0
      %1588 = vmatpush1.msra.mxu0 0.0
      %1589 = vmatprep.subr.mxu0 0.0
      %1590 = vmatpush1.msra.mxu0 0.0
      %1591 = vmatprep.subr.mxu0 0.0
      %1592 = vmatpush1.msra.mxu0 0.0
      %1593 = vmatprep.subr.mxu0 0.0
      %1594 = vmatpush1.msra.mxu0 0.0
      %1595 = vmatprep.mubr.f32.mxu0 0.0
      %1596 = vmatmul.mubr.f32.gmra.mrb[0].mxu0 %v1177
      %v1597 = vpop.f32.mrb[0].mxu0
      %v1598 = vadd.f32 0.0, %v1597
      %v1599 = vpop.f32.mrb[0].mxu0
      %1600 = vmatprep.mubr.f32.mxu0 0.0
      %1601 = vmatmul.mubr.f32.gmra.mrb[0].mxu0 %v1180
      %v1602 = vpop.f32.mrb[0].mxu0
      %v1603 = vadd.f32 0.0, %v1602
      %v1604 = vpop.f32.mrb[0].mxu0
      %1605 = vmatprep.mubr.f32.mxu0 0.0
      %1606 = vmatmul.mubr.f32.gmra.mrb[0].mxu0 %v1183
      %v1607 = vpop.f32.mrb[0].mxu0
      %v1608 = vadd.f32 0.0, %v1607
      %v1609 = vpop.f32.mrb[0].mxu0
      %1610 = vmatprep.mubr.f32.mxu0 0.0
      %1611 = vmatmul.mubr.f32.gmra.mrb[0].mxu0 %v1186
      %v1612 = vpop.f32.mrb[0].mxu0
      %v1613 = vadd.f32 0.0, %v1612
      %v1614 = vpop.f32.mrb[0].mxu0
      %1615 = vmatprep.mubr.f32.mxu0 0.0
      %1616 = vmatmul.mubr.f32.gmra.mrb[0].mxu0 %v1189
      %v1617 = vpop.f32.mrb[0].mxu0
      %v1618 = vadd.f32 0.0, %v1617
      %v1619 = vpop.f32.mrb[0].mxu0
      %1620 = vmatprep.mubr.f32.mxu0 0.0
      %1621 = vmatmul.mubr.f32.gmra.mrb[0].mxu0 %v1192
      %v1622 = vpop.f32.mrb[0].mxu0
      %v1623 = vadd.f32 0.0, %v1622
      %v1624 = vpop.f32.mrb[0].mxu0
      %1625 = vmatprep.mubr.f32.mxu0 0.0
      %1626 = vmatmul.mubr.f32.gmra.mrb[0].mxu0 %v1195
      %v1627 = vpop.f32.mrb[0].mxu0
      %v1628 = vadd.f32 0.0, %v1627
      %v1629 = vpop.f32.mrb[0].mxu0
      %1630 = vmatprep.mubr.f32.mxu0 0.0
      %1631 = vmatmul.mubr.f32.gmra.mrb[0].mxu0 %v1198
      %v1632 = vpop.f32.mrb[0].mxu0
      %v1633 = vadd.f32 0.0, %v1632
      %v1634 = vpop.f32.mrb[0].mxu0
      %1635 = vmatprep.mubr.f32.mxu0 0.0
      %1636 = vmatmul.mubr.f32.gmra.mrb[0].mxu0 %v1201
      %v1637 = vpop.f32.mrb[0].mxu0
      %v1638 = vadd.f32 0.0, %v1637
      %v1639 = vpop.f32.mrb[0].mxu0
      %1640 = vmatprep.mubr.f32.mxu0 0.0
      %1641 = vmatmul.mubr.f32.gmra.mrb[0].mxu0 %v1204
      %v1642 = vpop.f32.mrb[0].mxu0
      %v1643 = vadd.f32 0.0, %v1642
      %v1644 = vpop.f32.mrb[0].mxu0
      %1645 = vmatprep.mubr.f32.mxu0 0.0
      %1646 = vmatmul.mubr.f32.gmra.mrb[0].mxu0 %v1207
      %v1647 = vpop.f32.mrb[0].mxu0
      %v1648 = vadd.f32 0.0, %v1647
      %v1649 = vpop.f32.mrb[0].mxu0
      %1650 = vmatprep.mubr.f32.mxu0 0.0
      %1651 = vmatmul.mubr.f32.gmra.mrb[0].mxu0 %v1210
      %v1652 = vpop.f32.mrb[0].mxu0
      %v1653 = vadd.f32 0.0, %v1652
      %v1654 = vpop.f32.mrb[0].mxu0
      %1655 = vmatprep.mubr.f32.mxu0 0.0
      %1656 = vmatmul.mubr.f32.gmra.mrb[0].mxu0 %v1213
      %v1657 = vpop.f32.mrb[0].mxu0
      %v1658 = vadd.f32 0.0, %v1657
      %v1659 = vpop.f32.mrb[0].mxu0
      %1660 = vmatprep.mubr.f32.mxu0 0.0
      %1661 = vmatmul.mubr.f32.gmra.mrb[0].mxu0 %v1216
      %v1662 = vpop.f32.mrb[0].mxu0
      %v1663 = vadd.f32 0.0, %v1662
      %v1664 = vpop.f32.mrb[0].mxu0
      %1665 = vmatprep.mubr.f32.mxu0 0.0
      %1666 = vmatmul.mubr.f32.gmra.mrb[0].mxu0 %v1219
      %v1667 = vpop.f32.mrb[0].mxu0
      %v1668 = vadd.f32 0.0, %v1667
      %v1669 = vpop.f32.mrb[0].mxu0
      %1670 = vmatprep.mubr.f32.mxu0 0.0
      %1671 = vmatmul.mubr.f32.gmra.mrb[0].mxu0 %v1222
      %v1672 = vpop.f32.mrb[0].mxu0
      %v1673 = vadd.f32 0.0, %v1672
      %v1674 = vpop.f32.mrb[0].mxu0
      %1675 = vmatprep.mubr.f32.mxu0 0.0
      %1676 = vmatmul.mubr.f32.gmra.mrb[0].mxu0 %v1225
      %v1677 = vpop.f32.mrb[0].mxu0
      %v1678 = vadd.f32 0.0, %v1677
      %v1679 = vpop.f32.mrb[0].mxu0
      %1680 = vmatprep.mubr.f32.mxu0 0.0
      %1681 = vmatmul.mubr.f32.gmra.mrb[0].mxu0 %v1228
      %v1682 = vpop.f32.mrb[0].mxu0
      %v1683 = vadd.f32 0.0, %v1682
      %v1684 = vpop.f32.mrb[0].mxu0
      %1685 = vmatprep.mubr.f32.mxu0 0.0
      %1686 = vmatmul.mubr.f32.gmra.mrb[0].mxu0 %v1231
      %v1687 = vpop.f32.mrb[0].mxu0
      %v1688 = vadd.f32 0.0, %v1687
      %v1689 = vpop.f32.mrb[0].mxu0
      %1690 = vmatprep.mubr.f32.mxu0 0.0
      %1691 = vmatmul.mubr.f32.gmra.mrb[0].mxu0 %v1234
      %v1692 = vpop.f32.mrb[0].mxu0
      %v1693 = vadd.f32 0.0, %v1692
      %v1694 = vpop.f32.mrb[0].mxu0
      %1695 = vmatprep.mubr.f32.mxu0 0.0
      %1696 = vmatmul.mubr.f32.gmra.mrb[0].mxu0 %v1237
      %v1697 = vpop.f32.mrb[0].mxu0
      %v1698 = vadd.f32 0.0, %v1697
      %v1699 = vpop.f32.mrb[0].mxu0
      %1700 = vmatprep.mubr.f32.mxu0 0.0
      %1701 = vmatmul.mubr.f32.gmra.mrb[0].mxu0 %v1240
      %v1702 = vpop.f32.mrb[0].mxu0
      %v1703 = vadd.f32 0.0, %v1702
      %v1704 = vpop.f32.mrb[0].mxu0
      %1705 = vmatprep.mubr.f32.mxu0 0.0
      %1706 = vmatmul.mubr.f32.gmra.mrb[0].mxu0 %v1243
      %v1707 = vpop.f32.mrb[0].mxu0
      %v1708 = vadd.f32 0.0, %v1707
      %v1709 = vpop.f32.mrb[0].mxu0
      %1710 = vmatprep.mubr.f32.mxu0 0.0
      %1711 = vmatmul.mubr.f32.gmra.mrb[0].mxu0 %v1246
      %v1712 = vpop.f32.mrb[0].mxu0
      %v1713 = vadd.f32 0.0, %v1712
      %v1714 = vpop.f32.mrb[0].mxu0
      %1715 = vmatprep.mubr.f32.mxu0 0.0
      %1716 = vmatmul.mubr.f32.gmra.mrb[0].mxu0 %v1249
      %v1717 = vpop.f32.mrb[0].mxu0
      %v1718 = vadd.f32 0.0, %v1717
      %v1719 = vpop.f32.mrb[0].mxu0
      %1720 = vmatprep.mubr.f32.mxu0 0.0
      %1721 = vmatmul.mubr.f32.gmra.mrb[0].mxu0 %v1252
      %v1722 = vpop.f32.mrb[0].mxu0
      %v1723 = vadd.f32 0.0, %v1722
      %v1724 = vpop.f32.mrb[0].mxu0
      %1725 = vmatprep.mubr.f32.mxu0 0.0
      %1726 = vmatmul.mubr.f32.gmra.mrb[0].mxu0 %v1255
      %v1727 = vpop.f32.mrb[0].mxu0
      %v1728 = vadd.f32 0.0, %v1727
      %v1729 = vpop.f32.mrb[0].mxu0
      %1730 = vmatprep.mubr.f32.mxu0 0.0
      %1731 = vmatmul.mubr.f32.gmra.mrb[0].mxu0 %v1258
      %v1732 = vpop.f32.mrb[0].mxu0
      %v1733 = vadd.f32 0.0, %v1732
      %v1734 = vpop.f32.mrb[0].mxu0
      %1735 = vmatprep.mubr.f32.mxu0 0.0
      %1736 = vmatmul.mubr.f32.gmra.mrb[0].mxu0 %v1261
      %v1737 = vpop.f32.mrb[0].mxu0
      %v1738 = vadd.f32 0.0, %v1737
      %v1739 = vpop.f32.mrb[0].mxu0
      %1740 = vmatprep.mubr.f32.mxu0 0.0
      %1741 = vmatmul.mubr.f32.gmra.mrb[0].mxu0 %v1264
      %v1742 = vpop.f32.mrb[0].mxu0
      %v1743 = vadd.f32 0.0, %v1742
      %v1744 = vpop.f32.mrb[0].mxu0
      %1745 = vmatprep.mubr.f32.mxu0 0.0
      %1746 = vmatmul.mubr.f32.gmra.mrb[0].mxu0 %v1526
      %v1747 = vpop.f32.mrb[0].mxu0
      %v1748 = vadd.f32 0.0, %v1747
      %v1749 = vpop.f32.mrb[0].mxu0
      %1750 = vmatprep.mubr.f32.mxu0 0.0
      %1751 = vmatmul.mubr.f32.gmra.mrb[0].mxu0 %v1529
      %v1752 = vpop.f32.mrb[0].mxu0
      %v1753 = vadd.f32 0.0, %v1752
      %v1754 = vpop.f32.mrb[0].mxu0
      %1755 = vdwg.mxu0
      %v1756 = vadd.f32 %v1491, %v1598
      %v1757 = vadd.f32 %v1492, %v1603
      %v1758 = vadd.f32 %v1493, %v1608
      %v1759 = vadd.f32 %v1494, %v1613
      %v1760 = vadd.f32 %v1495, %v1618
      %v1761 = vadd.f32 %v1496, %v1623
      %v1762 = vadd.f32 %v1497, %v1628
      %v1763 = vadd.f32 %v1498, %v1633
      %v1764 = vadd.f32 %v1499, %v1638
      %v1765 = vadd.f32 %v1500, %v1643
      %v1766 = vadd.f32 %v1501, %v1648
      %v1767 = vadd.f32 %v1502, %v1653
      %v1768 = vadd.f32 %v1503, %v1658
      %v1769 = vadd.f32 %v1504, %v1663
      %v1770 = vadd.f32 %v1505, %v1668
      %v1771 = vadd.f32 %v1506, %v1673
      %v1772 = vadd.f32 %v1507, %v1678
      %v1773 = vadd.f32 %v1508, %v1683
      %v1774 = vadd.f32 %v1509, %v1688
      %v1775 = vadd.f32 %v1510, %v1693
      %v1776 = vadd.f32 %v1511, %v1698
      %v1777 = vadd.f32 %v1512, %v1703
      %v1778 = vadd.f32 %v1513, %v1708
      %v1779 = vadd.f32 %v1514, %v1713
      %v1780 = vadd.f32 %v1515, %v1718
      %v1781 = vadd.f32 %v1516, %v1723
      %v1782 = vadd.f32 %v1517, %v1728
      %v1783 = vadd.f32 %v1518, %v1733
      %v1784 = vadd.f32 %v1519, %v1738
      %v1785 = vadd.f32 %v1520, %v1743
      %v1786 = vadd.f32 %v1521, %v1748
      %v1787 = vadd.f32 %v1522, %v1753
      %s1788 = scalar_lea.vmem %s1, 56
      %v1789 = vld [vmem:[%s1788] sm:$0xff]
      %v1791 = vsel %vm314, %v1166, 0
      %v1794 = vsel %vm314, %v1167, 0
      %1796 = vmatprep.subr.mxu0 0.0
      %1797 = vmatpush1.msra.mxu0 %v1789
      %1798 = vmatprep.subr.mxu0 0.0
      %1799 = vmatpush1.msra.mxu0 0.0
      %1800 = vmatprep.subr.mxu0 0.0
      %1801 = vmatpush1.msra.mxu0 0.0
      %1802 = vmatprep.subr.mxu0 0.0
      %1803 = vmatpush1.msra.mxu0 0.0
      %1804 = vmatprep.subr.mxu0 0.0
      %1805 = vmatpush1.msra.mxu0 0.0
      %1806 = vmatprep.subr.mxu0 0.0
      %1807 = vmatpush1.msra.mxu0 0.0
      %1808 = vmatprep.subr.mxu0 0.0
      %1809 = vmatpush1.msra.mxu0 0.0
      %1810 = vmatprep.subr.mxu0 0.0
      %1811 = vmatpush1.msra.mxu0 0.0
      %1812 = vmatprep.subr.mxu0 0.0
      %1813 = vmatpush1.msra.mxu0 0.0
      %1814 = vmatprep.subr.mxu0 0.0
      %1815 = vmatpush1.msra.mxu0 0.0
      %1816 = vmatprep.subr.mxu0 0.0
      %1817 = vmatpush1.msra.mxu0 0.0
      %1818 = vmatprep.subr.mxu0 0.0
      %1819 = vmatpush1.msra.mxu0 0.0
      %1820 = vmatprep.subr.mxu0 0.0
      %1821 = vmatpush1.msra.mxu0 0.0
      %1822 = vmatprep.subr.mxu0 0.0
      %1823 = vmatpush1.msra.mxu0 0.0
      %1824 = vmatprep.subr.mxu0 0.0
      %1825 = vmatpush1.msra.mxu0 0.0
      %1826 = vmatprep.subr.mxu0 0.0
      %1827 = vmatpush1.msra.mxu0 0.0
      %1828 = vmatprep.subr.mxu0 0.0
      %1829 = vmatpush1.msra.mxu0 0.0
      %1830 = vmatprep.subr.mxu0 0.0
      %1831 = vmatpush1.msra.mxu0 0.0
      %1832 = vmatprep.subr.mxu0 0.0
      %1833 = vmatpush1.msra.mxu0 0.0
      %1834 = vmatprep.subr.mxu0 0.0
      %1835 = vmatpush1.msra.mxu0 0.0
      %1836 = vmatprep.subr.mxu0 0.0
      %1837 = vmatpush1.msra.mxu0 0.0
      %1838 = vmatprep.subr.mxu0 0.0
      %1839 = vmatpush1.msra.mxu0 0.0
      %1840 = vmatprep.subr.mxu0 0.0
      %1841 = vmatpush1.msra.mxu0 0.0
      %1842 = vmatprep.subr.mxu0 0.0
      %1843 = vmatpush1.msra.mxu0 0.0
      %1844 = vmatprep.subr.mxu0 0.0
      %1845 = vmatpush1.msra.mxu0 0.0
      %1846 = vmatprep.subr.mxu0 0.0
      %1847 = vmatpush1.msra.mxu0 0.0
      %1848 = vmatprep.subr.mxu0 0.0
      %1849 = vmatpush1.msra.mxu0 0.0
      %1850 = vmatprep.subr.mxu0 0.0
      %1851 = vmatpush1.msra.mxu0 0.0
      %1852 = vmatprep.subr.mxu0 0.0
      %1853 = vmatpush1.msra.mxu0 0.0
      %1854 = vmatprep.subr.mxu0 0.0
      %1855 = vmatpush1.msra.mxu0 0.0
      %1856 = vmatprep.subr.mxu0 0.0
      %1857 = vmatpush1.msra.mxu0 0.0
      %1858 = vmatprep.subr.mxu0 0.0
      %1859 = vmatpush1.msra.mxu0 0.0
      %1860 = vmatprep.mubr.f32.mxu0 0.0
      %1861 = vmatmul.mubr.f32.gmra.mrb[0].mxu0 %v1183
      %v1862 = vpop.f32.mrb[0].mxu0
      %v1863 = vadd.f32 0.0, %v1862
      %v1864 = vpop.f32.mrb[0].mxu0
      %1865 = vmatprep.mubr.f32.mxu0 0.0
      %1866 = vmatmul.mubr.f32.gmra.mrb[0].mxu0 %v1186
      %v1867 = vpop.f32.mrb[0].mxu0
      %v1868 = vadd.f32 0.0, %v1867
      %v1869 = vpop.f32.mrb[0].mxu0
      %1870 = vmatprep.mubr.f32.mxu0 0.0
      %1871 = vmatmul.mubr.f32.gmra.mrb[0].mxu0 %v1189
      %v1872 = vpop.f32.mrb[0].mxu0
      %v1873 = vadd.f32 0.0, %v1872
      %v1874 = vpop.f32.mrb[0].mxu0
      %1875 = vmatprep.mubr.f32.mxu0 0.0
      %1876 = vmatmul.mubr.f32.gmra.mrb[0].mxu0 %v1192
      %v1877 = vpop.f32.mrb[0].mxu0
      %v1878 = vadd.f32 0.0, %v1877
      %v1879 = vpop.f32.mrb[0].mxu0
      %1880 = vmatprep.mubr.f32.mxu0 0.0
      %1881 = vmatmul.mubr.f32.gmra.mrb[0].mxu0 %v1195
      %v1882 = vpop.f32.mrb[0].mxu0
      %v1883 = vadd.f32 0.0, %v1882
      %v1884 = vpop.f32.mrb[0].mxu0
      %1885 = vmatprep.mubr.f32.mxu0 0.0
      %1886 = vmatmul.mubr.f32.gmra.mrb[0].mxu0 %v1198
      %v1887 = vpop.f32.mrb[0].mxu0
      %v1888 = vadd.f32 0.0, %v1887
      %v1889 = vpop.f32.mrb[0].mxu0
      %1890 = vmatprep.mubr.f32.mxu0 0.0
      %1891 = vmatmul.mubr.f32.gmra.mrb[0].mxu0 %v1201
      %v1892 = vpop.f32.mrb[0].mxu0
      %v1893 = vadd.f32 0.0, %v1892
      %v1894 = vpop.f32.mrb[0].mxu0
      %1895 = vmatprep.mubr.f32.mxu0 0.0
      %1896 = vmatmul.mubr.f32.gmra.mrb[0].mxu0 %v1204
      %v1897 = vpop.f32.mrb[0].mxu0
      %v1898 = vadd.f32 0.0, %v1897
      %v1899 = vpop.f32.mrb[0].mxu0
      %1900 = vmatprep.mubr.f32.mxu0 0.0
      %1901 = vmatmul.mubr.f32.gmra.mrb[0].mxu0 %v1207
      %v1902 = vpop.f32.mrb[0].mxu0
      %v1903 = vadd.f32 0.0, %v1902
      %v1904 = vpop.f32.mrb[0].mxu0
      %1905 = vmatprep.mubr.f32.mxu0 0.0
      %1906 = vmatmul.mubr.f32.gmra.mrb[0].mxu0 %v1210
      %v1907 = vpop.f32.mrb[0].mxu0
      %v1908 = vadd.f32 0.0, %v1907
      %v1909 = vpop.f32.mrb[0].mxu0
      %1910 = vmatprep.mubr.f32.mxu0 0.0
      %1911 = vmatmul.mubr.f32.gmra.mrb[0].mxu0 %v1213
      %v1912 = vpop.f32.mrb[0].mxu0
      %v1913 = vadd.f32 0.0, %v1912
      %v1914 = vpop.f32.mrb[0].mxu0
      %1915 = vmatprep.mubr.f32.mxu0 0.0
      %1916 = vmatmul.mubr.f32.gmra.mrb[0].mxu0 %v1216
      %v1917 = vpop.f32.mrb[0].mxu0
      %v1918 = vadd.f32 0.0, %v1917
      %v1919 = vpop.f32.mrb[0].mxu0
      %1920 = vmatprep.mubr.f32.mxu0 0.0
      %1921 = vmatmul.mubr.f32.gmra.mrb[0].mxu0 %v1219
      %v1922 = vpop.f32.mrb[0].mxu0
      %v1923 = vadd.f32 0.0, %v1922
      %v1924 = vpop.f32.mrb[0].mxu0
      %1925 = vmatprep.mubr.f32.mxu0 0.0
      %1926 = vmatmul.mubr.f32.gmra.mrb[0].mxu0 %v1222
      %v1927 = vpop.f32.mrb[0].mxu0
      %v1928 = vadd.f32 0.0, %v1927
      %v1929 = vpop.f32.mrb[0].mxu0
      %1930 = vmatprep.mubr.f32.mxu0 0.0
      %1931 = vmatmul.mubr.f32.gmra.mrb[0].mxu0 %v1225
      %v1932 = vpop.f32.mrb[0].mxu0
      %v1933 = vadd.f32 0.0, %v1932
      %v1934 = vpop.f32.mrb[0].mxu0
      %1935 = vmatprep.mubr.f32.mxu0 0.0
      %1936 = vmatmul.mubr.f32.gmra.mrb[0].mxu0 %v1228
      %v1937 = vpop.f32.mrb[0].mxu0
      %v1938 = vadd.f32 0.0, %v1937
      %v1939 = vpop.f32.mrb[0].mxu0
      %1940 = vmatprep.mubr.f32.mxu0 0.0
      %1941 = vmatmul.mubr.f32.gmra.mrb[0].mxu0 %v1231
      %v1942 = vpop.f32.mrb[0].mxu0
      %v1943 = vadd.f32 0.0, %v1942
      %v1944 = vpop.f32.mrb[0].mxu0
      %1945 = vmatprep.mubr.f32.mxu0 0.0
      %1946 = vmatmul.mubr.f32.gmra.mrb[0].mxu0 %v1234
      %v1947 = vpop.f32.mrb[0].mxu0
      %v1948 = vadd.f32 0.0, %v1947
      %v1949 = vpop.f32.mrb[0].mxu0
      %1950 = vmatprep.mubr.f32.mxu0 0.0
      %1951 = vmatmul.mubr.f32.gmra.mrb[0].mxu0 %v1237
      %v1952 = vpop.f32.mrb[0].mxu0
      %v1953 = vadd.f32 0.0, %v1952
      %v1954 = vpop.f32.mrb[0].mxu0
      %1955 = vmatprep.mubr.f32.mxu0 0.0
      %1956 = vmatmul.mubr.f32.gmra.mrb[0].mxu0 %v1240
      %v1957 = vpop.f32.mrb[0].mxu0
      %v1958 = vadd.f32 0.0, %v1957
      %v1959 = vpop.f32.mrb[0].mxu0
      %1960 = vmatprep.mubr.f32.mxu0 0.0
      %1961 = vmatmul.mubr.f32.gmra.mrb[0].mxu0 %v1243
      %v1962 = vpop.f32.mrb[0].mxu0
      %v1963 = vadd.f32 0.0, %v1962
      %v1964 = vpop.f32.mrb[0].mxu0
      %1965 = vmatprep.mubr.f32.mxu0 0.0
      %1966 = vmatmul.mubr.f32.gmra.mrb[0].mxu0 %v1246
      %v1967 = vpop.f32.mrb[0].mxu0
      %v1968 = vadd.f32 0.0, %v1967
      %v1969 = vpop.f32.mrb[0].mxu0
      %1970 = vmatprep.mubr.f32.mxu0 0.0
      %1971 = vmatmul.mubr.f32.gmra.mrb[0].mxu0 %v1249
      %v1972 = vpop.f32.mrb[0].mxu0
      %v1973 = vadd.f32 0.0, %v1972
      %v1974 = vpop.f32.mrb[0].mxu0
      %1975 = vmatprep.mubr.f32.mxu0 0.0
      %1976 = vmatmul.mubr.f32.gmra.mrb[0].mxu0 %v1252
      %v1977 = vpop.f32.mrb[0].mxu0
      %v1978 = vadd.f32 0.0, %v1977
      %v1979 = vpop.f32.mrb[0].mxu0
      %1980 = vmatprep.mubr.f32.mxu0 0.0
      %1981 = vmatmul.mubr.f32.gmra.mrb[0].mxu0 %v1255
      %v1982 = vpop.f32.mrb[0].mxu0
      %v1983 = vadd.f32 0.0, %v1982
      %v1984 = vpop.f32.mrb[0].mxu0
      %1985 = vmatprep.mubr.f32.mxu0 0.0
      %1986 = vmatmul.mubr.f32.gmra.mrb[0].mxu0 %v1258
      %v1987 = vpop.f32.mrb[0].mxu0
      %v1988 = vadd.f32 0.0, %v1987
      %v1989 = vpop.f32.mrb[0].mxu0
      %1990 = vmatprep.mubr.f32.mxu0 0.0
      %1991 = vmatmul.mubr.f32.gmra.mrb[0].mxu0 %v1261
      %v1992 = vpop.f32.mrb[0].mxu0
      %v1993 = vadd.f32 0.0, %v1992
      %v1994 = vpop.f32.mrb[0].mxu0
      %1995 = vmatprep.mubr.f32.mxu0 0.0
      %1996 = vmatmul.mubr.f32.gmra.mrb[0].mxu0 %v1264
      %v1997 = vpop.f32.mrb[0].mxu0
      %v1998 = vadd.f32 0.0, %v1997
      %v1999 = vpop.f32.mrb[0].mxu0
      %2000 = vmatprep.mubr.f32.mxu0 0.0
      %2001 = vmatmul.mubr.f32.gmra.mrb[0].mxu0 %v1526
      %v2002 = vpop.f32.mrb[0].mxu0
      %v2003 = vadd.f32 0.0, %v2002
      %v2004 = vpop.f32.mrb[0].mxu0
      %2005 = vmatprep.mubr.f32.mxu0 0.0
      %2006 = vmatmul.mubr.f32.gmra.mrb[0].mxu0 %v1529
      %v2007 = vpop.f32.mrb[0].mxu0
      %v2008 = vadd.f32 0.0, %v2007
      %v2009 = vpop.f32.mrb[0].mxu0
      %2010 = vmatprep.mubr.f32.mxu0 0.0
      %2011 = vmatmul.mubr.f32.gmra.mrb[0].mxu0 %v1791
      %v2012 = vpop.f32.mrb[0].mxu0
      %v2013 = vadd.f32 0.0, %v2012
      %v2014 = vpop.f32.mrb[0].mxu0
      %2015 = vmatprep.mubr.f32.mxu0 0.0
      %2016 = vmatmul.mubr.f32.gmra.mrb[0].mxu0 %v1794
      %v2017 = vpop.f32.mrb[0].mxu0
      %v2018 = vadd.f32 0.0, %v2017
      %v2019 = vpop.f32.mrb[0].mxu0
      %2020 = vdwg.mxu0
      %v2021 = vadd.f32 %v1756, %v1863
      %v2022 = vadd.f32 %v1757, %v1868
      %v2023 = vadd.f32 %v1758, %v1873
      %v2024 = vadd.f32 %v1759, %v1878
      %v2025 = vadd.f32 %v1760, %v1883
      %v2026 = vadd.f32 %v1761, %v1888
      %v2027 = vadd.f32 %v1762, %v1893
      %v2028 = vadd.f32 %v1763, %v1898
      %v2029 = vadd.f32 %v1764, %v1903
      %v2030 = vadd.f32 %v1765, %v1908
      %v2031 = vadd.f32 %v1766, %v1913
      %v2032 = vadd.f32 %v1767, %v1918
      %v2033 = vadd.f32 %v1768, %v1923
      %v2034 = vadd.f32 %v1769, %v1928
      %v2035 = vadd.f32 %v1770, %v1933
      %v2036 = vadd.f32 %v1771, %v1938
      %v2037 = vadd.f32 %v1772, %v1943
      %v2038 = vadd.f32 %v1773, %v1948
      %v2039 = vadd.f32 %v1774, %v1953
      %v2040 = vadd.f32 %v1775, %v1958
      %v2041 = vadd.f32 %v1776, %v1963
      %v2042 = vadd.f32 %v1777, %v1968
      %v2043 = vadd.f32 %v1778, %v1973
      %v2044 = vadd.f32 %v1779, %v1978
      %v2045 = vadd.f32 %v1780, %v1983
      %v2046 = vadd.f32 %v1781, %v1988
      %v2047 = vadd.f32 %v1782, %v1993
      %v2048 = vadd.f32 %v1783, %v1998
      %v2049 = vadd.f32 %v1784, %v2003
      %v2050 = vadd.f32 %v1785, %v2008
      %v2051 = vadd.f32 %v1786, %v2013
      %v2052 = vadd.f32 %v1787, %v2018
      %v2053 = vld [vmem:[%s219 + $0x2] sm:$0xff]
      %v2054 = vld [vmem:[%s219 + $0xa] sm:$0xff]
      %v2055 = vld [vmem:[%s219 + $0x1a] sm:$0xff]
      %v2056 = vld [vmem:[%s219 + $0x22] sm:$0xff]
      %v2057 = vld [vmem:[%s219 + $0x32] sm:$0xff]
      %v2058 = vld [vmem:[%s219 + $0x3a] sm:$0xff]
      %v2059 = vld [vmem:[%s219 + $0x4a] sm:$0xff]
      %v2060 = vld [vmem:[%s219 + $0x52] sm:$0xff]
      %v2061 = vld [vmem:[%s219 + $0x62] sm:$0xff]
      %v2062 = vld [vmem:[%s219 + $0x6a] sm:$0xff]
      %v2063 = vld [vmem:[%s219 + $0x7a] sm:$0xff]
      %v2064 = vld [vmem:[%s219 + $0x82] sm:$0xff]
      %v2065 = vld [vmem:[%s219 + $0x92] sm:$0xff]
      %v2066 = vld [vmem:[%s219 + $0x9a] sm:$0xff]
      %v2067 = vld [vmem:[%s219 + $0xaa] sm:$0xff]
      %v2068 = vld [vmem:[%s219 + $0xb2] sm:$0xff]
      %v2069 = vld [vmem:[%s219 + $0xc2] sm:$0xff]
      %v2070 = vld [vmem:[%s219 + $0xca] sm:$0xff]
      %v2071 = vld [vmem:[%s219 + $0xda] sm:$0xff]
      %v2072 = vld [vmem:[%s219 + $0xe2] sm:$0xff]
      %v2073 = vld [vmem:[%s219 + $0xf2] sm:$0xff]
      %v2074 = vld [vmem:[%s219 + $0xfa] sm:$0xff]
      %v2075 = vld [vmem:[%s219 + $0x10a] sm:$0xff]
      %v2076 = vld [vmem:[%s219 + $0x112] sm:$0xff]
      %v2077 = vld [vmem:[%s219 + $0x122] sm:$0xff]
      %v2078 = vld [vmem:[%s219 + $0x12a] sm:$0xff]
      %v2079 = vld [vmem:[%s219 + $0x13a] sm:$0xff]
      %v2080 = vld [vmem:[%s219 + $0x142] sm:$0xff]
      %v2081 = vld [vmem:[%s219 + $0x152] sm:$0xff]
      %v2082 = vld [vmem:[%s219 + $0x15a] sm:$0xff]
      %v2083 = vld [vmem:[%s219 + $0x16a] sm:$0xff]
      %v2084 = vld [vmem:[%s219 + $0x172] sm:$0xff]
      %v2085 = vld [vmem:[%s219 + $0x182] sm:$0xff]
      %v2086 = vld [vmem:[%s219 + $0x18a] sm:$0xff]
      %v2087 = vld [vmem:[%s219 + $0x19a] sm:$0xff]
      %v2088 = vld [vmem:[%s219 + $0x1a2] sm:$0xff]
      %s2089 = scalar_lea.vmem %s1, 16
      %v2090 = vld [vmem:[%s2089] sm:$0xff]
      %v2092 = vsel %vm314, %v2053, 0
      %v2095 = vsel %vm314, %v2054, 0
      %v2098 = vsel %vm314, %v2055, 0
      %v2101 = vsel %vm314, %v2056, 0
      %v2104 = vsel %vm314, %v2057, 0
      %v2107 = vsel %vm314, %v2058, 0
      %v2110 = vsel %vm314, %v2059, 0
      %v2113 = vsel %vm314, %v2060, 0
      %v2116 = vsel %vm314, %v2061, 0
      %v2119 = vsel %vm314, %v2062, 0
      %v2122 = vsel %vm314, %v2063, 0
      %v2125 = vsel %vm314, %v2064, 0
      %v2128 = vsel %vm314, %v2065, 0
      %v2131 = vsel %vm314, %v2066, 0
      %v2134 = vsel %vm314, %v2067, 0
      %v2137 = vsel %vm314, %v2068, 0
      %v2140 = vsel %vm314, %v2069, 0
      %v2143 = vsel %vm314, %v2070, 0
      %v2146 = vsel %vm314, %v2071, 0
      %v2149 = vsel %vm314, %v2072, 0
      %v2152 = vsel %vm314, %v2073, 0
      %v2155 = vsel %vm314, %v2074, 0
      %v2158 = vsel %vm314, %v2075, 0
      %v2161 = vsel %vm314, %v2076, 0
      %v2164 = vsel %vm314, %v2077, 0
      %v2167 = vsel %vm314, %v2078, 0
      %v2170 = vsel %vm314, %v2079, 0
      %v2173 = vsel %vm314, %v2080, 0
      %v2176 = vsel %vm314, %v2081, 0
      %v2179 = vsel %vm314, %v2082, 0
      %v2182 = vsel %vm314, %v2083, 0
      %v2185 = vsel %vm314, %v2084, 0
      %2187 = vmatprep.subr.mxu0 0.0
      %2188 = vmatpush1.msra.mxu0 %v2090
      %2189 = vmatprep.subr.mxu0 0.0
      %2190 = vmatpush1.msra.mxu0 0.0
      %2191 = vmatprep.subr.mxu0 0.0
      %2192 = vmatpush1.msra.mxu0 0.0
      %2193 = vmatprep.subr.mxu0 0.0
      %2194 = vmatpush1.msra.mxu0 0.0
      %2195 = vmatprep.subr.mxu0 0.0
      %2196 = vmatpush1.msra.mxu0 0.0
      %2197 = vmatprep.subr.mxu0 0.0
      %2198 = vmatpush1.msra.mxu0 0.0
      %2199 = vmatprep.subr.mxu0 0.0
      %2200 = vmatpush1.msra.mxu0 0.0
      %2201 = vmatprep.subr.mxu0 0.0
      %2202 = vmatpush1.msra.mxu0 0.0
      %2203 = vmatprep.subr.mxu0 0.0
      %2204 = vmatpush1.msra.mxu0 0.0
      %2205 = vmatprep.subr.mxu0 0.0
      %2206 = vmatpush1.msra.mxu0 0.0
      %2207 = vmatprep.subr.mxu0 0.0
      %2208 = vmatpush1.msra.mxu0 0.0
      %2209 = vmatprep.subr.mxu0 0.0
      %2210 = vmatpush1.msra.mxu0 0.0
      %2211 = vmatprep.subr.mxu0 0.0
      %2212 = vmatpush1.msra.mxu0 0.0
      %2213 = vmatprep.subr.mxu0 0.0
      %2214 = vmatpush1.msra.mxu0 0.0
      %2215 = vmatprep.subr.mxu0 0.0
      %2216 = vmatpush1.msra.mxu0 0.0
      %2217 = vmatprep.subr.mxu0 0.0
      %2218 = vmatpush1.msra.mxu0 0.0
      %2219 = vmatprep.subr.mxu0 0.0
      %2220 = vmatpush1.msra.mxu0 0.0
      %2221 = vmatprep.subr.mxu0 0.0
      %2222 = vmatpush1.msra.mxu0 0.0
      %2223 = vmatprep.subr.mxu0 0.0
      %2224 = vmatpush1.msra.mxu0 0.0
      %2225 = vmatprep.subr.mxu0 0.0
      %2226 = vmatpush1.msra.mxu0 0.0
      %2227 = vmatprep.subr.mxu0 0.0
      %2228 = vmatpush1.msra.mxu0 0.0
      %2229 = vmatprep.subr.mxu0 0.0
      %2230 = vmatpush1.msra.mxu0 0.0
      %2231 = vmatprep.subr.mxu0 0.0
      %2232 = vmatpush1.msra.mxu0 0.0
      %2233 = vmatprep.subr.mxu0 0.0
      %2234 = vmatpush1.msra.mxu0 0.0
      %2235 = vmatprep.subr.mxu0 0.0
      %2236 = vmatpush1.msra.mxu0 0.0
      %2237 = vmatprep.subr.mxu0 0.0
      %2238 = vmatpush1.msra.mxu0 0.0
      %2239 = vmatprep.subr.mxu0 0.0
      %2240 = vmatpush1.msra.mxu0 0.0
      %2241 = vmatprep.subr.mxu0 0.0
      %2242 = vmatpush1.msra.mxu0 0.0
      %2243 = vmatprep.subr.mxu0 0.0
      %2244 = vmatpush1.msra.mxu0 0.0
      %2245 = vmatprep.subr.mxu0 0.0
      %2246 = vmatpush1.msra.mxu0 0.0
      %2247 = vmatprep.subr.mxu0 0.0
      %2248 = vmatpush1.msra.mxu0 0.0
      %2249 = vmatprep.subr.mxu0 0.0
      %2250 = vmatpush1.msra.mxu0 0.0
      %2251 = vmatprep.mubr.f32.mxu0 0.0
      %2252 = vmatmul.mubr.f32.gmra.mrb[0].mxu0 %v2092
      %v2253 = vpop.f32.mrb[0].mxu0
      %v2254 = vadd.f32 0.0, %v2253
      %v2255 = vpop.f32.mrb[0].mxu0
      %2256 = vmatprep.mubr.f32.mxu0 0.0
      %2257 = vmatmul.mubr.f32.gmra.mrb[0].mxu0 %v2095
      %v2258 = vpop.f32.mrb[0].mxu0
      %v2259 = vadd.f32 0.0, %v2258
      %v2260 = vpop.f32.mrb[0].mxu0
      %2261 = vmatprep.mubr.f32.mxu0 0.0
      %2262 = vmatmul.mubr.f32.gmra.mrb[0].mxu0 %v2098
      %v2263 = vpop.f32.mrb[0].mxu0
      %v2264 = vadd.f32 0.0, %v2263
      %v2265 = vpop.f32.mrb[0].mxu0
      %2266 = vmatprep.mubr.f32.mxu0 0.0
      %2267 = vmatmul.mubr.f32.gmra.mrb[0].mxu0 %v2101
      %v2268 = vpop.f32.mrb[0].mxu0
      %v2269 = vadd.f32 0.0, %v2268
      %v2270 = vpop.f32.mrb[0].mxu0
      %2271 = vmatprep.mubr.f32.mxu0 0.0
      %2272 = vmatmul.mubr.f32.gmra.mrb[0].mxu0 %v2104
      %v2273 = vpop.f32.mrb[0].mxu0
      %v2274 = vadd.f32 0.0, %v2273
      %v2275 = vpop.f32.mrb[0].mxu0
      %2276 = vmatprep.mubr.f32.mxu0 0.0
      %2277 = vmatmul.mubr.f32.gmra.mrb[0].mxu0 %v2107
      %v2278 = vpop.f32.mrb[0].mxu0
      %v2279 = vadd.f32 0.0, %v2278
      %v2280 = vpop.f32.mrb[0].mxu0
      %2281 = vmatprep.mubr.f32.mxu0 0.0
      %2282 = vmatmul.mubr.f32.gmra.mrb[0].mxu0 %v2110
      %v2283 = vpop.f32.mrb[0].mxu0
      %v2284 = vadd.f32 0.0, %v2283
      %v2285 = vpop.f32.mrb[0].mxu0
      %2286 = vmatprep.mubr.f32.mxu0 0.0
      %2287 = vmatmul.mubr.f32.gmra.mrb[0].mxu0 %v2113
      %v2288 = vpop.f32.mrb[0].mxu0
      %v2289 = vadd.f32 0.0, %v2288
      %v2290 = vpop.f32.mrb[0].mxu0
      %2291 = vmatprep.mubr.f32.mxu0 0.0
      %2292 = vmatmul.mubr.f32.gmra.mrb[0].mxu0 %v2116
      %v2293 = vpop.f32.mrb[0].mxu0
      %v2294 = vadd.f32 0.0, %v2293
      %v2295 = vpop.f32.mrb[0].mxu0
      %2296 = vmatprep.mubr.f32.mxu0 0.0
      %2297 = vmatmul.mubr.f32.gmra.mrb[0].mxu0 %v2119
      %v2298 = vpop.f32.mrb[0].mxu0
      %v2299 = vadd.f32 0.0, %v2298
      %v2300 = vpop.f32.mrb[0].mxu0
      %2301 = vmatprep.mubr.f32.mxu0 0.0
      %2302 = vmatmul.mubr.f32.gmra.mrb[0].mxu0 %v2122
      %v2303 = vpop.f32.mrb[0].mxu0
      %v2304 = vadd.f32 0.0, %v2303
      %v2305 = vpop.f32.mrb[0].mxu0
      %2306 = vmatprep.mubr.f32.mxu0 0.0
      %2307 = vmatmul.mubr.f32.gmra.mrb[0].mxu0 %v2125
      %v2308 = vpop.f32.mrb[0].mxu0
      %v2309 = vadd.f32 0.0, %v2308
      %v2310 = vpop.f32.mrb[0].mxu0
      %2311 = vmatprep.mubr.f32.mxu0 0.0
      %2312 = vmatmul.mubr.f32.gmra.mrb[0].mxu0 %v2128
      %v2313 = vpop.f32.mrb[0].mxu0
      %v2314 = vadd.f32 0.0, %v2313
      %v2315 = vpop.f32.mrb[0].mxu0
      %2316 = vmatprep.mubr.f32.mxu0 0.0
      %2317 = vmatmul.mubr.f32.gmra.mrb[0].mxu0 %v2131
      %v2318 = vpop.f32.mrb[0].mxu0
      %v2319 = vadd.f32 0.0, %v2318
      %v2320 = vpop.f32.mrb[0].mxu0
      %2321 = vmatprep.mubr.f32.mxu0 0.0
      %2322 = vmatmul.mubr.f32.gmra.mrb[0].mxu0 %v2134
      %v2323 = vpop.f32.mrb[0].mxu0
      %v2324 = vadd.f32 0.0, %v2323
      %v2325 = vpop.f32.mrb[0].mxu0
      %2326 = vmatprep.mubr.f32.mxu0 0.0
      %2327 = vmatmul.mubr.f32.gmra.mrb[0].mxu0 %v2137
      %v2328 = vpop.f32.mrb[0].mxu0
      %v2329 = vadd.f32 0.0, %v2328
      %v2330 = vpop.f32.mrb[0].mxu0
      %2331 = vmatprep.mubr.f32.mxu0 0.0
      %2332 = vmatmul.mubr.f32.gmra.mrb[0].mxu0 %v2140
      %v2333 = vpop.f32.mrb[0].mxu0
      %v2334 = vadd.f32 0.0, %v2333
      %v2335 = vpop.f32.mrb[0].mxu0
      %2336 = vmatprep.mubr.f32.mxu0 0.0
      %2337 = vmatmul.mubr.f32.gmra.mrb[0].mxu0 %v2143
      %v2338 = vpop.f32.mrb[0].mxu0
      %v2339 = vadd.f32 0.0, %v2338
      %v2340 = vpop.f32.mrb[0].mxu0
      %2341 = vmatprep.mubr.f32.mxu0 0.0
      %2342 = vmatmul.mubr.f32.gmra.mrb[0].mxu0 %v2146
      %v2343 = vpop.f32.mrb[0].mxu0
      %v2344 = vadd.f32 0.0, %v2343
      %v2345 = vpop.f32.mrb[0].mxu0
      %2346 = vmatprep.mubr.f32.mxu0 0.0
      %2347 = vmatmul.mubr.f32.gmra.mrb[0].mxu0 %v2149
      %v2348 = vpop.f32.mrb[0].mxu0
      %v2349 = vadd.f32 0.0, %v2348
      %v2350 = vpop.f32.mrb[0].mxu0
      %2351 = vmatprep.mubr.f32.mxu0 0.0
      %2352 = vmatmul.mubr.f32.gmra.mrb[0].mxu0 %v2152
      %v2353 = vpop.f32.mrb[0].mxu0
      %v2354 = vadd.f32 0.0, %v2353
      %v2355 = vpop.f32.mrb[0].mxu0
      %2356 = vmatprep.mubr.f32.mxu0 0.0
      %2357 = vmatmul.mubr.f32.gmra.mrb[0].mxu0 %v2155
      %v2358 = vpop.f32.mrb[0].mxu0
      %v2359 = vadd.f32 0.0, %v2358
      %v2360 = vpop.f32.mrb[0].mxu0
      %2361 = vmatprep.mubr.f32.mxu0 0.0
      %2362 = vmatmul.mubr.f32.gmra.mrb[0].mxu0 %v2158
      %v2363 = vpop.f32.mrb[0].mxu0
      %v2364 = vadd.f32 0.0, %v2363
      %v2365 = vpop.f32.mrb[0].mxu0
      %2366 = vmatprep.mubr.f32.mxu0 0.0
      %2367 = vmatmul.mubr.f32.gmra.mrb[0].mxu0 %v2161
      %v2368 = vpop.f32.mrb[0].mxu0
      %v2369 = vadd.f32 0.0, %v2368
      %v2370 = vpop.f32.mrb[0].mxu0
      %2371 = vmatprep.mubr.f32.mxu0 0.0
      %2372 = vmatmul.mubr.f32.gmra.mrb[0].mxu0 %v2164
      %v2373 = vpop.f32.mrb[0].mxu0
      %v2374 = vadd.f32 0.0, %v2373
      %v2375 = vpop.f32.mrb[0].mxu0
      %2376 = vmatprep.mubr.f32.mxu0 0.0
      %2377 = vmatmul.mubr.f32.gmra.mrb[0].mxu0 %v2167
      %v2378 = vpop.f32.mrb[0].mxu0
      %v2379 = vadd.f32 0.0, %v2378
      %v2380 = vpop.f32.mrb[0].mxu0
      %2381 = vmatprep.mubr.f32.mxu0 0.0
      %2382 = vmatmul.mubr.f32.gmra.mrb[0].mxu0 %v2170
      %v2383 = vpop.f32.mrb[0].mxu0
      %v2384 = vadd.f32 0.0, %v2383
      %v2385 = vpop.f32.mrb[0].mxu0
      %2386 = vmatprep.mubr.f32.mxu0 0.0
      %2387 = vmatmul.mubr.f32.gmra.mrb[0].mxu0 %v2173
      %v2388 = vpop.f32.mrb[0].mxu0
      %v2389 = vadd.f32 0.0, %v2388
      %v2390 = vpop.f32.mrb[0].mxu0
      %2391 = vmatprep.mubr.f32.mxu0 0.0
      %2392 = vmatmul.mubr.f32.gmra.mrb[0].mxu0 %v2176
      %v2393 = vpop.f32.mrb[0].mxu0
      %v2394 = vadd.f32 0.0, %v2393
      %v2395 = vpop.f32.mrb[0].mxu0
      %2396 = vmatprep.mubr.f32.mxu0 0.0
      %2397 = vmatmul.mubr.f32.gmra.mrb[0].mxu0 %v2179
      %v2398 = vpop.f32.mrb[0].mxu0
      %v2399 = vadd.f32 0.0, %v2398
      %v2400 = vpop.f32.mrb[0].mxu0
      %2401 = vmatprep.mubr.f32.mxu0 0.0
      %2402 = vmatmul.mubr.f32.gmra.mrb[0].mxu0 %v2182
      %v2403 = vpop.f32.mrb[0].mxu0
      %v2404 = vadd.f32 0.0, %v2403
      %v2405 = vpop.f32.mrb[0].mxu0
      %2406 = vmatprep.mubr.f32.mxu0 0.0
      %2407 = vmatmul.mubr.f32.gmra.mrb[0].mxu0 %v2185
      %v2408 = vpop.f32.mrb[0].mxu0
      %v2409 = vadd.f32 0.0, %v2408
      %v2410 = vpop.f32.mrb[0].mxu0
      %2411 = vdwg.mxu0
      %v2412 = vadd.f32 %v2021, %v2254
      %v2413 = vadd.f32 %v2022, %v2259
      %v2414 = vadd.f32 %v2023, %v2264
      %v2415 = vadd.f32 %v2024, %v2269
      %v2416 = vadd.f32 %v2025, %v2274
      %v2417 = vadd.f32 %v2026, %v2279
      %v2418 = vadd.f32 %v2027, %v2284
      %v2419 = vadd.f32 %v2028, %v2289
      %v2420 = vadd.f32 %v2029, %v2294
      %v2421 = vadd.f32 %v2030, %v2299
      %v2422 = vadd.f32 %v2031, %v2304
      %v2423 = vadd.f32 %v2032, %v2309
      %v2424 = vadd.f32 %v2033, %v2314
      %v2425 = vadd.f32 %v2034, %v2319
      %v2426 = vadd.f32 %v2035, %v2324
      %v2427 = vadd.f32 %v2036, %v2329
      %v2428 = vadd.f32 %v2037, %v2334
      %v2429 = vadd.f32 %v2038, %v2339
      %v2430 = vadd.f32 %v2039, %v2344
      %v2431 = vadd.f32 %v2040, %v2349
      %v2432 = vadd.f32 %v2041, %v2354
      %v2433 = vadd.f32 %v2042, %v2359
      %v2434 = vadd.f32 %v2043, %v2364
      %v2435 = vadd.f32 %v2044, %v2369
      %v2436 = vadd.f32 %v2045, %v2374
      %v2437 = vadd.f32 %v2046, %v2379
      %v2438 = vadd.f32 %v2047, %v2384
      %v2439 = vadd.f32 %v2048, %v2389
      %v2440 = vadd.f32 %v2049, %v2394
      %v2441 = vadd.f32 %v2050, %v2399
      %v2442 = vadd.f32 %v2051, %v2404
      %v2443 = vadd.f32 %v2052, %v2409
      %s2444 = scalar_lea.vmem %s1, 40
      %v2445 = vld [vmem:[%s2444] sm:$0xff]
      %v2447 = vsel %vm314, %v2085, 0
      %v2450 = vsel %vm314, %v2086, 0
      %2452 = vmatprep.subr.mxu0 0.0
      %2453 = vmatpush1.msra.mxu0 %v2445
      %2454 = vmatprep.subr.mxu0 0.0
      %2455 = vmatpush1.msra.mxu0 0.0
      %2456 = vmatprep.subr.mxu0 0.0
      %2457 = vmatpush1.msra.mxu0 0.0
      %2458 = vmatprep.subr.mxu0 0.0
      %2459 = vmatpush1.msra.mxu0 0.0
      %2460 = vmatprep.subr.mxu0 0.0
      %2461 = vmatpush1.msra.mxu0 0.0
      %2462 = vmatprep.subr.mxu0 0.0
      %2463 = vmatpush1.msra.mxu0 0.0
      %2464 = vmatprep.subr.mxu0 0.0
      %2465 = vmatpush1.msra.mxu0 0.0
      %2466 = vmatprep.subr.mxu0 0.0
      %2467 = vmatpush1.msra.mxu0 0.0
      %2468 = vmatprep.subr.mxu0 0.0
      %2469 = vmatpush1.msra.mxu0 0.0
      %2470 = vmatprep.subr.mxu0 0.0
      %2471 = vmatpush1.msra.mxu0 0.0
      %2472 = vmatprep.subr.mxu0 0.0
      %2473 = vmatpush1.msra.mxu0 0.0
      %2474 = vmatprep.subr.mxu0 0.0
      %2475 = vmatpush1.msra.mxu0 0.0
      %2476 = vmatprep.subr.mxu0 0.0
      %2477 = vmatpush1.msra.mxu0 0.0
      %2478 = vmatprep.subr.mxu0 0.0
      %2479 = vmatpush1.msra.mxu0 0.0
      %2480 = vmatprep.subr.mxu0 0.0
      %2481 = vmatpush1.msra.mxu0 0.0
      %2482 = vmatprep.subr.mxu0 0.0
      %2483 = vmatpush1.msra.mxu0 0.0
      %2484 = vmatprep.subr.mxu0 0.0
      %2485 = vmatpush1.msra.mxu0 0.0
      %2486 = vmatprep.subr.mxu0 0.0
      %2487 = vmatpush1.msra.mxu0 0.0
      %2488 = vmatprep.subr.mxu0 0.0
      %2489 = vmatpush1.msra.mxu0 0.0
      %2490 = vmatprep.subr.mxu0 0.0
      %2491 = vmatpush1.msra.mxu0 0.0
      %2492 = vmatprep.subr.mxu0 0.0
      %2493 = vmatpush1.msra.mxu0 0.0
      %2494 = vmatprep.subr.mxu0 0.0
      %2495 = vmatpush1.msra.mxu0 0.0
      %2496 = vmatprep.subr.mxu0 0.0
      %2497 = vmatpush1.msra.mxu0 0.0
      %2498 = vmatprep.subr.mxu0 0.0
      %2499 = vmatpush1.msra.mxu0 0.0
      %2500 = vmatprep.subr.mxu0 0.0
      %2501 = vmatpush1.msra.mxu0 0.0
      %2502 = vmatprep.subr.mxu0 0.0
      %2503 = vmatpush1.msra.mxu0 0.0
      %2504 = vmatprep.subr.mxu0 0.0
      %2505 = vmatpush1.msra.mxu0 0.0
      %2506 = vmatprep.subr.mxu0 0.0
      %2507 = vmatpush1.msra.mxu0 0.0
      %2508 = vmatprep.subr.mxu0 0.0
      %2509 = vmatpush1.msra.mxu0 0.0
      %2510 = vmatprep.subr.mxu0 0.0
      %2511 = vmatpush1.msra.mxu0 0.0
      %2512 = vmatprep.subr.mxu0 0.0
      %2513 = vmatpush1.msra.mxu0 0.0
      %2514 = vmatprep.subr.mxu0 0.0
      %2515 = vmatpush1.msra.mxu0 0.0
      %2516 = vmatprep.mubr.f32.mxu0 0.0
      %2517 = vmatmul.mubr.f32.gmra.mrb[0].mxu0 %v2098
      %v2518 = vpop.f32.mrb[0].mxu0
      %v2519 = vadd.f32 0.0, %v2518
      %v2520 = vpop.f32.mrb[0].mxu0
      %2521 = vmatprep.mubr.f32.mxu0 0.0
      %2522 = vmatmul.mubr.f32.gmra.mrb[0].mxu0 %v2101
      %v2523 = vpop.f32.mrb[0].mxu0
      %v2524 = vadd.f32 0.0, %v2523
      %v2525 = vpop.f32.mrb[0].mxu0
      %2526 = vmatprep.mubr.f32.mxu0 0.0
      %2527 = vmatmul.mubr.f32.gmra.mrb[0].mxu0 %v2104
      %v2528 = vpop.f32.mrb[0].mxu0
      %v2529 = vadd.f32 0.0, %v2528
      %v2530 = vpop.f32.mrb[0].mxu0
      %2531 = vmatprep.mubr.f32.mxu0 0.0
      %2532 = vmatmul.mubr.f32.gmra.mrb[0].mxu0 %v2107
      %v2533 = vpop.f32.mrb[0].mxu0
      %v2534 = vadd.f32 0.0, %v2533
      %v2535 = vpop.f32.mrb[0].mxu0
      %2536 = vmatprep.mubr.f32.mxu0 0.0
      %2537 = vmatmul.mubr.f32.gmra.mrb[0].mxu0 %v2110
      %v2538 = vpop.f32.mrb[0].mxu0
      %v2539 = vadd.f32 0.0, %v2538
      %v2540 = vpop.f32.mrb[0].mxu0
      %2541 = vmatprep.mubr.f32.mxu0 0.0
      %2542 = vmatmul.mubr.f32.gmra.mrb[0].mxu0 %v2113
      %v2543 = vpop.f32.mrb[0].mxu0
      %v2544 = vadd.f32 0.0, %v2543
      %v2545 = vpop.f32.mrb[0].mxu0
      %2546 = vmatprep.mubr.f32.mxu0 0.0
      %2547 = vmatmul.mubr.f32.gmra.mrb[0].mxu0 %v2116
      %v2548 = vpop.f32.mrb[0].mxu0
      %v2549 = vadd.f32 0.0, %v2548
      %v2550 = vpop.f32.mrb[0].mxu0
      %2551 = vmatprep.mubr.f32.mxu0 0.0
      %2552 = vmatmul.mubr.f32.gmra.mrb[0].mxu0 %v2119
      %v2553 = vpop.f32.mrb[0].mxu0
      %v2554 = vadd.f32 0.0, %v2553
      %v2555 = vpop.f32.mrb[0].mxu0
      %2556 = vmatprep.mubr.f32.mxu0 0.0
      %2557 = vmatmul.mubr.f32.gmra.mrb[0].mxu0 %v2122
      %v2558 = vpop.f32.mrb[0].mxu0
      %v2559 = vadd.f32 0.0, %v2558
      %v2560 = vpop.f32.mrb[0].mxu0
      %2561 = vmatprep.mubr.f32.mxu0 0.0
      %2562 = vmatmul.mubr.f32.gmra.mrb[0].mxu0 %v2125
      %v2563 = vpop.f32.mrb[0].mxu0
      %v2564 = vadd.f32 0.0, %v2563
      %v2565 = vpop.f32.mrb[0].mxu0
      %2566 = vmatprep.mubr.f32.mxu0 0.0
      %2567 = vmatmul.mubr.f32.gmra.mrb[0].mxu0 %v2128
      %v2568 = vpop.f32.mrb[0].mxu0
      %v2569 = vadd.f32 0.0, %v2568
      %v2570 = vpop.f32.mrb[0].mxu0
      %2571 = vmatprep.mubr.f32.mxu0 0.0
      %2572 = vmatmul.mubr.f32.gmra.mrb[0].mxu0 %v2131
      %v2573 = vpop.f32.mrb[0].mxu0
      %v2574 = vadd.f32 0.0, %v2573
      %v2575 = vpop.f32.mrb[0].mxu0
      %2576 = vmatprep.mubr.f32.mxu0 0.0
      %2577 = vmatmul.mubr.f32.gmra.mrb[0].mxu0 %v2134
      %v2578 = vpop.f32.mrb[0].mxu0
      %v2579 = vadd.f32 0.0, %v2578
      %v2580 = vpop.f32.mrb[0].mxu0
      %2581 = vmatprep.mubr.f32.mxu0 0.0
      %2582 = vmatmul.mubr.f32.gmra.mrb[0].mxu0 %v2137
      %v2583 = vpop.f32.mrb[0].mxu0
      %v2584 = vadd.f32 0.0, %v2583
      %v2585 = vpop.f32.mrb[0].mxu0
      %2586 = vmatprep.mubr.f32.mxu0 0.0
      %2587 = vmatmul.mubr.f32.gmra.mrb[0].mxu0 %v2140
      %v2588 = vpop.f32.mrb[0].mxu0
      %v2589 = vadd.f32 0.0, %v2588
      %v2590 = vpop.f32.mrb[0].mxu0
      %2591 = vmatprep.mubr.f32.mxu0 0.0
      %2592 = vmatmul.mubr.f32.gmra.mrb[0].mxu0 %v2143
      %v2593 = vpop.f32.mrb[0].mxu0
      %v2594 = vadd.f32 0.0, %v2593
      %v2595 = vpop.f32.mrb[0].mxu0
      %2596 = vmatprep.mubr.f32.mxu0 0.0
      %2597 = vmatmul.mubr.f32.gmra.mrb[0].mxu0 %v2146
      %v2598 = vpop.f32.mrb[0].mxu0
      %v2599 = vadd.f32 0.0, %v2598
      %v2600 = vpop.f32.mrb[0].mxu0
      %2601 = vmatprep.mubr.f32.mxu0 0.0
      %2602 = vmatmul.mubr.f32.gmra.mrb[0].mxu0 %v2149
      %v2603 = vpop.f32.mrb[0].mxu0
      %v2604 = vadd.f32 0.0, %v2603
      %v2605 = vpop.f32.mrb[0].mxu0
      %2606 = vmatprep.mubr.f32.mxu0 0.0
      %2607 = vmatmul.mubr.f32.gmra.mrb[0].mxu0 %v2152
      %v2608 = vpop.f32.mrb[0].mxu0
      %v2609 = vadd.f32 0.0, %v2608
      %v2610 = vpop.f32.mrb[0].mxu0
      %2611 = vmatprep.mubr.f32.mxu0 0.0
      %2612 = vmatmul.mubr.f32.gmra.mrb[0].mxu0 %v2155
      %v2613 = vpop.f32.mrb[0].mxu0
      %v2614 = vadd.f32 0.0, %v2613
      %v2615 = vpop.f32.mrb[0].mxu0
      %2616 = vmatprep.mubr.f32.mxu0 0.0
      %2617 = vmatmul.mubr.f32.gmra.mrb[0].mxu0 %v2158
      %v2618 = vpop.f32.mrb[0].mxu0
      %v2619 = vadd.f32 0.0, %v2618
      %v2620 = vpop.f32.mrb[0].mxu0
      %2621 = vmatprep.mubr.f32.mxu0 0.0
      %2622 = vmatmul.mubr.f32.gmra.mrb[0].mxu0 %v2161
      %v2623 = vpop.f32.mrb[0].mxu0
      %v2624 = vadd.f32 0.0, %v2623
      %v2625 = vpop.f32.mrb[0].mxu0
      %2626 = vmatprep.mubr.f32.mxu0 0.0
      %2627 = vmatmul.mubr.f32.gmra.mrb[0].mxu0 %v2164
      %v2628 = vpop.f32.mrb[0].mxu0
      %v2629 = vadd.f32 0.0, %v2628
      %v2630 = vpop.f32.mrb[0].mxu0
      %2631 = vmatprep.mubr.f32.mxu0 0.0
      %2632 = vmatmul.mubr.f32.gmra.mrb[0].mxu0 %v2167
      %v2633 = vpop.f32.mrb[0].mxu0
      %v2634 = vadd.f32 0.0, %v2633
      %v2635 = vpop.f32.mrb[0].mxu0
      %2636 = vmatprep.mubr.f32.mxu0 0.0
      %2637 = vmatmul.mubr.f32.gmra.mrb[0].mxu0 %v2170
      %v2638 = vpop.f32.mrb[0].mxu0
      %v2639 = vadd.f32 0.0, %v2638
      %v2640 = vpop.f32.mrb[0].mxu0
      %2641 = vmatprep.mubr.f32.mxu0 0.0
      %2642 = vmatmul.mubr.f32.gmra.mrb[0].mxu0 %v2173
      %v2643 = vpop.f32.mrb[0].mxu0
      %v2644 = vadd.f32 0.0, %v2643
      %v2645 = vpop.f32.mrb[0].mxu0
      %2646 = vmatprep.mubr.f32.mxu0 0.0
      %2647 = vmatmul.mubr.f32.gmra.mrb[0].mxu0 %v2176
      %v2648 = vpop.f32.mrb[0].mxu0
      %v2649 = vadd.f32 0.0, %v2648
      %v2650 = vpop.f32.mrb[0].mxu0
      %2651 = vmatprep.mubr.f32.mxu0 0.0
      %2652 = vmatmul.mubr.f32.gmra.mrb[0].mxu0 %v2179
      %v2653 = vpop.f32.mrb[0].mxu0
      %v2654 = vadd.f32 0.0, %v2653
      %v2655 = vpop.f32.mrb[0].mxu0
      %2656 = vmatprep.mubr.f32.mxu0 0.0
      %2657 = vmatmul.mubr.f32.gmra.mrb[0].mxu0 %v2182
      %v2658 = vpop.f32.mrb[0].mxu0
      %v2659 = vadd.f32 0.0, %v2658
      %v2660 = vpop.f32.mrb[0].mxu0
      %2661 = vmatprep.mubr.f32.mxu0 0.0
      %2662 = vmatmul.mubr.f32.gmra.mrb[0].mxu0 %v2185
      %v2663 = vpop.f32.mrb[0].mxu0
      %v2664 = vadd.f32 0.0, %v2663
      %v2665 = vpop.f32.mrb[0].mxu0
      %2666 = vmatprep.mubr.f32.mxu0 0.0
      %2667 = vmatmul.mubr.f32.gmra.mrb[0].mxu0 %v2447
      %v2668 = vpop.f32.mrb[0].mxu0
      %v2669 = vadd.f32 0.0, %v2668
      %v2670 = vpop.f32.mrb[0].mxu0
      %2671 = vmatprep.mubr.f32.mxu0 0.0
      %2672 = vmatmul.mubr.f32.gmra.mrb[0].mxu0 %v2450
      %v2673 = vpop.f32.mrb[0].mxu0
      %v2674 = vadd.f32 0.0, %v2673
      %v2675 = vpop.f32.mrb[0].mxu0
      %2676 = vdwg.mxu0
      %v2677 = vadd.f32 %v2412, %v2519
      %v2678 = vadd.f32 %v2413, %v2524
      %v2679 = vadd.f32 %v2414, %v2529
      %v2680 = vadd.f32 %v2415, %v2534
      %v2681 = vadd.f32 %v2416, %v2539
      %v2682 = vadd.f32 %v2417, %v2544
      %v2683 = vadd.f32 %v2418, %v2549
      %v2684 = vadd.f32 %v2419, %v2554
      %v2685 = vadd.f32 %v2420, %v2559
      %v2686 = vadd.f32 %v2421, %v2564
      %v2687 = vadd.f32 %v2422, %v2569
      %v2688 = vadd.f32 %v2423, %v2574
      %v2689 = vadd.f32 %v2424, %v2579
      %v2690 = vadd.f32 %v2425, %v2584
      %v2691 = vadd.f32 %v2426, %v2589
      %v2692 = vadd.f32 %v2427, %v2594
      %v2693 = vadd.f32 %v2428, %v2599
      %v2694 = vadd.f32 %v2429, %v2604
      %v2695 = vadd.f32 %v2430, %v2609
      %v2696 = vadd.f32 %v2431, %v2614
      %v2697 = vadd.f32 %v2432, %v2619
      %v2698 = vadd.f32 %v2433, %v2624
      %v2699 = vadd.f32 %v2434, %v2629
      %v2700 = vadd.f32 %v2435, %v2634
      %v2701 = vadd.f32 %v2436, %v2639
      %v2702 = vadd.f32 %v2437, %v2644
      %v2703 = vadd.f32 %v2438, %v2649
      %v2704 = vadd.f32 %v2439, %v2654
      %v2705 = vadd.f32 %v2440, %v2659
      %v2706 = vadd.f32 %v2441, %v2664
      %v2707 = vadd.f32 %v2442, %v2669
      %v2708 = vadd.f32 %v2443, %v2674
      %s2709 = scalar_lea.vmem %s1, 64
      %v2710 = vld [vmem:[%s2709] sm:$0xff]
      %v2712 = vsel %vm314, %v2087, 0
      %v2715 = vsel %vm314, %v2088, 0
      %2717 = vmatprep.subr.mxu0 0.0
      %2718 = vmatpush1.msra.mxu0 %v2710
      %2719 = vmatprep.subr.mxu0 0.0
      %2720 = vmatpush1.msra.mxu0 0.0
      %2721 = vmatprep.subr.mxu0 0.0
      %2722 = vmatpush1.msra.mxu0 0.0
      %2723 = vmatprep.subr.mxu0 0.0
      %2724 = vmatpush1.msra.mxu0 0.0
      %2725 = vmatprep.subr.mxu0 0.0
      %2726 = vmatpush1.msra.mxu0 0.0
      %2727 = vmatprep.subr.mxu0 0.0
      %2728 = vmatpush1.msra.mxu0 0.0
      %2729 = vmatprep.subr.mxu0 0.0
      %2730 = vmatpush1.msra.mxu0 0.0
      %2731 = vmatprep.subr.mxu0 0.0
      %2732 = vmatpush1.msra.mxu0 0.0
      %2733 = vmatprep.subr.mxu0 0.0
      %2734 = vmatpush1.msra.mxu0 0.0
      %2735 = vmatprep.subr.mxu0 0.0
      %2736 = vmatpush1.msra.mxu0 0.0
      %2737 = vmatprep.subr.mxu0 0.0
      %2738 = vmatpush1.msra.mxu0 0.0
      %2739 = vmatprep.subr.mxu0 0.0
      %2740 = vmatpush1.msra.mxu0 0.0
      %2741 = vmatprep.subr.mxu0 0.0
      %2742 = vmatpush1.msra.mxu0 0.0
      %2743 = vmatprep.subr.mxu0 0.0
      %2744 = vmatpush1.msra.mxu0 0.0
      %2745 = vmatprep.subr.mxu0 0.0
      %2746 = vmatpush1.msra.mxu0 0.0
      %2747 = vmatprep.subr.mxu0 0.0
      %2748 = vmatpush1.msra.mxu0 0.0
      %2749 = vmatprep.subr.mxu0 0.0
      %2750 = vmatpush1.msra.mxu0 0.0
      %2751 = vmatprep.subr.mxu0 0.0
      %2752 = vmatpush1.msra.mxu0 0.0
      %2753 = vmatprep.subr.mxu0 0.0
      %2754 = vmatpush1.msra.mxu0 0.0
      %2755 = vmatprep.subr.mxu0 0.0
      %2756 = vmatpush1.msra.mxu0 0.0
      %2757 = vmatprep.subr.mxu0 0.0
      %2758 = vmatpush1.msra.mxu0 0.0
      %2759 = vmatprep.subr.mxu0 0.0
      %2760 = vmatpush1.msra.mxu0 0.0
      %2761 = vmatprep.subr.mxu0 0.0
      %2762 = vmatpush1.msra.mxu0 0.0
      %2763 = vmatprep.subr.mxu0 0.0
      %2764 = vmatpush1.msra.mxu0 0.0
      %2765 = vmatprep.subr.mxu0 0.0
      %2766 = vmatpush1.msra.mxu0 0.0
      %2767 = vmatprep.subr.mxu0 0.0
      %2768 = vmatpush1.msra.mxu0 0.0
      %2769 = vmatprep.subr.mxu0 0.0
      %2770 = vmatpush1.msra.mxu0 0.0
      %2771 = vmatprep.subr.mxu0 0.0
      %2772 = vmatpush1.msra.mxu0 0.0
      %2773 = vmatprep.subr.mxu0 0.0
      %2774 = vmatpush1.msra.mxu0 0.0
      %2775 = vmatprep.subr.mxu0 0.0
      %2776 = vmatpush1.msra.mxu0 0.0
      %2777 = vmatprep.subr.mxu0 0.0
      %2778 = vmatpush1.msra.mxu0 0.0
      %2779 = vmatprep.subr.mxu0 0.0
      %2780 = vmatpush1.msra.mxu0 0.0
      %2781 = vmatprep.mubr.f32.mxu0 0.0
      %2782 = vmatmul.mubr.f32.gmra.mrb[0].mxu0 %v2104
      %v2783 = vpop.f32.mrb[0].mxu0
      %v2784 = vadd.f32 0.0, %v2783
      %v2785 = vpop.f32.mrb[0].mxu0
      %2786 = vmatprep.mubr.f32.mxu0 0.0
      %2787 = vmatmul.mubr.f32.gmra.mrb[0].mxu0 %v2107
      %v2788 = vpop.f32.mrb[0].mxu0
      %v2789 = vadd.f32 0.0, %v2788
      %v2790 = vpop.f32.mrb[0].mxu0
      %2791 = vmatprep.mubr.f32.mxu0 0.0
      %2792 = vmatmul.mubr.f32.gmra.mrb[0].mxu0 %v2110
      %v2793 = vpop.f32.mrb[0].mxu0
      %v2794 = vadd.f32 0.0, %v2793
      %v2795 = vpop.f32.mrb[0].mxu0
      %2796 = vmatprep.mubr.f32.mxu0 0.0
      %2797 = vmatmul.mubr.f32.gmra.mrb[0].mxu0 %v2113
      %v2798 = vpop.f32.mrb[0].mxu0
      %v2799 = vadd.f32 0.0, %v2798
      %v2800 = vpop.f32.mrb[0].mxu0
      %2801 = vmatprep.mubr.f32.mxu0 0.0
      %2802 = vmatmul.mubr.f32.gmra.mrb[0].mxu0 %v2116
      %v2803 = vpop.f32.mrb[0].mxu0
      %v2804 = vadd.f32 0.0, %v2803
      %v2805 = vpop.f32.mrb[0].mxu0
      %2806 = vmatprep.mubr.f32.mxu0 0.0
      %2807 = vmatmul.mubr.f32.gmra.mrb[0].mxu0 %v2119
      %v2808 = vpop.f32.mrb[0].mxu0
      %v2809 = vadd.f32 0.0, %v2808
      %v2810 = vpop.f32.mrb[0].mxu0
      %2811 = vmatprep.mubr.f32.mxu0 0.0
      %2812 = vmatmul.mubr.f32.gmra.mrb[0].mxu0 %v2122
      %v2813 = vpop.f32.mrb[0].mxu0
      %v2814 = vadd.f32 0.0, %v2813
      %v2815 = vpop.f32.mrb[0].mxu0
      %2816 = vmatprep.mubr.f32.mxu0 0.0
      %2817 = vmatmul.mubr.f32.gmra.mrb[0].mxu0 %v2125
      %v2818 = vpop.f32.mrb[0].mxu0
      %v2819 = vadd.f32 0.0, %v2818
      %v2820 = vpop.f32.mrb[0].mxu0
      %2821 = vmatprep.mubr.f32.mxu0 0.0
      %2822 = vmatmul.mubr.f32.gmra.mrb[0].mxu0 %v2128
      %v2823 = vpop.f32.mrb[0].mxu0
      %v2824 = vadd.f32 0.0, %v2823
      %v2825 = vpop.f32.mrb[0].mxu0
      %2826 = vmatprep.mubr.f32.mxu0 0.0
      %2827 = vmatmul.mubr.f32.gmra.mrb[0].mxu0 %v2131
      %v2828 = vpop.f32.mrb[0].mxu0
      %v2829 = vadd.f32 0.0, %v2828
      %v2830 = vpop.f32.mrb[0].mxu0
      %2831 = vmatprep.mubr.f32.mxu0 0.0
      %2832 = vmatmul.mubr.f32.gmra.mrb[0].mxu0 %v2134
      %v2833 = vpop.f32.mrb[0].mxu0
      %v2834 = vadd.f32 0.0, %v2833
      %v2835 = vpop.f32.mrb[0].mxu0
      %2836 = vmatprep.mubr.f32.mxu0 0.0
      %2837 = vmatmul.mubr.f32.gmra.mrb[0].mxu0 %v2137
      %v2838 = vpop.f32.mrb[0].mxu0
      %v2839 = vadd.f32 0.0, %v2838
      %v2840 = vpop.f32.mrb[0].mxu0
      %2841 = vmatprep.mubr.f32.mxu0 0.0
      %2842 = vmatmul.mubr.f32.gmra.mrb[0].mxu0 %v2140
      %v2843 = vpop.f32.mrb[0].mxu0
      %v2844 = vadd.f32 0.0, %v2843
      %v2845 = vpop.f32.mrb[0].mxu0
      %2846 = vmatprep.mubr.f32.mxu0 0.0
      %2847 = vmatmul.mubr.f32.gmra.mrb[0].mxu0 %v2143
      %v2848 = vpop.f32.mrb[0].mxu0
      %v2849 = vadd.f32 0.0, %v2848
      %v2850 = vpop.f32.mrb[0].mxu0
      %2851 = vmatprep.mubr.f32.mxu0 0.0
      %2852 = vmatmul.mubr.f32.gmra.mrb[0].mxu0 %v2146
      %v2853 = vpop.f32.mrb[0].mxu0
      %v2854 = vadd.f32 0.0, %v2853
      %v2855 = vpop.f32.mrb[0].mxu0
      %2856 = vmatprep.mubr.f32.mxu0 0.0
      %2857 = vmatmul.mubr.f32.gmra.mrb[0].mxu0 %v2149
      %v2858 = vpop.f32.mrb[0].mxu0
      %v2859 = vadd.f32 0.0, %v2858
      %v2860 = vpop.f32.mrb[0].mxu0
      %2861 = vmatprep.mubr.f32.mxu0 0.0
      %2862 = vmatmul.mubr.f32.gmra.mrb[0].mxu0 %v2152
      %v2863 = vpop.f32.mrb[0].mxu0
      %v2864 = vadd.f32 0.0, %v2863
      %v2865 = vpop.f32.mrb[0].mxu0
      %2866 = vmatprep.mubr.f32.mxu0 0.0
      %2867 = vmatmul.mubr.f32.gmra.mrb[0].mxu0 %v2155
      %v2868 = vpop.f32.mrb[0].mxu0
      %v2869 = vadd.f32 0.0, %v2868
      %v2870 = vpop.f32.mrb[0].mxu0
      %2871 = vmatprep.mubr.f32.mxu0 0.0
      %2872 = vmatmul.mubr.f32.gmra.mrb[0].mxu0 %v2158
      %v2873 = vpop.f32.mrb[0].mxu0
      %v2874 = vadd.f32 0.0, %v2873
      %v2875 = vpop.f32.mrb[0].mxu0
      %2876 = vmatprep.mubr.f32.mxu0 0.0
      %2877 = vmatmul.mubr.f32.gmra.mrb[0].mxu0 %v2161
      %v2878 = vpop.f32.mrb[0].mxu0
      %v2879 = vadd.f32 0.0, %v2878
      %v2880 = vpop.f32.mrb[0].mxu0
      %2881 = vmatprep.mubr.f32.mxu0 0.0
      %2882 = vmatmul.mubr.f32.gmra.mrb[0].mxu0 %v2164
      %v2883 = vpop.f32.mrb[0].mxu0
      %v2884 = vadd.f32 0.0, %v2883
      %v2885 = vpop.f32.mrb[0].mxu0
      %2886 = vmatprep.mubr.f32.mxu0 0.0
      %2887 = vmatmul.mubr.f32.gmra.mrb[0].mxu0 %v2167
      %v2888 = vpop.f32.mrb[0].mxu0
      %v2889 = vadd.f32 0.0, %v2888
      %v2890 = vpop.f32.mrb[0].mxu0
      %2891 = vmatprep.mubr.f32.mxu0 0.0
      %2892 = vmatmul.mubr.f32.gmra.mrb[0].mxu0 %v2170
      %v2893 = vpop.f32.mrb[0].mxu0
      %v2894 = vadd.f32 0.0, %v2893
      %v2895 = vpop.f32.mrb[0].mxu0
      %2896 = vmatprep.mubr.f32.mxu0 0.0
      %2897 = vmatmul.mubr.f32.gmra.mrb[0].mxu0 %v2173
      %v2898 = vpop.f32.mrb[0].mxu0
      %v2899 = vadd.f32 0.0, %v2898
      %v2900 = vpop.f32.mrb[0].mxu0
      %2901 = vmatprep.mubr.f32.mxu0 0.0
      %2902 = vmatmul.mubr.f32.gmra.mrb[0].mxu0 %v2176
      %v2903 = vpop.f32.mrb[0].mxu0
      %v2904 = vadd.f32 0.0, %v2903
      %v2905 = vpop.f32.mrb[0].mxu0
      %2906 = vmatprep.mubr.f32.mxu0 0.0
      %2907 = vmatmul.mubr.f32.gmra.mrb[0].mxu0 %v2179
      %v2908 = vpop.f32.mrb[0].mxu0
      %v2909 = vadd.f32 0.0, %v2908
      %v2910 = vpop.f32.mrb[0].mxu0
      %2911 = vmatprep.mubr.f32.mxu0 0.0
      %2912 = vmatmul.mubr.f32.gmra.mrb[0].mxu0 %v2182
      %v2913 = vpop.f32.mrb[0].mxu0
      %v2914 = vadd.f32 0.0, %v2913
      %v2915 = vpop.f32.mrb[0].mxu0
      %2916 = vmatprep.mubr.f32.mxu0 0.0
      %2917 = vmatmul.mubr.f32.gmra.mrb[0].mxu0 %v2185
      %v2918 = vpop.f32.mrb[0].mxu0
      %v2919 = vadd.f32 0.0, %v2918
      %v2920 = vpop.f32.mrb[0].mxu0
      %2921 = vmatprep.mubr.f32.mxu0 0.0
      %2922 = vmatmul.mubr.f32.gmra.mrb[0].mxu0 %v2447
      %v2923 = vpop.f32.mrb[0].mxu0
      %v2924 = vadd.f32 0.0, %v2923
      %v2925 = vpop.f32.mrb[0].mxu0
      %2926 = vmatprep.mubr.f32.mxu0 0.0
      %2927 = vmatmul.mubr.f32.gmra.mrb[0].mxu0 %v2450
      %v2928 = vpop.f32.mrb[0].mxu0
      %v2929 = vadd.f32 0.0, %v2928
      %v2930 = vpop.f32.mrb[0].mxu0
      %2931 = vmatprep.mubr.f32.mxu0 0.0
      %2932 = vmatmul.mubr.f32.gmra.mrb[0].mxu0 %v2712
      %v2933 = vpop.f32.mrb[0].mxu0
      %v2934 = vadd.f32 0.0, %v2933
      %v2935 = vpop.f32.mrb[0].mxu0
      %2936 = vmatprep.mubr.f32.mxu0 0.0
      %2937 = vmatmul.mubr.f32.gmra.mrb[0].mxu0 %v2715
      %v2938 = vpop.f32.mrb[0].mxu0
      %v2939 = vadd.f32 0.0, %v2938
      %v2940 = vpop.f32.mrb[0].mxu0
      %2941 = vdwg.mxu0
      %v2942 = vadd.f32 %v2677, %v2784
      %v2943 = vadd.f32 %v2678, %v2789
      %v2944 = vadd.f32 %v2679, %v2794
      %v2945 = vadd.f32 %v2680, %v2799
      %v2946 = vadd.f32 %v2681, %v2804
      %v2947 = vadd.f32 %v2682, %v2809
      %v2948 = vadd.f32 %v2683, %v2814
      %v2949 = vadd.f32 %v2684, %v2819
      %v2950 = vadd.f32 %v2685, %v2824
      %v2951 = vadd.f32 %v2686, %v2829
      %v2952 = vadd.f32 %v2687, %v2834
      %v2953 = vadd.f32 %v2688, %v2839
      %v2954 = vadd.f32 %v2689, %v2844
      %v2955 = vadd.f32 %v2690, %v2849
      %v2956 = vadd.f32 %v2691, %v2854
      %v2957 = vadd.f32 %v2692, %v2859
      %v2958 = vadd.f32 %v2693, %v2864
      %v2959 = vadd.f32 %v2694, %v2869
      %v2960 = vadd.f32 %v2695, %v2874
      %v2961 = vadd.f32 %v2696, %v2879
      %v2962 = vadd.f32 %v2697, %v2884
      %v2963 = vadd.f32 %v2698, %v2889
      %v2964 = vadd.f32 %v2699, %v2894
      %v2965 = vadd.f32 %v2700, %v2899
      %v2966 = vadd.f32 %v2701, %v2904
      %v2967 = vadd.f32 %v2702, %v2909
      %v2968 = vadd.f32 %v2703, %v2914
      %v2969 = vadd.f32 %v2704, %v2919
      %v2970 = vadd.f32 %v2705, %v2924
      %v2971 = vadd.f32 %v2706, %v2929
      %v2972 = vadd.f32 %v2707, %v2934
      %v2973 = vadd.f32 %v2708, %v2939
      %v2974 = vld [vmem:[%s2] sm:$0x1]
      %v2976 = vlaneseq
      %v2977 = vshrl.u32 %v2976, 7
      %v2978 = vsub.s32 0, %v2977
      %v2979 = vrot.slane %v2974, %v2978
      %v2981 = vadd.f32 %v2942, %v2979
      %v2982 = vadd.f32 %v2943, %v2979
      %v2983 = vadd.f32 %v2944, %v2979
      %v2984 = vadd.f32 %v2945, %v2979
      %v2985 = vadd.f32 %v2946, %v2979
      %v2986 = vadd.f32 %v2947, %v2979
      %v2987 = vadd.f32 %v2948, %v2979
      %v2988 = vadd.f32 %v2949, %v2979
      %v2989 = vadd.f32 %v2950, %v2979
      %v2990 = vadd.f32 %v2951, %v2979
      %v2991 = vadd.f32 %v2952, %v2979
      %v2992 = vadd.f32 %v2953, %v2979
      %v2993 = vadd.f32 %v2954, %v2979
      %v2994 = vadd.f32 %v2955, %v2979
      %v2995 = vadd.f32 %v2956, %v2979
      %v2996 = vadd.f32 %v2957, %v2979
      %v2997 = vadd.f32 %v2958, %v2979
      %v2998 = vadd.f32 %v2959, %v2979
      %v2999 = vadd.f32 %v2960, %v2979
      %v3000 = vadd.f32 %v2961, %v2979
      %v3001 = vadd.f32 %v2962, %v2979
      %v3002 = vadd.f32 %v2963, %v2979
      %v3003 = vadd.f32 %v2964, %v2979
      %v3004 = vadd.f32 %v2965, %v2979
      %v3005 = vadd.f32 %v2966, %v2979
      %v3006 = vadd.f32 %v2967, %v2979
      %v3007 = vadd.f32 %v2968, %v2979
      %v3008 = vadd.f32 %v2969, %v2979
      %v3009 = vadd.f32 %v2970, %v2979
      %v3010 = vadd.f32 %v2971, %v2979
      %v3011 = vadd.f32 %v2972, %v2979
      %v3012 = vadd.f32 %v2973, %v2979
      %v3013 = vmax.f32 %v2981, 0.0
      %v3014 = vmax.f32 %v2982, 0.0
      %v3015 = vmax.f32 %v2983, 0.0
      %v3016 = vmax.f32 %v2984, 0.0
      %v3017 = vmax.f32 %v2985, 0.0
      %v3018 = vmax.f32 %v2986, 0.0
      %v3019 = vmax.f32 %v2987, 0.0
      %v3020 = vmax.f32 %v2988, 0.0
      %v3021 = vmax.f32 %v2989, 0.0
      %v3022 = vmax.f32 %v2990, 0.0
      %v3023 = vmax.f32 %v2991, 0.0
      %v3024 = vmax.f32 %v2992, 0.0
      %v3025 = vmax.f32 %v2993, 0.0
      %v3026 = vmax.f32 %v2994, 0.0
      %v3027 = vmax.f32 %v2995, 0.0
      %v3028 = vmax.f32 %v2996, 0.0
      %v3029 = vmax.f32 %v2997, 0.0
      %v3030 = vmax.f32 %v2998, 0.0
      %v3031 = vmax.f32 %v2999, 0.0
      %v3032 = vmax.f32 %v3000, 0.0
      %v3033 = vmax.f32 %v3001, 0.0
      %v3034 = vmax.f32 %v3002, 0.0
      %v3035 = vmax.f32 %v3003, 0.0
      %v3036 = vmax.f32 %v3004, 0.0
      %v3037 = vmax.f32 %v3005, 0.0
      %v3038 = vmax.f32 %v3006, 0.0
      %v3039 = vmax.f32 %v3007, 0.0
      %v3040 = vmax.f32 %v3008, 0.0
      %v3041 = vmax.f32 %v3009, 0.0
      %v3042 = vmax.f32 %v3010, 0.0
      %v3043 = vmax.f32 %v3011, 0.0
      %v3044 = vmax.f32 %v3012, 0.0
      %s3045 = scalar_lea.vmem [#allocation2], 24
      %3046 = vst.msk [vmem:[%s3045 + $0x1] sm:$0xff] %vm314, %v3013
      %3047 = vst.msk [vmem:[%s3045 + $0x9] sm:$0xff] %vm314, %v3014
      %3048 = vst.msk [vmem:[%s3045 + $0x19] sm:$0xff] %vm314, %v3015
      %3049 = vst.msk [vmem:[%s3045 + $0x21] sm:$0xff] %vm314, %v3016
      %3050 = vst.msk [vmem:[%s3045 + $0x31] sm:$0xff] %vm314, %v3017
      %3051 = vst.msk [vmem:[%s3045 + $0x39] sm:$0xff] %vm314, %v3018
      %3052 = vst.msk [vmem:[%s3045 + $0x49] sm:$0xff] %vm314, %v3019
      %3053 = vst.msk [vmem:[%s3045 + $0x51] sm:$0xff] %vm314, %v3020
      %3054 = vst.msk [vmem:[%s3045 + $0x61] sm:$0xff] %vm314, %v3021
      %3055 = vst.msk [vmem:[%s3045 + $0x69] sm:$0xff] %vm314, %v3022
      %3056 = vst.msk [vmem:[%s3045 + $0x79] sm:$0xff] %vm314, %v3023
      %3057 = vst.msk [vmem:[%s3045 + $0x81] sm:$0xff] %vm314, %v3024
      %3058 = vst.msk [vmem:[%s3045 + $0x91] sm:$0xff] %vm314, %v3025
      %3059 = vst.msk [vmem:[%s3045 + $0x99] sm:$0xff] %vm314, %v3026
      %3060 = vst.msk [vmem:[%s3045 + $0xa9] sm:$0xff] %vm314, %v3027
      %3061 = vst.msk [vmem:[%s3045 + $0xb1] sm:$0xff] %vm314, %v3028
      %3062 = vst.msk [vmem:[%s3045 + $0xc1] sm:$0xff] %vm314, %v3029
      %3063 = vst.msk [vmem:[%s3045 + $0xc9] sm:$0xff] %vm314, %v3030
      %3064 = vst.msk [vmem:[%s3045 + $0xd9] sm:$0xff] %vm314, %v3031
      %3065 = vst.msk [vmem:[%s3045 + $0xe1] sm:$0xff] %vm314, %v3032
      %3066 = vst.msk [vmem:[%s3045 + $0xf1] sm:$0xff] %vm314, %v3033
      %3067 = vst.msk [vmem:[%s3045 + $0xf9] sm:$0xff] %vm314, %v3034
      %3068 = vst.msk [vmem:[%s3045 + $0x109] sm:$0xff] %vm314, %v3035
      %3069 = vst.msk [vmem:[%s3045 + $0x111] sm:$0xff] %vm314, %v3036
      %3070 = vst.msk [vmem:[%s3045 + $0x121] sm:$0xff] %vm314, %v3037
      %3071 = vst.msk [vmem:[%s3045 + $0x129] sm:$0xff] %vm314, %v3038
      %3072 = vst.msk [vmem:[%s3045 + $0x139] sm:$0xff] %vm314, %v3039
      %3073 = vst.msk [vmem:[%s3045 + $0x141] sm:$0xff] %vm314, %v3040
      %3074 = vst.msk [vmem:[%s3045 + $0x151] sm:$0xff] %vm314, %v3041
      %3075 = vst.msk [vmem:[%s3045 + $0x159] sm:$0xff] %vm314, %v3042
      %3076 = vst.msk [vmem:[%s3045 + $0x169] sm:$0xff] %vm314, %v3043
      %3077 = vst.msk [vmem:[%s3045 + $0x171] sm:$0xff] %vm314, %v3044
      %v3078 = vld [vmem:[#allocation2] sm:$0xff]
      %v3079 = vld [vmem:[#allocation2 + $0x8] sm:$0xff]
      %v3080 = vld [vmem:[#allocation2 + $0x18] sm:$0xff]
      %v3081 = vld [vmem:[#allocation2 + $0x20] sm:$0xff]
      %v3082 = vld [vmem:[#allocation2 + $0x30] sm:$0xff]
      %v3083 = vld [vmem:[#allocation2 + $0x38] sm:$0xff]
      %v3084 = vld [vmem:[#allocation2 + $0x48] sm:$0xff]
      %v3085 = vld [vmem:[#allocation2 + $0x50] sm:$0xff]
      %v3086 = vld [vmem:[#allocation2 + $0x60] sm:$0xff]
      %v3087 = vld [vmem:[#allocation2 + $0x68] sm:$0xff]
      %v3088 = vld [vmem:[#allocation2 + $0x78] sm:$0xff]
      %v3089 = vld [vmem:[#allocation2 + $0x80] sm:$0xff]
      %v3090 = vld [vmem:[#allocation2 + $0x90] sm:$0xff]
      %v3091 = vld [vmem:[#allocation2 + $0x98] sm:$0xff]
      %v3092 = vld [vmem:[#allocation2 + $0xa8] sm:$0xff]
      %v3093 = vld [vmem:[#allocation2 + $0xb0] sm:$0xff]
      %v3094 = vld [vmem:[#allocation2 + $0xc0] sm:$0xff]
      %v3095 = vld [vmem:[#allocation2 + $0xc8] sm:$0xff]
      %v3096 = vld [vmem:[#allocation2 + $0xd8] sm:$0xff]
      %v3097 = vld [vmem:[#allocation2 + $0xe0] sm:$0xff]
      %v3098 = vld [vmem:[#allocation2 + $0xf0] sm:$0xff]
      %v3099 = vld [vmem:[#allocation2 + $0xf8] sm:$0xff]
      %v3100 = vld [vmem:[#allocation2 + $0x108] sm:$0xff]
      %v3101 = vld [vmem:[#allocation2 + $0x110] sm:$0xff]
      %v3102 = vld [vmem:[#allocation2 + $0x120] sm:$0xff]
      %v3103 = vld [vmem:[#allocation2 + $0x128] sm:$0xff]
      %v3104 = vld [vmem:[#allocation2 + $0x138] sm:$0xff]
      %v3105 = vld [vmem:[#allocation2 + $0x140] sm:$0xff]
      %v3106 = vld [vmem:[#allocation2 + $0x150] sm:$0xff]
      %v3107 = vld [vmem:[#allocation2 + $0x158] sm:$0xff]
      %v3108 = vld [vmem:[#allocation2 + $0x168] sm:$0xff]
      %v3109 = vld [vmem:[#allocation2 + $0x170] sm:$0xff]
      %v3110 = vld [vmem:[#allocation2 + $0x180] sm:$0xff]
      %v3111 = vld [vmem:[#allocation2 + $0x188] sm:$0xff]
      %v3112 = vld [vmem:[#allocation2 + $0x198] sm:$0xff]
      %v3113 = vld [vmem:[#allocation2 + $0x1a0] sm:$0xff]
      %v3114 = vld [vmem:[%s3] sm:$0xff]
      %s3115 = scalar_lea.vmem %s3, 24
      %v3116 = vld [vmem:[%s3115] sm:$0xff]
      %v3118 = vsel %vm314, %v3080, 0
      %v3121 = vsel %vm314, %v3081, 0
      %v3124 = vsel %vm314, %v3082, 0
      %v3127 = vsel %vm314, %v3083, 0
      %v3130 = vsel %vm314, %v3084, 0
      %v3133 = vsel %vm314, %v3085, 0
      %v3136 = vsel %vm314, %v3086, 0
      %v3139 = vsel %vm314, %v3087, 0
      %v3142 = vsel %vm314, %v3088, 0
      %v3145 = vsel %vm314, %v3089, 0
      %v3148 = vsel %vm314, %v3090, 0
      %v3151 = vsel %vm314, %v3091, 0
      %v3154 = vsel %vm314, %v3092, 0
      %v3157 = vsel %vm314, %v3093, 0
      %v3160 = vsel %vm314, %v3094, 0
      %v3163 = vsel %vm314, %v3095, 0
      %v3166 = vsel %vm314, %v3096, 0
      %v3169 = vsel %vm314, %v3097, 0
      %v3172 = vsel %vm314, %v3098, 0
      %v3175 = vsel %vm314, %v3099, 0
      %v3178 = vsel %vm314, %v3100, 0
      %v3181 = vsel %vm314, %v3101, 0
      %v3184 = vsel %vm314, %v3102, 0
      %v3187 = vsel %vm314, %v3103, 0
      %v3190 = vsel %vm314, %v3104, 0
      %v3193 = vsel %vm314, %v3105, 0
      %v3196 = vsel %vm314, %v3106, 0
      %v3199 = vsel %vm314, %v3107, 0
      %v3202 = vsel %vm314, %v3108, 0
      %v3205 = vsel %vm314, %v3109, 0
      %v3208 = vsel %vm314, %v3110, 0
      %v3211 = vsel %vm314, %v3111, 0
      %3213 = vmatprep.subr.mxu0 0.0
      %3214 = vmatpush1.msra.mxu0 %v3116
      %3215 = vmatprep.subr.mxu0 0.0
      %3216 = vmatpush1.msra.mxu0 0.0
      %3217 = vmatprep.subr.mxu0 0.0
      %3218 = vmatpush1.msra.mxu0 0.0
      %3219 = vmatprep.subr.mxu0 0.0
      %3220 = vmatpush1.msra.mxu0 0.0
      %3221 = vmatprep.subr.mxu0 0.0
      %3222 = vmatpush1.msra.mxu0 0.0
      %3223 = vmatprep.subr.mxu0 0.0
      %3224 = vmatpush1.msra.mxu0 0.0
      %3225 = vmatprep.subr.mxu0 0.0
      %3226 = vmatpush1.msra.mxu0 0.0
      %3227 = vmatprep.subr.mxu0 0.0
      %3228 = vmatpush1.msra.mxu0 0.0
      %3229 = vmatprep.subr.mxu0 0.0
      %3230 = vmatpush1.msra.mxu0 0.0
      %3231 = vmatprep.subr.mxu0 0.0
      %3232 = vmatpush1.msra.mxu0 0.0
      %3233 = vmatprep.subr.mxu0 0.0
      %3234 = vmatpush1.msra.mxu0 0.0
      %3235 = vmatprep.subr.mxu0 0.0
      %3236 = vmatpush1.msra.mxu0 0.0
      %3237 = vmatprep.subr.mxu0 0.0
      %3238 = vmatpush1.msra.mxu0 0.0
      %3239 = vmatprep.subr.mxu0 0.0
      %3240 = vmatpush1.msra.mxu0 0.0
      %3241 = vmatprep.subr.mxu0 0.0
      %3242 = vmatpush1.msra.mxu0 0.0
      %3243 = vmatprep.subr.mxu0 0.0
      %3244 = vmatpush1.msra.mxu0 0.0
      %3245 = vmatprep.subr.mxu0 0.0
      %3246 = vmatpush1.msra.mxu0 0.0
      %3247 = vmatprep.subr.mxu0 0.0
      %3248 = vmatpush1.msra.mxu0 0.0
      %3249 = vmatprep.subr.mxu0 0.0
      %3250 = vmatpush1.msra.mxu0 0.0
      %3251 = vmatprep.subr.mxu0 0.0
      %3252 = vmatpush1.msra.mxu0 0.0
      %3253 = vmatprep.subr.mxu0 0.0
      %3254 = vmatpush1.msra.mxu0 0.0
      %3255 = vmatprep.subr.mxu0 0.0
      %3256 = vmatpush1.msra.mxu0 0.0
      %3257 = vmatprep.subr.mxu0 0.0
      %3258 = vmatpush1.msra.mxu0 0.0
      %3259 = vmatprep.subr.mxu0 0.0
      %3260 = vmatpush1.msra.mxu0 0.0
      %3261 = vmatprep.subr.mxu0 0.0
      %3262 = vmatpush1.msra.mxu0 0.0
      %3263 = vmatprep.subr.mxu0 0.0
      %3264 = vmatpush1.msra.mxu0 0.0
      %3265 = vmatprep.subr.mxu0 0.0
      %3266 = vmatpush1.msra.mxu0 0.0
      %3267 = vmatprep.subr.mxu0 0.0
      %3268 = vmatpush1.msra.mxu0 0.0
      %3269 = vmatprep.subr.mxu0 0.0
      %3270 = vmatpush1.msra.mxu0 0.0
      %3271 = vmatprep.subr.mxu0 0.0
      %3272 = vmatpush1.msra.mxu0 0.0
      %3273 = vmatprep.subr.mxu0 0.0
      %3274 = vmatpush1.msra.mxu0 0.0
      %3275 = vmatprep.subr.mxu0 0.0
      %3276 = vmatpush1.msra.mxu0 0.0
      %3277 = vmatprep.mubr.f32.mxu0 0.0
      %3278 = vmatmul.mubr.f32.gmra.mrb[0].mxu0 %v3118
      %v3279 = vpop.f32.mrb[0].mxu0
      %v3280 = vadd.f32 0.0, %v3279
      %v3281 = vpop.f32.mrb[0].mxu0
      %3282 = vmatprep.mubr.f32.mxu0 0.0
      %3283 = vmatmul.mubr.f32.gmra.mrb[0].mxu0 %v3121
      %v3284 = vpop.f32.mrb[0].mxu0
      %v3285 = vadd.f32 0.0, %v3284
      %v3286 = vpop.f32.mrb[0].mxu0
      %3287 = vmatprep.mubr.f32.mxu0 0.0
      %3288 = vmatmul.mubr.f32.gmra.mrb[0].mxu0 %v3124
      %v3289 = vpop.f32.mrb[0].mxu0
      %v3290 = vadd.f32 0.0, %v3289
      %v3291 = vpop.f32.mrb[0].mxu0
      %3292 = vmatprep.mubr.f32.mxu0 0.0
      %3293 = vmatmul.mubr.f32.gmra.mrb[0].mxu0 %v3127
      %v3294 = vpop.f32.mrb[0].mxu0
      %v3295 = vadd.f32 0.0, %v3294
      %v3296 = vpop.f32.mrb[0].mxu0
      %3297 = vmatprep.mubr.f32.mxu0 0.0
      %3298 = vmatmul.mubr.f32.gmra.mrb[0].mxu0 %v3130
      %v3299 = vpop.f32.mrb[0].mxu0
      %v3300 = vadd.f32 0.0, %v3299
      %v3301 = vpop.f32.mrb[0].mxu0
      %3302 = vmatprep.mubr.f32.mxu0 0.0
      %3303 = vmatmul.mubr.f32.gmra.mrb[0].mxu0 %v3133
      %v3304 = vpop.f32.mrb[0].mxu0
      %v3305 = vadd.f32 0.0, %v3304
      %v3306 = vpop.f32.mrb[0].mxu0
      %3307 = vmatprep.mubr.f32.mxu0 0.0
      %3308 = vmatmul.mubr.f32.gmra.mrb[0].mxu0 %v3136
      %v3309 = vpop.f32.mrb[0].mxu0
      %v3310 = vadd.f32 0.0, %v3309
      %v3311 = vpop.f32.mrb[0].mxu0
      %3312 = vmatprep.mubr.f32.mxu0 0.0
      %3313 = vmatmul.mubr.f32.gmra.mrb[0].mxu0 %v3139
      %v3314 = vpop.f32.mrb[0].mxu0
      %v3315 = vadd.f32 0.0, %v3314
      %v3316 = vpop.f32.mrb[0].mxu0
      %3317 = vmatprep.mubr.f32.mxu0 0.0
      %3318 = vmatmul.mubr.f32.gmra.mrb[0].mxu0 %v3142
      %v3319 = vpop.f32.mrb[0].mxu0
      %v3320 = vadd.f32 0.0, %v3319
      %v3321 = vpop.f32.mrb[0].mxu0
      %3322 = vmatprep.mubr.f32.mxu0 0.0
      %3323 = vmatmul.mubr.f32.gmra.mrb[0].mxu0 %v3145
      %v3324 = vpop.f32.mrb[0].mxu0
      %v3325 = vadd.f32 0.0, %v3324
      %v3326 = vpop.f32.mrb[0].mxu0
      %3327 = vmatprep.mubr.f32.mxu0 0.0
      %3328 = vmatmul.mubr.f32.gmra.mrb[0].mxu0 %v3148
      %v3329 = vpop.f32.mrb[0].mxu0
      %v3330 = vadd.f32 0.0, %v3329
      %v3331 = vpop.f32.mrb[0].mxu0
      %3332 = vmatprep.mubr.f32.mxu0 0.0
      %3333 = vmatmul.mubr.f32.gmra.mrb[0].mxu0 %v3151
      %v3334 = vpop.f32.mrb[0].mxu0
      %v3335 = vadd.f32 0.0, %v3334
      %v3336 = vpop.f32.mrb[0].mxu0
      %3337 = vmatprep.mubr.f32.mxu0 0.0
      %3338 = vmatmul.mubr.f32.gmra.mrb[0].mxu0 %v3154
      %v3339 = vpop.f32.mrb[0].mxu0
      %v3340 = vadd.f32 0.0, %v3339
      %v3341 = vpop.f32.mrb[0].mxu0
      %3342 = vmatprep.mubr.f32.mxu0 0.0
      %3343 = vmatmul.mubr.f32.gmra.mrb[0].mxu0 %v3157
      %v3344 = vpop.f32.mrb[0].mxu0
      %v3345 = vadd.f32 0.0, %v3344
      %v3346 = vpop.f32.mrb[0].mxu0
      %3347 = vmatprep.mubr.f32.mxu0 0.0
      %3348 = vmatmul.mubr.f32.gmra.mrb[0].mxu0 %v3160
      %v3349 = vpop.f32.mrb[0].mxu0
      %v3350 = vadd.f32 0.0, %v3349
      %v3351 = vpop.f32.mrb[0].mxu0
      %3352 = vmatprep.mubr.f32.mxu0 0.0
      %3353 = vmatmul.mubr.f32.gmra.mrb[0].mxu0 %v3163
      %v3354 = vpop.f32.mrb[0].mxu0
      %v3355 = vadd.f32 0.0, %v3354
      %v3356 = vpop.f32.mrb[0].mxu0
      %3357 = vmatprep.mubr.f32.mxu0 0.0
      %3358 = vmatmul.mubr.f32.gmra.mrb[0].mxu0 %v3166
      %v3359 = vpop.f32.mrb[0].mxu0
      %v3360 = vadd.f32 0.0, %v3359
      %v3361 = vpop.f32.mrb[0].mxu0
      %3362 = vmatprep.mubr.f32.mxu0 0.0
      %3363 = vmatmul.mubr.f32.gmra.mrb[0].mxu0 %v3169
      %v3364 = vpop.f32.mrb[0].mxu0
      %v3365 = vadd.f32 0.0, %v3364
      %v3366 = vpop.f32.mrb[0].mxu0
      %3367 = vmatprep.mubr.f32.mxu0 0.0
      %3368 = vmatmul.mubr.f32.gmra.mrb[0].mxu0 %v3172
      %v3369 = vpop.f32.mrb[0].mxu0
      %v3370 = vadd.f32 0.0, %v3369
      %v3371 = vpop.f32.mrb[0].mxu0
      %3372 = vmatprep.mubr.f32.mxu0 0.0
      %3373 = vmatmul.mubr.f32.gmra.mrb[0].mxu0 %v3175
      %v3374 = vpop.f32.mrb[0].mxu0
      %v3375 = vadd.f32 0.0, %v3374
      %v3376 = vpop.f32.mrb[0].mxu0
      %3377 = vmatprep.mubr.f32.mxu0 0.0
      %3378 = vmatmul.mubr.f32.gmra.mrb[0].mxu0 %v3178
      %v3379 = vpop.f32.mrb[0].mxu0
      %v3380 = vadd.f32 0.0, %v3379
      %v3381 = vpop.f32.mrb[0].mxu0
      %3382 = vmatprep.mubr.f32.mxu0 0.0
      %3383 = vmatmul.mubr.f32.gmra.mrb[0].mxu0 %v3181
      %v3384 = vpop.f32.mrb[0].mxu0
      %v3385 = vadd.f32 0.0, %v3384
      %v3386 = vpop.f32.mrb[0].mxu0
      %3387 = vmatprep.mubr.f32.mxu0 0.0
      %3388 = vmatmul.mubr.f32.gmra.mrb[0].mxu0 %v3184
      %v3389 = vpop.f32.mrb[0].mxu0
      %v3390 = vadd.f32 0.0, %v3389
      %v3391 = vpop.f32.mrb[0].mxu0
      %3392 = vmatprep.mubr.f32.mxu0 0.0
      %3393 = vmatmul.mubr.f32.gmra.mrb[0].mxu0 %v3187
      %v3394 = vpop.f32.mrb[0].mxu0
      %v3395 = vadd.f32 0.0, %v3394
      %v3396 = vpop.f32.mrb[0].mxu0
      %3397 = vmatprep.mubr.f32.mxu0 0.0
      %3398 = vmatmul.mubr.f32.gmra.mrb[0].mxu0 %v3190
      %v3399 = vpop.f32.mrb[0].mxu0
      %v3400 = vadd.f32 0.0, %v3399
      %v3401 = vpop.f32.mrb[0].mxu0
      %3402 = vmatprep.mubr.f32.mxu0 0.0
      %3403 = vmatmul.mubr.f32.gmra.mrb[0].mxu0 %v3193
      %v3404 = vpop.f32.mrb[0].mxu0
      %v3405 = vadd.f32 0.0, %v3404
      %v3406 = vpop.f32.mrb[0].mxu0
      %3407 = vmatprep.mubr.f32.mxu0 0.0
      %3408 = vmatmul.mubr.f32.gmra.mrb[0].mxu0 %v3196
      %v3409 = vpop.f32.mrb[0].mxu0
      %v3410 = vadd.f32 0.0, %v3409
      %v3411 = vpop.f32.mrb[0].mxu0
      %3412 = vmatprep.mubr.f32.mxu0 0.0
      %3413 = vmatmul.mubr.f32.gmra.mrb[0].mxu0 %v3199
      %v3414 = vpop.f32.mrb[0].mxu0
      %v3415 = vadd.f32 0.0, %v3414
      %v3416 = vpop.f32.mrb[0].mxu0
      %3417 = vmatprep.mubr.f32.mxu0 0.0
      %3418 = vmatmul.mubr.f32.gmra.mrb[0].mxu0 %v3202
      %v3419 = vpop.f32.mrb[0].mxu0
      %v3420 = vadd.f32 0.0, %v3419
      %v3421 = vpop.f32.mrb[0].mxu0
      %3422 = vmatprep.mubr.f32.mxu0 0.0
      %3423 = vmatmul.mubr.f32.gmra.mrb[0].mxu0 %v3205
      %v3424 = vpop.f32.mrb[0].mxu0
      %v3425 = vadd.f32 0.0, %v3424
      %v3426 = vpop.f32.mrb[0].mxu0
      %3427 = vmatprep.mubr.f32.mxu0 0.0
      %3428 = vmatmul.mubr.f32.gmra.mrb[0].mxu0 %v3208
      %v3429 = vpop.f32.mrb[0].mxu0
      %v3430 = vadd.f32 0.0, %v3429
      %v3431 = vpop.f32.mrb[0].mxu0
      %3432 = vmatprep.mubr.f32.mxu0 0.0
      %3433 = vmatmul.mubr.f32.gmra.mrb[0].mxu0 %v3211
      %v3434 = vpop.f32.mrb[0].mxu0
      %v3435 = vadd.f32 0.0, %v3434
      %v3436 = vpop.f32.mrb[0].mxu0
      %3437 = vdwg.mxu0
      %v3439 = vsel %vm314, %v3078, 0
      %v3442 = vsel %vm314, %v3079, 0
      %3444 = vmatprep.subr.mxu0 0.0
      %3445 = vmatpush1.msra.mxu0 %v3114
      %3446 = vmatprep.subr.mxu0 0.0
      %3447 = vmatpush1.msra.mxu0 0.0
      %3448 = vmatprep.subr.mxu0 0.0
      %3449 = vmatpush1.msra.mxu0 0.0
      %3450 = vmatprep.subr.mxu0 0.0
      %3451 = vmatpush1.msra.mxu0 0.0
      %3452 = vmatprep.subr.mxu0 0.0
      %3453 = vmatpush1.msra.mxu0 0.0
      %3454 = vmatprep.subr.mxu0 0.0
      %3455 = vmatpush1.msra.mxu0 0.0
      %3456 = vmatprep.subr.mxu0 0.0
      %3457 = vmatpush1.msra.mxu0 0.0
      %3458 = vmatprep.subr.mxu0 0.0
      %3459 = vmatpush1.msra.mxu0 0.0
      %3460 = vmatprep.subr.mxu0 0.0
      %3461 = vmatpush1.msra.mxu0 0.0
      %3462 = vmatprep.subr.mxu0 0.0
      %3463 = vmatpush1.msra.mxu0 0.0
      %3464 = vmatprep.subr.mxu0 0.0
      %3465 = vmatpush1.msra.mxu0 0.0
      %3466 = vmatprep.subr.mxu0 0.0
      %3467 = vmatpush1.msra.mxu0 0.0
      %3468 = vmatprep.subr.mxu0 0.0
      %3469 = vmatpush1.msra.mxu0 0.0
      %3470 = vmatprep.subr.mxu0 0.0
      %3471 = vmatpush1.msra.mxu0 0.0
      %3472 = vmatprep.subr.mxu0 0.0
      %3473 = vmatpush1.msra.mxu0 0.0
      %3474 = vmatprep.subr.mxu0 0.0
      %3475 = vmatpush1.msra.mxu0 0.0
      %3476 = vmatprep.subr.mxu0 0.0
      %3477 = vmatpush1.msra.mxu0 0.0
      %3478 = vmatprep.subr.mxu0 0.0
      %3479 = vmatpush1.msra.mxu0 0.0
      %3480 = vmatprep.subr.mxu0 0.0
      %3481 = vmatpush1.msra.mxu0 0.0
      %3482 = vmatprep.subr.mxu0 0.0
      %3483 = vmatpush1.msra.mxu0 0.0
      %3484 = vmatprep.subr.mxu0 0.0
      %3485 = vmatpush1.msra.mxu0 0.0
      %3486 = vmatprep.subr.mxu0 0.0
      %3487 = vmatpush1.msra.mxu0 0.0
      %3488 = vmatprep.subr.mxu0 0.0
      %3489 = vmatpush1.msra.mxu0 0.0
      %3490 = vmatprep.subr.mxu0 0.0
      %3491 = vmatpush1.msra.mxu0 0.0
      %3492 = vmatprep.subr.mxu0 0.0
      %3493 = vmatpush1.msra.mxu0 0.0
      %3494 = vmatprep.subr.mxu0 0.0
      %3495 = vmatpush1.msra.mxu0 0.0
      %3496 = vmatprep.subr.mxu0 0.0
      %3497 = vmatpush1.msra.mxu0 0.0
      %3498 = vmatprep.subr.mxu0 0.0
      %3499 = vmatpush1.msra.mxu0 0.0
      %3500 = vmatprep.subr.mxu0 0.0
      %3501 = vmatpush1.msra.mxu0 0.0
      %3502 = vmatprep.subr.mxu0 0.0
      %3503 = vmatpush1.msra.mxu0 0.0
      %3504 = vmatprep.subr.mxu0 0.0
      %3505 = vmatpush1.msra.mxu0 0.0
      %3506 = vmatprep.subr.mxu0 0.0
      %3507 = vmatpush1.msra.mxu0 0.0
      %3508 = vmatprep.mubr.f32.mxu0 0.0
      %3509 = vmatmul.mubr.f32.gmra.mrb[0].mxu0 %v3439
      %v3510 = vpop.f32.mrb[0].mxu0
      %v3511 = vadd.f32 %v3280, %v3510
      %v3512 = vpop.f32.mrb[0].mxu0
      %3513 = vmatprep.mubr.f32.mxu0 0.0
      %3514 = vmatmul.mubr.f32.gmra.mrb[0].mxu0 %v3442
      %v3515 = vpop.f32.mrb[0].mxu0
      %v3516 = vadd.f32 %v3285, %v3515
      %v3517 = vpop.f32.mrb[0].mxu0
      %3518 = vmatprep.mubr.f32.mxu0 0.0
      %3519 = vmatmul.mubr.f32.gmra.mrb[0].mxu0 %v3118
      %v3520 = vpop.f32.mrb[0].mxu0
      %v3521 = vadd.f32 %v3290, %v3520
      %v3522 = vpop.f32.mrb[0].mxu0
      %3523 = vmatprep.mubr.f32.mxu0 0.0
      %3524 = vmatmul.mubr.f32.gmra.mrb[0].mxu0 %v3121
      %v3525 = vpop.f32.mrb[0].mxu0
      %v3526 = vadd.f32 %v3295, %v3525
      %v3527 = vpop.f32.mrb[0].mxu0
      %3528 = vmatprep.mubr.f32.mxu0 0.0
      %3529 = vmatmul.mubr.f32.gmra.mrb[0].mxu0 %v3124
      %v3530 = vpop.f32.mrb[0].mxu0
      %v3531 = vadd.f32 %v3300, %v3530
      %v3532 = vpop.f32.mrb[0].mxu0
      %3533 = vmatprep.mubr.f32.mxu0 0.0
      %3534 = vmatmul.mubr.f32.gmra.mrb[0].mxu0 %v3127
      %v3535 = vpop.f32.mrb[0].mxu0
      %v3536 = vadd.f32 %v3305, %v3535
      %v3537 = vpop.f32.mrb[0].mxu0
      %3538 = vmatprep.mubr.f32.mxu0 0.0
      %3539 = vmatmul.mubr.f32.gmra.mrb[0].mxu0 %v3130
      %v3540 = vpop.f32.mrb[0].mxu0
      %v3541 = vadd.f32 %v3310, %v3540
      %v3542 = vpop.f32.mrb[0].mxu0
      %3543 = vmatprep.mubr.f32.mxu0 0.0
      %3544 = vmatmul.mubr.f32.gmra.mrb[0].mxu0 %v3133
      %v3545 = vpop.f32.mrb[0].mxu0
      %v3546 = vadd.f32 %v3315, %v3545
      %v3547 = vpop.f32.mrb[0].mxu0
      %3548 = vmatprep.mubr.f32.mxu0 0.0
      %3549 = vmatmul.mubr.f32.gmra.mrb[0].mxu0 %v3136
      %v3550 = vpop.f32.mrb[0].mxu0
      %v3551 = vadd.f32 %v3320, %v3550
      %v3552 = vpop.f32.mrb[0].mxu0
      %3553 = vmatprep.mubr.f32.mxu0 0.0
      %3554 = vmatmul.mubr.f32.gmra.mrb[0].mxu0 %v3139
      %v3555 = vpop.f32.mrb[0].mxu0
      %v3556 = vadd.f32 %v3325, %v3555
      %v3557 = vpop.f32.mrb[0].mxu0
      %3558 = vmatprep.mubr.f32.mxu0 0.0
      %3559 = vmatmul.mubr.f32.gmra.mrb[0].mxu0 %v3142
      %v3560 = vpop.f32.mrb[0].mxu0
      %v3561 = vadd.f32 %v3330, %v3560
      %v3562 = vpop.f32.mrb[0].mxu0
      %3563 = vmatprep.mubr.f32.mxu0 0.0
      %3564 = vmatmul.mubr.f32.gmra.mrb[0].mxu0 %v3145
      %v3565 = vpop.f32.mrb[0].mxu0
      %v3566 = vadd.f32 %v3335, %v3565
      %v3567 = vpop.f32.mrb[0].mxu0
      %3568 = vmatprep.mubr.f32.mxu0 0.0
      %3569 = vmatmul.mubr.f32.gmra.mrb[0].mxu0 %v3148
      %v3570 = vpop.f32.mrb[0].mxu0
      %v3571 = vadd.f32 %v3340, %v3570
      %v3572 = vpop.f32.mrb[0].mxu0
      %3573 = vmatprep.mubr.f32.mxu0 0.0
      %3574 = vmatmul.mubr.f32.gmra.mrb[0].mxu0 %v3151
      %v3575 = vpop.f32.mrb[0].mxu0
      %v3576 = vadd.f32 %v3345, %v3575
      %v3577 = vpop.f32.mrb[0].mxu0
      %3578 = vmatprep.mubr.f32.mxu0 0.0
      %3579 = vmatmul.mubr.f32.gmra.mrb[0].mxu0 %v3154
      %v3580 = vpop.f32.mrb[0].mxu0
      %v3581 = vadd.f32 %v3350, %v3580
      %v3582 = vpop.f32.mrb[0].mxu0
      %3583 = vmatprep.mubr.f32.mxu0 0.0
      %3584 = vmatmul.mubr.f32.gmra.mrb[0].mxu0 %v3157
      %v3585 = vpop.f32.mrb[0].mxu0
      %v3586 = vadd.f32 %v3355, %v3585
      %v3587 = vpop.f32.mrb[0].mxu0
      %3588 = vmatprep.mubr.f32.mxu0 0.0
      %3589 = vmatmul.mubr.f32.gmra.mrb[0].mxu0 %v3160
      %v3590 = vpop.f32.mrb[0].mxu0
      %v3591 = vadd.f32 %v3360, %v3590
      %v3592 = vpop.f32.mrb[0].mxu0
      %3593 = vmatprep.mubr.f32.mxu0 0.0
      %3594 = vmatmul.mubr.f32.gmra.mrb[0].mxu0 %v3163
      %v3595 = vpop.f32.mrb[0].mxu0
      %v3596 = vadd.f32 %v3365, %v3595
      %v3597 = vpop.f32.mrb[0].mxu0
      %3598 = vmatprep.mubr.f32.mxu0 0.0
      %3599 = vmatmul.mubr.f32.gmra.mrb[0].mxu0 %v3166
      %v3600 = vpop.f32.mrb[0].mxu0
      %v3601 = vadd.f32 %v3370, %v3600
      %v3602 = vpop.f32.mrb[0].mxu0
      %3603 = vmatprep.mubr.f32.mxu0 0.0
      %3604 = vmatmul.mubr.f32.gmra.mrb[0].mxu0 %v3169
      %v3605 = vpop.f32.mrb[0].mxu0
      %v3606 = vadd.f32 %v3375, %v3605
      %v3607 = vpop.f32.mrb[0].mxu0
      %3608 = vmatprep.mubr.f32.mxu0 0.0
      %3609 = vmatmul.mubr.f32.gmra.mrb[0].mxu0 %v3172
      %v3610 = vpop.f32.mrb[0].mxu0
      %v3611 = vadd.f32 %v3380, %v3610
      %v3612 = vpop.f32.mrb[0].mxu0
      %3613 = vmatprep.mubr.f32.mxu0 0.0
      %3614 = vmatmul.mubr.f32.gmra.mrb[0].mxu0 %v3175
      %v3615 = vpop.f32.mrb[0].mxu0
      %v3616 = vadd.f32 %v3385, %v3615
      %v3617 = vpop.f32.mrb[0].mxu0
      %3618 = vmatprep.mubr.f32.mxu0 0.0
      %3619 = vmatmul.mubr.f32.gmra.mrb[0].mxu0 %v3178
      %v3620 = vpop.f32.mrb[0].mxu0
      %v3621 = vadd.f32 %v3390, %v3620
      %v3622 = vpop.f32.mrb[0].mxu0
      %3623 = vmatprep.mubr.f32.mxu0 0.0
      %3624 = vmatmul.mubr.f32.gmra.mrb[0].mxu0 %v3181
      %v3625 = vpop.f32.mrb[0].mxu0
      %v3626 = vadd.f32 %v3395, %v3625
      %v3627 = vpop.f32.mrb[0].mxu0
      %3628 = vmatprep.mubr.f32.mxu0 0.0
      %3629 = vmatmul.mubr.f32.gmra.mrb[0].mxu0 %v3184
      %v3630 = vpop.f32.mrb[0].mxu0
      %v3631 = vadd.f32 %v3400, %v3630
      %v3632 = vpop.f32.mrb[0].mxu0
      %3633 = vmatprep.mubr.f32.mxu0 0.0
      %3634 = vmatmul.mubr.f32.gmra.mrb[0].mxu0 %v3187
      %v3635 = vpop.f32.mrb[0].mxu0
      %v3636 = vadd.f32 %v3405, %v3635
      %v3637 = vpop.f32.mrb[0].mxu0
      %3638 = vmatprep.mubr.f32.mxu0 0.0
      %3639 = vmatmul.mubr.f32.gmra.mrb[0].mxu0 %v3190
      %v3640 = vpop.f32.mrb[0].mxu0
      %v3641 = vadd.f32 %v3410, %v3640
      %v3642 = vpop.f32.mrb[0].mxu0
      %3643 = vmatprep.mubr.f32.mxu0 0.0
      %3644 = vmatmul.mubr.f32.gmra.mrb[0].mxu0 %v3193
      %v3645 = vpop.f32.mrb[0].mxu0
      %v3646 = vadd.f32 %v3415, %v3645
      %v3647 = vpop.f32.mrb[0].mxu0
      %3648 = vmatprep.mubr.f32.mxu0 0.0
      %3649 = vmatmul.mubr.f32.gmra.mrb[0].mxu0 %v3196
      %v3650 = vpop.f32.mrb[0].mxu0
      %v3651 = vadd.f32 %v3420, %v3650
      %v3652 = vpop.f32.mrb[0].mxu0
      %3653 = vmatprep.mubr.f32.mxu0 0.0
      %3654 = vmatmul.mubr.f32.gmra.mrb[0].mxu0 %v3199
      %v3655 = vpop.f32.mrb[0].mxu0
      %v3656 = vadd.f32 %v3425, %v3655
      %v3657 = vpop.f32.mrb[0].mxu0
      %3658 = vmatprep.mubr.f32.mxu0 0.0
      %3659 = vmatmul.mubr.f32.gmra.mrb[0].mxu0 %v3202
      %v3660 = vpop.f32.mrb[0].mxu0
      %v3661 = vadd.f32 %v3430, %v3660
      %v3662 = vpop.f32.mrb[0].mxu0
      %3663 = vmatprep.mubr.f32.mxu0 0.0
      %3664 = vmatmul.mubr.f32.gmra.mrb[0].mxu0 %v3205
      %v3665 = vpop.f32.mrb[0].mxu0
      %v3666 = vadd.f32 %v3435, %v3665
      %v3667 = vpop.f32.mrb[0].mxu0
      %3668 = vdwg.mxu0
      %s3669 = scalar_lea.vmem %s3, 48
      %v3670 = vld [vmem:[%s3669] sm:$0xff]
      %v3672 = vsel %vm314, %v3112, 0
      %v3675 = vsel %vm314, %v3113, 0
      %3677 = vmatprep.subr.mxu0 0.0
      %3678 = vmatpush1.msra.mxu0 %v3670
      %3679 = vmatprep.subr.mxu0 0.0
      %3680 = vmatpush1.msra.mxu0 0.0
      %3681 = vmatprep.subr.mxu0 0.0
      %3682 = vmatpush1.msra.mxu0 0.0
      %3683 = vmatprep.subr.mxu0 0.0
      %3684 = vmatpush1.msra.mxu0 0.0
      %3685 = vmatprep.subr.mxu0 0.0
      %3686 = vmatpush1.msra.mxu0 0.0
      %3687 = vmatprep.subr.mxu0 0.0
      %3688 = vmatpush1.msra.mxu0 0.0
      %3689 = vmatprep.subr.mxu0 0.0
      %3690 = vmatpush1.msra.mxu0 0.0
      %3691 = vmatprep.subr.mxu0 0.0
      %3692 = vmatpush1.msra.mxu0 0.0
      %3693 = vmatprep.subr.mxu0 0.0
      %3694 = vmatpush1.msra.mxu0 0.0
      %3695 = vmatprep.subr.mxu0 0.0
      %3696 = vmatpush1.msra.mxu0 0.0
      %3697 = vmatprep.subr.mxu0 0.0
      %3698 = vmatpush1.msra.mxu0 0.0
      %3699 = vmatprep.subr.mxu0 0.0
      %3700 = vmatpush1.msra.mxu0 0.0
      %3701 = vmatprep.subr.mxu0 0.0
      %3702 = vmatpush1.msra.mxu0 0.0
      %3703 = vmatprep.subr.mxu0 0.0
      %3704 = vmatpush1.msra.mxu0 0.0
      %3705 = vmatprep.subr.mxu0 0.0
      %3706 = vmatpush1.msra.mxu0 0.0
      %3707 = vmatprep.subr.mxu0 0.0
      %3708 = vmatpush1.msra.mxu0 0.0
      %3709 = vmatprep.subr.mxu0 0.0
      %3710 = vmatpush1.msra.mxu0 0.0
      %3711 = vmatprep.subr.mxu0 0.0
      %3712 = vmatpush1.msra.mxu0 0.0
      %3713 = vmatprep.subr.mxu0 0.0
      %3714 = vmatpush1.msra.mxu0 0.0
      %3715 = vmatprep.subr.mxu0 0.0
      %3716 = vmatpush1.msra.mxu0 0.0
      %3717 = vmatprep.subr.mxu0 0.0
      %3718 = vmatpush1.msra.mxu0 0.0
      %3719 = vmatprep.subr.mxu0 0.0
      %3720 = vmatpush1.msra.mxu0 0.0
      %3721 = vmatprep.subr.mxu0 0.0
      %3722 = vmatpush1.msra.mxu0 0.0
      %3723 = vmatprep.subr.mxu0 0.0
      %3724 = vmatpush1.msra.mxu0 0.0
      %3725 = vmatprep.subr.mxu0 0.0
      %3726 = vmatpush1.msra.mxu0 0.0
      %3727 = vmatprep.subr.mxu0 0.0
      %3728 = vmatpush1.msra.mxu0 0.0
      %3729 = vmatprep.subr.mxu0 0.0
      %3730 = vmatpush1.msra.mxu0 0.0
      %3731 = vmatprep.subr.mxu0 0.0
      %3732 = vmatpush1.msra.mxu0 0.0
      %3733 = vmatprep.subr.mxu0 0.0
      %3734 = vmatpush1.msra.mxu0 0.0
      %3735 = vmatprep.subr.mxu0 0.0
      %3736 = vmatpush1.msra.mxu0 0.0
      %3737 = vmatprep.subr.mxu0 0.0
      %3738 = vmatpush1.msra.mxu0 0.0
      %3739 = vmatprep.subr.mxu0 0.0
      %3740 = vmatpush1.msra.mxu0 0.0
      %3741 = vmatprep.mubr.f32.mxu0 0.0
      %3742 = vmatmul.mubr.f32.gmra.mrb[0].mxu0 %v3124
      %v3743 = vpop.f32.mrb[0].mxu0
      %v3744 = vadd.f32 0.0, %v3743
      %v3745 = vpop.f32.mrb[0].mxu0
      %3746 = vmatprep.mubr.f32.mxu0 0.0
      %3747 = vmatmul.mubr.f32.gmra.mrb[0].mxu0 %v3127
      %v3748 = vpop.f32.mrb[0].mxu0
      %v3749 = vadd.f32 0.0, %v3748
      %v3750 = vpop.f32.mrb[0].mxu0
      %3751 = vmatprep.mubr.f32.mxu0 0.0
      %3752 = vmatmul.mubr.f32.gmra.mrb[0].mxu0 %v3130
      %v3753 = vpop.f32.mrb[0].mxu0
      %v3754 = vadd.f32 0.0, %v3753
      %v3755 = vpop.f32.mrb[0].mxu0
      %3756 = vmatprep.mubr.f32.mxu0 0.0
      %3757 = vmatmul.mubr.f32.gmra.mrb[0].mxu0 %v3133
      %v3758 = vpop.f32.mrb[0].mxu0
      %v3759 = vadd.f32 0.0, %v3758
      %v3760 = vpop.f32.mrb[0].mxu0
      %3761 = vmatprep.mubr.f32.mxu0 0.0
      %3762 = vmatmul.mubr.f32.gmra.mrb[0].mxu0 %v3136
      %v3763 = vpop.f32.mrb[0].mxu0
      %v3764 = vadd.f32 0.0, %v3763
      %v3765 = vpop.f32.mrb[0].mxu0
      %3766 = vmatprep.mubr.f32.mxu0 0.0
      %3767 = vmatmul.mubr.f32.gmra.mrb[0].mxu0 %v3139
      %v3768 = vpop.f32.mrb[0].mxu0
      %v3769 = vadd.f32 0.0, %v3768
      %v3770 = vpop.f32.mrb[0].mxu0
      %3771 = vmatprep.mubr.f32.mxu0 0.0
      %3772 = vmatmul.mubr.f32.gmra.mrb[0].mxu0 %v3142
      %v3773 = vpop.f32.mrb[0].mxu0
      %v3774 = vadd.f32 0.0, %v3773
      %v3775 = vpop.f32.mrb[0].mxu0
      %3776 = vmatprep.mubr.f32.mxu0 0.0
      %3777 = vmatmul.mubr.f32.gmra.mrb[0].mxu0 %v3145
      %v3778 = vpop.f32.mrb[0].mxu0
      %v3779 = vadd.f32 0.0, %v3778
      %v3780 = vpop.f32.mrb[0].mxu0
      %3781 = vmatprep.mubr.f32.mxu0 0.0
      %3782 = vmatmul.mubr.f32.gmra.mrb[0].mxu0 %v3148
      %v3783 = vpop.f32.mrb[0].mxu0
      %v3784 = vadd.f32 0.0, %v3783
      %v3785 = vpop.f32.mrb[0].mxu0
      %3786 = vmatprep.mubr.f32.mxu0 0.0
      %3787 = vmatmul.mubr.f32.gmra.mrb[0].mxu0 %v3151
      %v3788 = vpop.f32.mrb[0].mxu0
      %v3789 = vadd.f32 0.0, %v3788
      %v3790 = vpop.f32.mrb[0].mxu0
      %3791 = vmatprep.mubr.f32.mxu0 0.0
      %3792 = vmatmul.mubr.f32.gmra.mrb[0].mxu0 %v3154
      %v3793 = vpop.f32.mrb[0].mxu0
      %v3794 = vadd.f32 0.0, %v3793
      %v3795 = vpop.f32.mrb[0].mxu0
      %3796 = vmatprep.mubr.f32.mxu0 0.0
      %3797 = vmatmul.mubr.f32.gmra.mrb[0].mxu0 %v3157
      %v3798 = vpop.f32.mrb[0].mxu0
      %v3799 = vadd.f32 0.0, %v3798
      %v3800 = vpop.f32.mrb[0].mxu0
      %3801 = vmatprep.mubr.f32.mxu0 0.0
      %3802 = vmatmul.mubr.f32.gmra.mrb[0].mxu0 %v3160
      %v3803 = vpop.f32.mrb[0].mxu0
      %v3804 = vadd.f32 0.0, %v3803
      %v3805 = vpop.f32.mrb[0].mxu0
      %3806 = vmatprep.mubr.f32.mxu0 0.0
      %3807 = vmatmul.mubr.f32.gmra.mrb[0].mxu0 %v3163
      %v3808 = vpop.f32.mrb[0].mxu0
      %v3809 = vadd.f32 0.0, %v3808
      %v3810 = vpop.f32.mrb[0].mxu0
      %3811 = vmatprep.mubr.f32.mxu0 0.0
      %3812 = vmatmul.mubr.f32.gmra.mrb[0].mxu0 %v3166
      %v3813 = vpop.f32.mrb[0].mxu0
      %v3814 = vadd.f32 0.0, %v3813
      %v3815 = vpop.f32.mrb[0].mxu0
      %3816 = vmatprep.mubr.f32.mxu0 0.0
      %3817 = vmatmul.mubr.f32.gmra.mrb[0].mxu0 %v3169
      %v3818 = vpop.f32.mrb[0].mxu0
      %v3819 = vadd.f32 0.0, %v3818
      %v3820 = vpop.f32.mrb[0].mxu0
      %3821 = vmatprep.mubr.f32.mxu0 0.0
      %3822 = vmatmul.mubr.f32.gmra.mrb[0].mxu0 %v3172
      %v3823 = vpop.f32.mrb[0].mxu0
      %v3824 = vadd.f32 0.0, %v3823
      %v3825 = vpop.f32.mrb[0].mxu0
      %3826 = vmatprep.mubr.f32.mxu0 0.0
      %3827 = vmatmul.mubr.f32.gmra.mrb[0].mxu0 %v3175
      %v3828 = vpop.f32.mrb[0].mxu0
      %v3829 = vadd.f32 0.0, %v3828
      %v3830 = vpop.f32.mrb[0].mxu0
      %3831 = vmatprep.mubr.f32.mxu0 0.0
      %3832 = vmatmul.mubr.f32.gmra.mrb[0].mxu0 %v3178
      %v3833 = vpop.f32.mrb[0].mxu0
      %v3834 = vadd.f32 0.0, %v3833
      %v3835 = vpop.f32.mrb[0].mxu0
      %3836 = vmatprep.mubr.f32.mxu0 0.0
      %3837 = vmatmul.mubr.f32.gmra.mrb[0].mxu0 %v3181
      %v3838 = vpop.f32.mrb[0].mxu0
      %v3839 = vadd.f32 0.0, %v3838
      %v3840 = vpop.f32.mrb[0].mxu0
      %3841 = vmatprep.mubr.f32.mxu0 0.0
      %3842 = vmatmul.mubr.f32.gmra.mrb[0].mxu0 %v3184
      %v3843 = vpop.f32.mrb[0].mxu0
      %v3844 = vadd.f32 0.0, %v3843
      %v3845 = vpop.f32.mrb[0].mxu0
      %3846 = vmatprep.mubr.f32.mxu0 0.0
      %3847 = vmatmul.mubr.f32.gmra.mrb[0].mxu0 %v3187
      %v3848 = vpop.f32.mrb[0].mxu0
      %v3849 = vadd.f32 0.0, %v3848
      %v3850 = vpop.f32.mrb[0].mxu0
      %3851 = vmatprep.mubr.f32.mxu0 0.0
      %3852 = vmatmul.mubr.f32.gmra.mrb[0].mxu0 %v3190
      %v3853 = vpop.f32.mrb[0].mxu0
      %v3854 = vadd.f32 0.0, %v3853
      %v3855 = vpop.f32.mrb[0].mxu0
      %3856 = vmatprep.mubr.f32.mxu0 0.0
      %3857 = vmatmul.mubr.f32.gmra.mrb[0].mxu0 %v3193
      %v3858 = vpop.f32.mrb[0].mxu0
      %v3859 = vadd.f32 0.0, %v3858
      %v3860 = vpop.f32.mrb[0].mxu0
      %3861 = vmatprep.mubr.f32.mxu0 0.0
      %3862 = vmatmul.mubr.f32.gmra.mrb[0].mxu0 %v3196
      %v3863 = vpop.f32.mrb[0].mxu0
      %v3864 = vadd.f32 0.0, %v3863
      %v3865 = vpop.f32.mrb[0].mxu0
      %3866 = vmatprep.mubr.f32.mxu0 0.0
      %3867 = vmatmul.mubr.f32.gmra.mrb[0].mxu0 %v3199
      %v3868 = vpop.f32.mrb[0].mxu0
      %v3869 = vadd.f32 0.0, %v3868
      %v3870 = vpop.f32.mrb[0].mxu0
      %3871 = vmatprep.mubr.f32.mxu0 0.0
      %3872 = vmatmul.mubr.f32.gmra.mrb[0].mxu0 %v3202
      %v3873 = vpop.f32.mrb[0].mxu0
      %v3874 = vadd.f32 0.0, %v3873
      %v3875 = vpop.f32.mrb[0].mxu0
      %3876 = vmatprep.mubr.f32.mxu0 0.0
      %3877 = vmatmul.mubr.f32.gmra.mrb[0].mxu0 %v3205
      %v3878 = vpop.f32.mrb[0].mxu0
      %v3879 = vadd.f32 0.0, %v3878
      %v3880 = vpop.f32.mrb[0].mxu0
      %3881 = vmatprep.mubr.f32.mxu0 0.0
      %3882 = vmatmul.mubr.f32.gmra.mrb[0].mxu0 %v3208
      %v3883 = vpop.f32.mrb[0].mxu0
      %v3884 = vadd.f32 0.0, %v3883
      %v3885 = vpop.f32.mrb[0].mxu0
      %3886 = vmatprep.mubr.f32.mxu0 0.0
      %3887 = vmatmul.mubr.f32.gmra.mrb[0].mxu0 %v3211
      %v3888 = vpop.f32.mrb[0].mxu0
      %v3889 = vadd.f32 0.0, %v3888
      %v3890 = vpop.f32.mrb[0].mxu0
      %3891 = vmatprep.mubr.f32.mxu0 0.0
      %3892 = vmatmul.mubr.f32.gmra.mrb[0].mxu0 %v3672
      %v3893 = vpop.f32.mrb[0].mxu0
      %v3894 = vadd.f32 0.0, %v3893
      %v3895 = vpop.f32.mrb[0].mxu0
      %3896 = vmatprep.mubr.f32.mxu0 0.0
      %3897 = vmatmul.mubr.f32.gmra.mrb[0].mxu0 %v3675
      %v3898 = vpop.f32.mrb[0].mxu0
      %v3899 = vadd.f32 0.0, %v3898
      %v3900 = vpop.f32.mrb[0].mxu0
      %3901 = vdwg.mxu0
      %v3902 = vadd.f32 %v3511, %v3744
      %v3903 = vadd.f32 %v3516, %v3749
      %v3904 = vadd.f32 %v3521, %v3754
      %v3905 = vadd.f32 %v3526, %v3759
      %v3906 = vadd.f32 %v3531, %v3764
      %v3907 = vadd.f32 %v3536, %v3769
      %v3908 = vadd.f32 %v3541, %v3774
      %v3909 = vadd.f32 %v3546, %v3779
      %v3910 = vadd.f32 %v3551, %v3784
      %v3911 = vadd.f32 %v3556, %v3789
      %v3912 = vadd.f32 %v3561, %v3794
      %v3913 = vadd.f32 %v3566, %v3799
      %v3914 = vadd.f32 %v3571, %v3804
      %v3915 = vadd.f32 %v3576, %v3809
      %v3916 = vadd.f32 %v3581, %v3814
      %v3917 = vadd.f32 %v3586, %v3819
      %v3918 = vadd.f32 %v3591, %v3824
      %v3919 = vadd.f32 %v3596, %v3829
      %v3920 = vadd.f32 %v3601, %v3834
      %v3921 = vadd.f32 %v3606, %v3839
      %v3922 = vadd.f32 %v3611, %v3844
      %v3923 = vadd.f32 %v3616, %v3849
      %v3924 = vadd.f32 %v3621, %v3854
      %v3925 = vadd.f32 %v3626, %v3859
      %v3926 = vadd.f32 %v3631, %v3864
      %v3927 = vadd.f32 %v3636, %v3869
      %v3928 = vadd.f32 %v3641, %v3874
      %v3929 = vadd.f32 %v3646, %v3879
      %v3930 = vadd.f32 %v3651, %v3884
      %v3931 = vadd.f32 %v3656, %v3889
      %v3932 = vadd.f32 %v3661, %v3894
      %v3933 = vadd.f32 %v3666, %v3899
      %v3934 = vld [vmem:[#allocation2 + $0x1] sm:$0xff]
      %v3935 = vld [vmem:[#allocation2 + $0x9] sm:$0xff]
      %v3936 = vld [vmem:[#allocation2 + $0x19] sm:$0xff]
      %v3937 = vld [vmem:[#allocation2 + $0x21] sm:$0xff]
      %v3938 = vld [vmem:[#allocation2 + $0x31] sm:$0xff]
      %v3939 = vld [vmem:[#allocation2 + $0x39] sm:$0xff]
      %v3940 = vld [vmem:[#allocation2 + $0x49] sm:$0xff]
      %v3941 = vld [vmem:[#allocation2 + $0x51] sm:$0xff]
      %v3942 = vld [vmem:[#allocation2 + $0x61] sm:$0xff]
      %v3943 = vld [vmem:[#allocation2 + $0x69] sm:$0xff]
      %v3944 = vld [vmem:[#allocation2 + $0x79] sm:$0xff]
      %v3945 = vld [vmem:[#allocation2 + $0x81] sm:$0xff]
      %v3946 = vld [vmem:[#allocation2 + $0x91] sm:$0xff]
      %v3947 = vld [vmem:[#allocation2 + $0x99] sm:$0xff]
      %v3948 = vld [vmem:[#allocation2 + $0xa9] sm:$0xff]
      %v3949 = vld [vmem:[#allocation2 + $0xb1] sm:$0xff]
      %v3950 = vld [vmem:[#allocation2 + $0xc1] sm:$0xff]
      %v3951 = vld [vmem:[#allocation2 + $0xc9] sm:$0xff]
      %v3952 = vld [vmem:[#allocation2 + $0xd9] sm:$0xff]
      %v3953 = vld [vmem:[#allocation2 + $0xe1] sm:$0xff]
      %v3954 = vld [vmem:[#allocation2 + $0xf1] sm:$0xff]
      %v3955 = vld [vmem:[#allocation2 + $0xf9] sm:$0xff]
      %v3956 = vld [vmem:[#allocation2 + $0x109] sm:$0xff]
      %v3957 = vld [vmem:[#allocation2 + $0x111] sm:$0xff]
      %v3958 = vld [vmem:[#allocation2 + $0x121] sm:$0xff]
      %v3959 = vld [vmem:[#allocation2 + $0x129] sm:$0xff]
      %v3960 = vld [vmem:[#allocation2 + $0x139] sm:$0xff]
      %v3961 = vld [vmem:[#allocation2 + $0x141] sm:$0xff]
      %v3962 = vld [vmem:[#allocation2 + $0x151] sm:$0xff]
      %v3963 = vld [vmem:[#allocation2 + $0x159] sm:$0xff]
      %v3964 = vld [vmem:[#allocation2 + $0x169] sm:$0xff]
      %v3965 = vld [vmem:[#allocation2 + $0x171] sm:$0xff]
      %v3966 = vld [vmem:[#allocation2 + $0x181] sm:$0xff]
      %v3967 = vld [vmem:[#allocation2 + $0x189] sm:$0xff]
      %v3968 = vld [vmem:[#allocation2 + $0x199] sm:$0xff]
      %v3969 = vld [vmem:[#allocation2 + $0x1a1] sm:$0xff]
      %s3970 = scalar_lea.vmem %s3, 8
      %v3971 = vld [vmem:[%s3970] sm:$0xff]
      %v3973 = vsel %vm314, %v3934, 0
      %v3976 = vsel %vm314, %v3935, 0
      %v3979 = vsel %vm314, %v3936, 0
      %v3982 = vsel %vm314, %v3937, 0
      %v3985 = vsel %vm314, %v3938, 0
      %v3988 = vsel %vm314, %v3939, 0
      %v3991 = vsel %vm314, %v3940, 0
      %v3994 = vsel %vm314, %v3941, 0
      %v3997 = vsel %vm314, %v3942, 0
      %v4000 = vsel %vm314, %v3943, 0
      %v4003 = vsel %vm314, %v3944, 0
      %v4006 = vsel %vm314, %v3945, 0
      %v4009 = vsel %vm314, %v3946, 0
      %v4012 = vsel %vm314, %v3947, 0
      %v4015 = vsel %vm314, %v3948, 0
      %v4018 = vsel %vm314, %v3949, 0
      %v4021 = vsel %vm314, %v3950, 0
      %v4024 = vsel %vm314, %v3951, 0
      %v4027 = vsel %vm314, %v3952, 0
      %v4030 = vsel %vm314, %v3953, 0
      %v4033 = vsel %vm314, %v3954, 0
      %v4036 = vsel %vm314, %v3955, 0
      %v4039 = vsel %vm314, %v3956, 0
      %v4042 = vsel %vm314, %v3957, 0
      %v4045 = vsel %vm314, %v3958, 0
      %v4048 = vsel %vm314, %v3959, 0
      %v4051 = vsel %vm314, %v3960, 0
      %v4054 = vsel %vm314, %v3961, 0
      %v4057 = vsel %vm314, %v3962, 0
      %v4060 = vsel %vm314, %v3963, 0
      %v4063 = vsel %vm314, %v3964, 0
      %v4066 = vsel %vm314, %v3965, 0
      %4068 = vmatprep.subr.mxu0 0.0
      %4069 = vmatpush1.msra.mxu0 %v3971
      %4070 = vmatprep.subr.mxu0 0.0
      %4071 = vmatpush1.msra.mxu0 0.0
      %4072 = vmatprep.subr.mxu0 0.0
      %4073 = vmatpush1.msra.mxu0 0.0
      %4074 = vmatprep.subr.mxu0 0.0
      %4075 = vmatpush1.msra.mxu0 0.0
      %4076 = vmatprep.subr.mxu0 0.0
      %4077 = vmatpush1.msra.mxu0 0.0
      %4078 = vmatprep.subr.mxu0 0.0
      %4079 = vmatpush1.msra.mxu0 0.0
      %4080 = vmatprep.subr.mxu0 0.0
      %4081 = vmatpush1.msra.mxu0 0.0
      %4082 = vmatprep.subr.mxu0 0.0
      %4083 = vmatpush1.msra.mxu0 0.0
      %4084 = vmatprep.subr.mxu0 0.0
      %4085 = vmatpush1.msra.mxu0 0.0
      %4086 = vmatprep.subr.mxu0 0.0
      %4087 = vmatpush1.msra.mxu0 0.0
      %4088 = vmatprep.subr.mxu0 0.0
      %4089 = vmatpush1.msra.mxu0 0.0
      %4090 = vmatprep.subr.mxu0 0.0
      %4091 = vmatpush1.msra.mxu0 0.0
      %4092 = vmatprep.subr.mxu0 0.0
      %4093 = vmatpush1.msra.mxu0 0.0
      %4094 = vmatprep.subr.mxu0 0.0
      %4095 = vmatpush1.msra.mxu0 0.0
      %4096 = vmatprep.subr.mxu0 0.0
      %4097 = vmatpush1.msra.mxu0 0.0
      %4098 = vmatprep.subr.mxu0 0.0
      %4099 = vmatpush1.msra.mxu0 0.0
      %4100 = vmatprep.subr.mxu0 0.0
      %4101 = vmatpush1.msra.mxu0 0.0
      %4102 = vmatprep.subr.mxu0 0.0
      %4103 = vmatpush1.msra.mxu0 0.0
      %4104 = vmatprep.subr.mxu0 0.0
      %4105 = vmatpush1.msra.mxu0 0.0
      %4106 = vmatprep.subr.mxu0 0.0
      %4107 = vmatpush1.msra.mxu0 0.0
      %4108 = vmatprep.subr.mxu0 0.0
      %4109 = vmatpush1.msra.mxu0 0.0
      %4110 = vmatprep.subr.mxu0 0.0
      %4111 = vmatpush1.msra.mxu0 0.0
      %4112 = vmatprep.subr.mxu0 0.0
      %4113 = vmatpush1.msra.mxu0 0.0
      %4114 = vmatprep.subr.mxu0 0.0
      %4115 = vmatpush1.msra.mxu0 0.0
      %4116 = vmatprep.subr.mxu0 0.0
      %4117 = vmatpush1.msra.mxu0 0.0
      %4118 = vmatprep.subr.mxu0 0.0
      %4119 = vmatpush1.msra.mxu0 0.0
      %4120 = vmatprep.subr.mxu0 0.0
      %4121 = vmatpush1.msra.mxu0 0.0
      %4122 = vmatprep.subr.mxu0 0.0
      %4123 = vmatpush1.msra.mxu0 0.0
      %4124 = vmatprep.subr.mxu0 0.0
      %4125 = vmatpush1.msra.mxu0 0.0
      %4126 = vmatprep.subr.mxu0 0.0
      %4127 = vmatpush1.msra.mxu0 0.0
      %4128 = vmatprep.subr.mxu0 0.0
      %4129 = vmatpush1.msra.mxu0 0.0
      %4130 = vmatprep.subr.mxu0 0.0
      %4131 = vmatpush1.msra.mxu0 0.0
      %4132 = vmatprep.mubr.f32.mxu0 0.0
      %4133 = vmatmul.mubr.f32.gmra.mrb[0].mxu0 %v3973
      %v4134 = vpop.f32.mrb[0].mxu0
      %v4135 = vadd.f32 0.0, %v4134
      %v4136 = vpop.f32.mrb[0].mxu0
      %4137 = vmatprep.mubr.f32.mxu0 0.0
      %4138 = vmatmul.mubr.f32.gmra.mrb[0].mxu0 %v3976
      %v4139 = vpop.f32.mrb[0].mxu0
      %v4140 = vadd.f32 0.0, %v4139
      %v4141 = vpop.f32.mrb[0].mxu0
      %4142 = vmatprep.mubr.f32.mxu0 0.0
      %4143 = vmatmul.mubr.f32.gmra.mrb[0].mxu0 %v3979
      %v4144 = vpop.f32.mrb[0].mxu0
      %v4145 = vadd.f32 0.0, %v4144
      %v4146 = vpop.f32.mrb[0].mxu0
      %4147 = vmatprep.mubr.f32.mxu0 0.0
      %4148 = vmatmul.mubr.f32.gmra.mrb[0].mxu0 %v3982
      %v4149 = vpop.f32.mrb[0].mxu0
      %v4150 = vadd.f32 0.0, %v4149
      %v4151 = vpop.f32.mrb[0].mxu0
      %4152 = vmatprep.mubr.f32.mxu0 0.0
      %4153 = vmatmul.mubr.f32.gmra.mrb[0].mxu0 %v3985
      %v4154 = vpop.f32.mrb[0].mxu0
      %v4155 = vadd.f32 0.0, %v4154
      %v4156 = vpop.f32.mrb[0].mxu0
      %4157 = vmatprep.mubr.f32.mxu0 0.0
      %4158 = vmatmul.mubr.f32.gmra.mrb[0].mxu0 %v3988
      %v4159 = vpop.f32.mrb[0].mxu0
      %v4160 = vadd.f32 0.0, %v4159
      %v4161 = vpop.f32.mrb[0].mxu0
      %4162 = vmatprep.mubr.f32.mxu0 0.0
      %4163 = vmatmul.mubr.f32.gmra.mrb[0].mxu0 %v3991
      %v4164 = vpop.f32.mrb[0].mxu0
      %v4165 = vadd.f32 0.0, %v4164
      %v4166 = vpop.f32.mrb[0].mxu0
      %4167 = vmatprep.mubr.f32.mxu0 0.0
      %4168 = vmatmul.mubr.f32.gmra.mrb[0].mxu0 %v3994
      %v4169 = vpop.f32.mrb[0].mxu0
      %v4170 = vadd.f32 0.0, %v4169
      %v4171 = vpop.f32.mrb[0].mxu0
      %4172 = vmatprep.mubr.f32.mxu0 0.0
      %4173 = vmatmul.mubr.f32.gmra.mrb[0].mxu0 %v3997
      %v4174 = vpop.f32.mrb[0].mxu0
      %v4175 = vadd.f32 0.0, %v4174
      %v4176 = vpop.f32.mrb[0].mxu0
      %4177 = vmatprep.mubr.f32.mxu0 0.0
      %4178 = vmatmul.mubr.f32.gmra.mrb[0].mxu0 %v4000
      %v4179 = vpop.f32.mrb[0].mxu0
      %v4180 = vadd.f32 0.0, %v4179
      %v4181 = vpop.f32.mrb[0].mxu0
      %4182 = vmatprep.mubr.f32.mxu0 0.0
      %4183 = vmatmul.mubr.f32.gmra.mrb[0].mxu0 %v4003
      %v4184 = vpop.f32.mrb[0].mxu0
      %v4185 = vadd.f32 0.0, %v4184
      %v4186 = vpop.f32.mrb[0].mxu0
      %4187 = vmatprep.mubr.f32.mxu0 0.0
      %4188 = vmatmul.mubr.f32.gmra.mrb[0].mxu0 %v4006
      %v4189 = vpop.f32.mrb[0].mxu0
      %v4190 = vadd.f32 0.0, %v4189
      %v4191 = vpop.f32.mrb[0].mxu0
      %4192 = vmatprep.mubr.f32.mxu0 0.0
      %4193 = vmatmul.mubr.f32.gmra.mrb[0].mxu0 %v4009
      %v4194 = vpop.f32.mrb[0].mxu0
      %v4195 = vadd.f32 0.0, %v4194
      %v4196 = vpop.f32.mrb[0].mxu0
      %4197 = vmatprep.mubr.f32.mxu0 0.0
      %4198 = vmatmul.mubr.f32.gmra.mrb[0].mxu0 %v4012
      %v4199 = vpop.f32.mrb[0].mxu0
      %v4200 = vadd.f32 0.0, %v4199
      %v4201 = vpop.f32.mrb[0].mxu0
      %4202 = vmatprep.mubr.f32.mxu0 0.0
      %4203 = vmatmul.mubr.f32.gmra.mrb[0].mxu0 %v4015
      %v4204 = vpop.f32.mrb[0].mxu0
      %v4205 = vadd.f32 0.0, %v4204
      %v4206 = vpop.f32.mrb[0].mxu0
      %4207 = vmatprep.mubr.f32.mxu0 0.0
      %4208 = vmatmul.mubr.f32.gmra.mrb[0].mxu0 %v4018
      %v4209 = vpop.f32.mrb[0].mxu0
      %v4210 = vadd.f32 0.0, %v4209
      %v4211 = vpop.f32.mrb[0].mxu0
      %4212 = vmatprep.mubr.f32.mxu0 0.0
      %4213 = vmatmul.mubr.f32.gmra.mrb[0].mxu0 %v4021
      %v4214 = vpop.f32.mrb[0].mxu0
      %v4215 = vadd.f32 0.0, %v4214
      %v4216 = vpop.f32.mrb[0].mxu0
      %4217 = vmatprep.mubr.f32.mxu0 0.0
      %4218 = vmatmul.mubr.f32.gmra.mrb[0].mxu0 %v4024
      %v4219 = vpop.f32.mrb[0].mxu0
      %v4220 = vadd.f32 0.0, %v4219
      %v4221 = vpop.f32.mrb[0].mxu0
      %4222 = vmatprep.mubr.f32.mxu0 0.0
      %4223 = vmatmul.mubr.f32.gmra.mrb[0].mxu0 %v4027
      %v4224 = vpop.f32.mrb[0].mxu0
      %v4225 = vadd.f32 0.0, %v4224
      %v4226 = vpop.f32.mrb[0].mxu0
      %4227 = vmatprep.mubr.f32.mxu0 0.0
      %4228 = vmatmul.mubr.f32.gmra.mrb[0].mxu0 %v4030
      %v4229 = vpop.f32.mrb[0].mxu0
      %v4230 = vadd.f32 0.0, %v4229
      %v4231 = vpop.f32.mrb[0].mxu0
      %4232 = vmatprep.mubr.f32.mxu0 0.0
      %4233 = vmatmul.mubr.f32.gmra.mrb[0].mxu0 %v4033
      %v4234 = vpop.f32.mrb[0].mxu0
      %v4235 = vadd.f32 0.0, %v4234
      %v4236 = vpop.f32.mrb[0].mxu0
      %4237 = vmatprep.mubr.f32.mxu0 0.0
      %4238 = vmatmul.mubr.f32.gmra.mrb[0].mxu0 %v4036
      %v4239 = vpop.f32.mrb[0].mxu0
      %v4240 = vadd.f32 0.0, %v4239
      %v4241 = vpop.f32.mrb[0].mxu0
      %4242 = vmatprep.mubr.f32.mxu0 0.0
      %4243 = vmatmul.mubr.f32.gmra.mrb[0].mxu0 %v4039
      %v4244 = vpop.f32.mrb[0].mxu0
      %v4245 = vadd.f32 0.0, %v4244
      %v4246 = vpop.f32.mrb[0].mxu0
      %4247 = vmatprep.mubr.f32.mxu0 0.0
      %4248 = vmatmul.mubr.f32.gmra.mrb[0].mxu0 %v4042
      %v4249 = vpop.f32.mrb[0].mxu0
      %v4250 = vadd.f32 0.0, %v4249
      %v4251 = vpop.f32.mrb[0].mxu0
      %4252 = vmatprep.mubr.f32.mxu0 0.0
      %4253 = vmatmul.mubr.f32.gmra.mrb[0].mxu0 %v4045
      %v4254 = vpop.f32.mrb[0].mxu0
      %v4255 = vadd.f32 0.0, %v4254
      %v4256 = vpop.f32.mrb[0].mxu0
      %4257 = vmatprep.mubr.f32.mxu0 0.0
      %4258 = vmatmul.mubr.f32.gmra.mrb[0].mxu0 %v4048
      %v4259 = vpop.f32.mrb[0].mxu0
      %v4260 = vadd.f32 0.0, %v4259
      %v4261 = vpop.f32.mrb[0].mxu0
      %4262 = vmatprep.mubr.f32.mxu0 0.0
      %4263 = vmatmul.mubr.f32.gmra.mrb[0].mxu0 %v4051
      %v4264 = vpop.f32.mrb[0].mxu0
      %v4265 = vadd.f32 0.0, %v4264
      %v4266 = vpop.f32.mrb[0].mxu0
      %4267 = vmatprep.mubr.f32.mxu0 0.0
      %4268 = vmatmul.mubr.f32.gmra.mrb[0].mxu0 %v4054
      %v4269 = vpop.f32.mrb[0].mxu0
      %v4270 = vadd.f32 0.0, %v4269
      %v4271 = vpop.f32.mrb[0].mxu0
      %4272 = vmatprep.mubr.f32.mxu0 0.0
      %4273 = vmatmul.mubr.f32.gmra.mrb[0].mxu0 %v4057
      %v4274 = vpop.f32.mrb[0].mxu0
      %v4275 = vadd.f32 0.0, %v4274
      %v4276 = vpop.f32.mrb[0].mxu0
      %4277 = vmatprep.mubr.f32.mxu0 0.0
      %4278 = vmatmul.mubr.f32.gmra.mrb[0].mxu0 %v4060
      %v4279 = vpop.f32.mrb[0].mxu0
      %v4280 = vadd.f32 0.0, %v4279
      %v4281 = vpop.f32.mrb[0].mxu0
      %4282 = vmatprep.mubr.f32.mxu0 0.0
      %4283 = vmatmul.mubr.f32.gmra.mrb[0].mxu0 %v4063
      %v4284 = vpop.f32.mrb[0].mxu0
      %v4285 = vadd.f32 0.0, %v4284
      %v4286 = vpop.f32.mrb[0].mxu0
      %4287 = vmatprep.mubr.f32.mxu0 0.0
      %4288 = vmatmul.mubr.f32.gmra.mrb[0].mxu0 %v4066
      %v4289 = vpop.f32.mrb[0].mxu0
      %v4290 = vadd.f32 0.0, %v4289
      %v4291 = vpop.f32.mrb[0].mxu0
      %4292 = vdwg.mxu0
      %v4293 = vadd.f32 %v3902, %v4135
      %v4294 = vadd.f32 %v3903, %v4140
      %v4295 = vadd.f32 %v3904, %v4145
      %v4296 = vadd.f32 %v3905, %v4150
      %v4297 = vadd.f32 %v3906, %v4155
      %v4298 = vadd.f32 %v3907, %v4160
      %v4299 = vadd.f32 %v3908, %v4165
      %v4300 = vadd.f32 %v3909, %v4170
      %v4301 = vadd.f32 %v3910, %v4175
      %v4302 = vadd.f32 %v3911, %v4180
      %v4303 = vadd.f32 %v3912, %v4185
      %v4304 = vadd.f32 %v3913, %v4190
      %v4305 = vadd.f32 %v3914, %v4195
      %v4306 = vadd.f32 %v3915, %v4200
      %v4307 = vadd.f32 %v3916, %v4205
      %v4308 = vadd.f32 %v3917, %v4210
      %v4309 = vadd.f32 %v3918, %v4215
      %v4310 = vadd.f32 %v3919, %v4220
      %v4311 = vadd.f32 %v3920, %v4225
      %v4312 = vadd.f32 %v3921, %v4230
      %v4313 = vadd.f32 %v3922, %v4235
      %v4314 = vadd.f32 %v3923, %v4240
      %v4315 = vadd.f32 %v3924, %v4245
      %v4316 = vadd.f32 %v3925, %v4250
      %v4317 = vadd.f32 %v3926, %v4255
      %v4318 = vadd.f32 %v3927, %v4260
      %v4319 = vadd.f32 %v3928, %v4265
      %v4320 = vadd.f32 %v3929, %v4270
      %v4321 = vadd.f32 %v3930, %v4275
      %v4322 = vadd.f32 %v3931, %v4280
      %v4323 = vadd.f32 %v3932, %v4285
      %v4324 = vadd.f32 %v3933, %v4290
      %s4325 = scalar_lea.vmem %s3, 32
      %v4326 = vld [vmem:[%s4325] sm:$0xff]
      %v4328 = vsel %vm314, %v3966, 0
      %v4331 = vsel %vm314, %v3967, 0
      %4333 = vmatprep.subr.mxu0 0.0
      %4334 = vmatpush1.msra.mxu0 %v4326
      %4335 = vmatprep.subr.mxu0 0.0
      %4336 = vmatpush1.msra.mxu0 0.0
      %4337 = vmatprep.subr.mxu0 0.0
      %4338 = vmatpush1.msra.mxu0 0.0
      %4339 = vmatprep.subr.mxu0 0.0
      %4340 = vmatpush1.msra.mxu0 0.0
      %4341 = vmatprep.subr.mxu0 0.0
      %4342 = vmatpush1.msra.mxu0 0.0
      %4343 = vmatprep.subr.mxu0 0.0
      %4344 = vmatpush1.msra.mxu0 0.0
      %4345 = vmatprep.subr.mxu0 0.0
      %4346 = vmatpush1.msra.mxu0 0.0
      %4347 = vmatprep.subr.mxu0 0.0
      %4348 = vmatpush1.msra.mxu0 0.0
      %4349 = vmatprep.subr.mxu0 0.0
      %4350 = vmatpush1.msra.mxu0 0.0
      %4351 = vmatprep.subr.mxu0 0.0
      %4352 = vmatpush1.msra.mxu0 0.0
      %4353 = vmatprep.subr.mxu0 0.0
      %4354 = vmatpush1.msra.mxu0 0.0
      %4355 = vmatprep.subr.mxu0 0.0
      %4356 = vmatpush1.msra.mxu0 0.0
      %4357 = vmatprep.subr.mxu0 0.0
      %4358 = vmatpush1.msra.mxu0 0.0
      %4359 = vmatprep.subr.mxu0 0.0
      %4360 = vmatpush1.msra.mxu0 0.0
      %4361 = vmatprep.subr.mxu0 0.0
      %4362 = vmatpush1.msra.mxu0 0.0
      %4363 = vmatprep.subr.mxu0 0.0
      %4364 = vmatpush1.msra.mxu0 0.0
      %4365 = vmatprep.subr.mxu0 0.0
      %4366 = vmatpush1.msra.mxu0 0.0
      %4367 = vmatprep.subr.mxu0 0.0
      %4368 = vmatpush1.msra.mxu0 0.0
      %4369 = vmatprep.subr.mxu0 0.0
      %4370 = vmatpush1.msra.mxu0 0.0
      %4371 = vmatprep.subr.mxu0 0.0
      %4372 = vmatpush1.msra.mxu0 0.0
      %4373 = vmatprep.subr.mxu0 0.0
      %4374 = vmatpush1.msra.mxu0 0.0
      %4375 = vmatprep.subr.mxu0 0.0
      %4376 = vmatpush1.msra.mxu0 0.0
      %4377 = vmatprep.subr.mxu0 0.0
      %4378 = vmatpush1.msra.mxu0 0.0
      %4379 = vmatprep.subr.mxu0 0.0
      %4380 = vmatpush1.msra.mxu0 0.0
      %4381 = vmatprep.subr.mxu0 0.0
      %4382 = vmatpush1.msra.mxu0 0.0
      %4383 = vmatprep.subr.mxu0 0.0
      %4384 = vmatpush1.msra.mxu0 0.0
      %4385 = vmatprep.subr.mxu0 0.0
      %4386 = vmatpush1.msra.mxu0 0.0
      %4387 = vmatprep.subr.mxu0 0.0
      %4388 = vmatpush1.msra.mxu0 0.0
      %4389 = vmatprep.subr.mxu0 0.0
      %4390 = vmatpush1.msra.mxu0 0.0
      %4391 = vmatprep.subr.mxu0 0.0
      %4392 = vmatpush1.msra.mxu0 0.0
      %4393 = vmatprep.subr.mxu0 0.0
      %4394 = vmatpush1.msra.mxu0 0.0
      %4395 = vmatprep.subr.mxu0 0.0
      %4396 = vmatpush1.msra.mxu0 0.0
      %4397 = vmatprep.mubr.f32.mxu0 0.0
      %4398 = vmatmul.mubr.f32.gmra.mrb[0].mxu0 %v3979
      %v4399 = vpop.f32.mrb[0].mxu0
      %v4400 = vadd.f32 0.0, %v4399
      %v4401 = vpop.f32.mrb[0].mxu0
      %4402 = vmatprep.mubr.f32.mxu0 0.0
      %4403 = vmatmul.mubr.f32.gmra.mrb[0].mxu0 %v3982
      %v4404 = vpop.f32.mrb[0].mxu0
      %v4405 = vadd.f32 0.0, %v4404
      %v4406 = vpop.f32.mrb[0].mxu0
      %4407 = vmatprep.mubr.f32.mxu0 0.0
      %4408 = vmatmul.mubr.f32.gmra.mrb[0].mxu0 %v3985
      %v4409 = vpop.f32.mrb[0].mxu0
      %v4410 = vadd.f32 0.0, %v4409
      %v4411 = vpop.f32.mrb[0].mxu0
      %4412 = vmatprep.mubr.f32.mxu0 0.0
      %4413 = vmatmul.mubr.f32.gmra.mrb[0].mxu0 %v3988
      %v4414 = vpop.f32.mrb[0].mxu0
      %v4415 = vadd.f32 0.0, %v4414
      %v4416 = vpop.f32.mrb[0].mxu0
      %4417 = vmatprep.mubr.f32.mxu0 0.0
      %4418 = vmatmul.mubr.f32.gmra.mrb[0].mxu0 %v3991
      %v4419 = vpop.f32.mrb[0].mxu0
      %v4420 = vadd.f32 0.0, %v4419
      %v4421 = vpop.f32.mrb[0].mxu0
      %4422 = vmatprep.mubr.f32.mxu0 0.0
      %4423 = vmatmul.mubr.f32.gmra.mrb[0].mxu0 %v3994
      %v4424 = vpop.f32.mrb[0].mxu0
      %v4425 = vadd.f32 0.0, %v4424
      %v4426 = vpop.f32.mrb[0].mxu0
      %4427 = vmatprep.mubr.f32.mxu0 0.0
      %4428 = vmatmul.mubr.f32.gmra.mrb[0].mxu0 %v3997
      %v4429 = vpop.f32.mrb[0].mxu0
      %v4430 = vadd.f32 0.0, %v4429
      %v4431 = vpop.f32.mrb[0].mxu0
      %4432 = vmatprep.mubr.f32.mxu0 0.0
      %4433 = vmatmul.mubr.f32.gmra.mrb[0].mxu0 %v4000
      %v4434 = vpop.f32.mrb[0].mxu0
      %v4435 = vadd.f32 0.0, %v4434
      %v4436 = vpop.f32.mrb[0].mxu0
      %4437 = vmatprep.mubr.f32.mxu0 0.0
      %4438 = vmatmul.mubr.f32.gmra.mrb[0].mxu0 %v4003
      %v4439 = vpop.f32.mrb[0].mxu0
      %v4440 = vadd.f32 0.0, %v4439
      %v4441 = vpop.f32.mrb[0].mxu0
      %4442 = vmatprep.mubr.f32.mxu0 0.0
      %4443 = vmatmul.mubr.f32.gmra.mrb[0].mxu0 %v4006
      %v4444 = vpop.f32.mrb[0].mxu0
      %v4445 = vadd.f32 0.0, %v4444
      %v4446 = vpop.f32.mrb[0].mxu0
      %4447 = vmatprep.mubr.f32.mxu0 0.0
      %4448 = vmatmul.mubr.f32.gmra.mrb[0].mxu0 %v4009
      %v4449 = vpop.f32.mrb[0].mxu0
      %v4450 = vadd.f32 0.0, %v4449
      %v4451 = vpop.f32.mrb[0].mxu0
      %4452 = vmatprep.mubr.f32.mxu0 0.0
      %4453 = vmatmul.mubr.f32.gmra.mrb[0].mxu0 %v4012
      %v4454 = vpop.f32.mrb[0].mxu0
      %v4455 = vadd.f32 0.0, %v4454
      %v4456 = vpop.f32.mrb[0].mxu0
      %4457 = vmatprep.mubr.f32.mxu0 0.0
      %4458 = vmatmul.mubr.f32.gmra.mrb[0].mxu0 %v4015
      %v4459 = vpop.f32.mrb[0].mxu0
      %v4460 = vadd.f32 0.0, %v4459
      %v4461 = vpop.f32.mrb[0].mxu0
      %4462 = vmatprep.mubr.f32.mxu0 0.0
      %4463 = vmatmul.mubr.f32.gmra.mrb[0].mxu0 %v4018
      %v4464 = vpop.f32.mrb[0].mxu0
      %v4465 = vadd.f32 0.0, %v4464
      %v4466 = vpop.f32.mrb[0].mxu0
      %4467 = vmatprep.mubr.f32.mxu0 0.0
      %4468 = vmatmul.mubr.f32.gmra.mrb[0].mxu0 %v4021
      %v4469 = vpop.f32.mrb[0].mxu0
      %v4470 = vadd.f32 0.0, %v4469
      %v4471 = vpop.f32.mrb[0].mxu0
      %4472 = vmatprep.mubr.f32.mxu0 0.0
      %4473 = vmatmul.mubr.f32.gmra.mrb[0].mxu0 %v4024
      %v4474 = vpop.f32.mrb[0].mxu0
      %v4475 = vadd.f32 0.0, %v4474
      %v4476 = vpop.f32.mrb[0].mxu0
      %4477 = vmatprep.mubr.f32.mxu0 0.0
      %4478 = vmatmul.mubr.f32.gmra.mrb[0].mxu0 %v4027
      %v4479 = vpop.f32.mrb[0].mxu0
      %v4480 = vadd.f32 0.0, %v4479
      %v4481 = vpop.f32.mrb[0].mxu0
      %4482 = vmatprep.mubr.f32.mxu0 0.0
      %4483 = vmatmul.mubr.f32.gmra.mrb[0].mxu0 %v4030
      %v4484 = vpop.f32.mrb[0].mxu0
      %v4485 = vadd.f32 0.0, %v4484
      %v4486 = vpop.f32.mrb[0].mxu0
      %4487 = vmatprep.mubr.f32.mxu0 0.0
      %4488 = vmatmul.mubr.f32.gmra.mrb[0].mxu0 %v4033
      %v4489 = vpop.f32.mrb[0].mxu0
      %v4490 = vadd.f32 0.0, %v4489
      %v4491 = vpop.f32.mrb[0].mxu0
      %4492 = vmatprep.mubr.f32.mxu0 0.0
      %4493 = vmatmul.mubr.f32.gmra.mrb[0].mxu0 %v4036
      %v4494 = vpop.f32.mrb[0].mxu0
      %v4495 = vadd.f32 0.0, %v4494
      %v4496 = vpop.f32.mrb[0].mxu0
      %4497 = vmatprep.mubr.f32.mxu0 0.0
      %4498 = vmatmul.mubr.f32.gmra.mrb[0].mxu0 %v4039
      %v4499 = vpop.f32.mrb[0].mxu0
      %v4500 = vadd.f32 0.0, %v4499
      %v4501 = vpop.f32.mrb[0].mxu0
      %4502 = vmatprep.mubr.f32.mxu0 0.0
      %4503 = vmatmul.mubr.f32.gmra.mrb[0].mxu0 %v4042
      %v4504 = vpop.f32.mrb[0].mxu0
      %v4505 = vadd.f32 0.0, %v4504
      %v4506 = vpop.f32.mrb[0].mxu0
      %4507 = vmatprep.mubr.f32.mxu0 0.0
      %4508 = vmatmul.mubr.f32.gmra.mrb[0].mxu0 %v4045
      %v4509 = vpop.f32.mrb[0].mxu0
      %v4510 = vadd.f32 0.0, %v4509
      %v4511 = vpop.f32.mrb[0].mxu0
      %4512 = vmatprep.mubr.f32.mxu0 0.0
      %4513 = vmatmul.mubr.f32.gmra.mrb[0].mxu0 %v4048
      %v4514 = vpop.f32.mrb[0].mxu0
      %v4515 = vadd.f32 0.0, %v4514
      %v4516 = vpop.f32.mrb[0].mxu0
      %4517 = vmatprep.mubr.f32.mxu0 0.0
      %4518 = vmatmul.mubr.f32.gmra.mrb[0].mxu0 %v4051
      %v4519 = vpop.f32.mrb[0].mxu0
      %v4520 = vadd.f32 0.0, %v4519
      %v4521 = vpop.f32.mrb[0].mxu0
      %4522 = vmatprep.mubr.f32.mxu0 0.0
      %4523 = vmatmul.mubr.f32.gmra.mrb[0].mxu0 %v4054
      %v4524 = vpop.f32.mrb[0].mxu0
      %v4525 = vadd.f32 0.0, %v4524
      %v4526 = vpop.f32.mrb[0].mxu0
      %4527 = vmatprep.mubr.f32.mxu0 0.0
      %4528 = vmatmul.mubr.f32.gmra.mrb[0].mxu0 %v4057
      %v4529 = vpop.f32.mrb[0].mxu0
      %v4530 = vadd.f32 0.0, %v4529
      %v4531 = vpop.f32.mrb[0].mxu0
      %4532 = vmatprep.mubr.f32.mxu0 0.0
      %4533 = vmatmul.mubr.f32.gmra.mrb[0].mxu0 %v4060
      %v4534 = vpop.f32.mrb[0].mxu0
      %v4535 = vadd.f32 0.0, %v4534
      %v4536 = vpop.f32.mrb[0].mxu0
      %4537 = vmatprep.mubr.f32.mxu0 0.0
      %4538 = vmatmul.mubr.f32.gmra.mrb[0].mxu0 %v4063
      %v4539 = vpop.f32.mrb[0].mxu0
      %v4540 = vadd.f32 0.0, %v4539
      %v4541 = vpop.f32.mrb[0].mxu0
      %4542 = vmatprep.mubr.f32.mxu0 0.0
      %4543 = vmatmul.mubr.f32.gmra.mrb[0].mxu0 %v4066
      %v4544 = vpop.f32.mrb[0].mxu0
      %v4545 = vadd.f32 0.0, %v4544
      %v4546 = vpop.f32.mrb[0].mxu0
      %4547 = vmatprep.mubr.f32.mxu0 0.0
      %4548 = vmatmul.mubr.f32.gmra.mrb[0].mxu0 %v4328
      %v4549 = vpop.f32.mrb[0].mxu0
      %v4550 = vadd.f32 0.0, %v4549
      %v4551 = vpop.f32.mrb[0].mxu0
      %4552 = vmatprep.mubr.f32.mxu0 0.0
      %4553 = vmatmul.mubr.f32.gmra.mrb[0].mxu0 %v4331
      %v4554 = vpop.f32.mrb[0].mxu0
      %v4555 = vadd.f32 0.0, %v4554
      %v4556 = vpop.f32.mrb[0].mxu0
      %4557 = vdwg.mxu0
      %v4558 = vadd.f32 %v4293, %v4400
      %v4559 = vadd.f32 %v4294, %v4405
      %v4560 = vadd.f32 %v4295, %v4410
      %v4561 = vadd.f32 %v4296, %v4415
      %v4562 = vadd.f32 %v4297, %v4420
      %v4563 = vadd.f32 %v4298, %v4425
      %v4564 = vadd.f32 %v4299, %v4430
      %v4565 = vadd.f32 %v4300, %v4435
      %v4566 = vadd.f32 %v4301, %v4440
      %v4567 = vadd.f32 %v4302, %v4445
      %v4568 = vadd.f32 %v4303, %v4450
      %v4569 = vadd.f32 %v4304, %v4455
      %v4570 = vadd.f32 %v4305, %v4460
      %v4571 = vadd.f32 %v4306, %v4465
      %v4572 = vadd.f32 %v4307, %v4470
      %v4573 = vadd.f32 %v4308, %v4475
      %v4574 = vadd.f32 %v4309, %v4480
      %v4575 = vadd.f32 %v4310, %v4485
      %v4576 = vadd.f32 %v4311, %v4490
      %v4577 = vadd.f32 %v4312, %v4495
      %v4578 = vadd.f32 %v4313, %v4500
      %v4579 = vadd.f32 %v4314, %v4505
      %v4580 = vadd.f32 %v4315, %v4510
      %v4581 = vadd.f32 %v4316, %v4515
      %v4582 = vadd.f32 %v4317, %v4520
      %v4583 = vadd.f32 %v4318, %v4525
      %v4584 = vadd.f32 %v4319, %v4530
      %v4585 = vadd.f32 %v4320, %v4535
      %v4586 = vadd.f32 %v4321, %v4540
      %v4587 = vadd.f32 %v4322, %v4545
      %v4588 = vadd.f32 %v4323, %v4550
      %v4589 = vadd.f32 %v4324, %v4555
      %s4590 = scalar_lea.vmem %s3, 56
      %v4591 = vld [vmem:[%s4590] sm:$0xff]
      %v4593 = vsel %vm314, %v3968, 0
      %v4596 = vsel %vm314, %v3969, 0
      %4598 = vmatprep.subr.mxu0 0.0
      %4599 = vmatpush1.msra.mxu0 %v4591
      %4600 = vmatprep.subr.mxu0 0.0
      %4601 = vmatpush1.msra.mxu0 0.0
      %4602 = vmatprep.subr.mxu0 0.0
      %4603 = vmatpush1.msra.mxu0 0.0
      %4604 = vmatprep.subr.mxu0 0.0
      %4605 = vmatpush1.msra.mxu0 0.0
      %4606 = vmatprep.subr.mxu0 0.0
      %4607 = vmatpush1.msra.mxu0 0.0
      %4608 = vmatprep.subr.mxu0 0.0
      %4609 = vmatpush1.msra.mxu0 0.0
      %4610 = vmatprep.subr.mxu0 0.0
      %4611 = vmatpush1.msra.mxu0 0.0
      %4612 = vmatprep.subr.mxu0 0.0
      %4613 = vmatpush1.msra.mxu0 0.0
      %4614 = vmatprep.subr.mxu0 0.0
      %4615 = vmatpush1.msra.mxu0 0.0
      %4616 = vmatprep.subr.mxu0 0.0
      %4617 = vmatpush1.msra.mxu0 0.0
      %4618 = vmatprep.subr.mxu0 0.0
      %4619 = vmatpush1.msra.mxu0 0.0
      %4620 = vmatprep.subr.mxu0 0.0
      %4621 = vmatpush1.msra.mxu0 0.0
      %4622 = vmatprep.subr.mxu0 0.0
      %4623 = vmatpush1.msra.mxu0 0.0
      %4624 = vmatprep.subr.mxu0 0.0
      %4625 = vmatpush1.msra.mxu0 0.0
      %4626 = vmatprep.subr.mxu0 0.0
      %4627 = vmatpush1.msra.mxu0 0.0
      %4628 = vmatprep.subr.mxu0 0.0
      %4629 = vmatpush1.msra.mxu0 0.0
      %4630 = vmatprep.subr.mxu0 0.0
      %4631 = vmatpush1.msra.mxu0 0.0
      %4632 = vmatprep.subr.mxu0 0.0
      %4633 = vmatpush1.msra.mxu0 0.0
      %4634 = vmatprep.subr.mxu0 0.0
      %4635 = vmatpush1.msra.mxu0 0.0
      %4636 = vmatprep.subr.mxu0 0.0
      %4637 = vmatpush1.msra.mxu0 0.0
      %4638 = vmatprep.subr.mxu0 0.0
      %4639 = vmatpush1.msra.mxu0 0.0
      %4640 = vmatprep.subr.mxu0 0.0
      %4641 = vmatpush1.msra.mxu0 0.0
      %4642 = vmatprep.subr.mxu0 0.0
      %4643 = vmatpush1.msra.mxu0 0.0
      %4644 = vmatprep.subr.mxu0 0.0
      %4645 = vmatpush1.msra.mxu0 0.0
      %4646 = vmatprep.subr.mxu0 0.0
      %4647 = vmatpush1.msra.mxu0 0.0
      %4648 = vmatprep.subr.mxu0 0.0
      %4649 = vmatpush1.msra.mxu0 0.0
      %4650 = vmatprep.subr.mxu0 0.0
      %4651 = vmatpush1.msra.mxu0 0.0
      %4652 = vmatprep.subr.mxu0 0.0
      %4653 = vmatpush1.msra.mxu0 0.0
      %4654 = vmatprep.subr.mxu0 0.0
      %4655 = vmatpush1.msra.mxu0 0.0
      %4656 = vmatprep.subr.mxu0 0.0
      %4657 = vmatpush1.msra.mxu0 0.0
      %4658 = vmatprep.subr.mxu0 0.0
      %4659 = vmatpush1.msra.mxu0 0.0
      %4660 = vmatprep.subr.mxu0 0.0
      %4661 = vmatpush1.msra.mxu0 0.0
      %4662 = vmatprep.mubr.f32.mxu0 0.0
      %4663 = vmatmul.mubr.f32.gmra.mrb[0].mxu0 %v3985
      %v4664 = vpop.f32.mrb[0].mxu0
      %v4665 = vadd.f32 0.0, %v4664
      %v4666 = vpop.f32.mrb[0].mxu0
      %4667 = vmatprep.mubr.f32.mxu0 0.0
      %4668 = vmatmul.mubr.f32.gmra.mrb[0].mxu0 %v3988
      %v4669 = vpop.f32.mrb[0].mxu0
      %v4670 = vadd.f32 0.0, %v4669
      %v4671 = vpop.f32.mrb[0].mxu0
      %4672 = vmatprep.mubr.f32.mxu0 0.0
      %4673 = vmatmul.mubr.f32.gmra.mrb[0].mxu0 %v3991
      %v4674 = vpop.f32.mrb[0].mxu0
      %v4675 = vadd.f32 0.0, %v4674
      %v4676 = vpop.f32.mrb[0].mxu0
      %4677 = vmatprep.mubr.f32.mxu0 0.0
      %4678 = vmatmul.mubr.f32.gmra.mrb[0].mxu0 %v3994
      %v4679 = vpop.f32.mrb[0].mxu0
      %v4680 = vadd.f32 0.0, %v4679
      %v4681 = vpop.f32.mrb[0].mxu0
      %4682 = vmatprep.mubr.f32.mxu0 0.0
      %4683 = vmatmul.mubr.f32.gmra.mrb[0].mxu0 %v3997
      %v4684 = vpop.f32.mrb[0].mxu0
      %v4685 = vadd.f32 0.0, %v4684
      %v4686 = vpop.f32.mrb[0].mxu0
      %4687 = vmatprep.mubr.f32.mxu0 0.0
      %4688 = vmatmul.mubr.f32.gmra.mrb[0].mxu0 %v4000
      %v4689 = vpop.f32.mrb[0].mxu0
      %v4690 = vadd.f32 0.0, %v4689
      %v4691 = vpop.f32.mrb[0].mxu0
      %4692 = vmatprep.mubr.f32.mxu0 0.0
      %4693 = vmatmul.mubr.f32.gmra.mrb[0].mxu0 %v4003
      %v4694 = vpop.f32.mrb[0].mxu0
      %v4695 = vadd.f32 0.0, %v4694
      %v4696 = vpop.f32.mrb[0].mxu0
      %4697 = vmatprep.mubr.f32.mxu0 0.0
      %4698 = vmatmul.mubr.f32.gmra.mrb[0].mxu0 %v4006
      %v4699 = vpop.f32.mrb[0].mxu0
      %v4700 = vadd.f32 0.0, %v4699
      %v4701 = vpop.f32.mrb[0].mxu0
      %4702 = vmatprep.mubr.f32.mxu0 0.0
      %4703 = vmatmul.mubr.f32.gmra.mrb[0].mxu0 %v4009
      %v4704 = vpop.f32.mrb[0].mxu0
      %v4705 = vadd.f32 0.0, %v4704
      %v4706 = vpop.f32.mrb[0].mxu0
      %4707 = vmatprep.mubr.f32.mxu0 0.0
      %4708 = vmatmul.mubr.f32.gmra.mrb[0].mxu0 %v4012
      %v4709 = vpop.f32.mrb[0].mxu0
      %v4710 = vadd.f32 0.0, %v4709
      %v4711 = vpop.f32.mrb[0].mxu0
      %4712 = vmatprep.mubr.f32.mxu0 0.0
      %4713 = vmatmul.mubr.f32.gmra.mrb[0].mxu0 %v4015
      %v4714 = vpop.f32.mrb[0].mxu0
      %v4715 = vadd.f32 0.0, %v4714
      %v4716 = vpop.f32.mrb[0].mxu0
      %4717 = vmatprep.mubr.f32.mxu0 0.0
      %4718 = vmatmul.mubr.f32.gmra.mrb[0].mxu0 %v4018
      %v4719 = vpop.f32.mrb[0].mxu0
      %v4720 = vadd.f32 0.0, %v4719
      %v4721 = vpop.f32.mrb[0].mxu0
      %4722 = vmatprep.mubr.f32.mxu0 0.0
      %4723 = vmatmul.mubr.f32.gmra.mrb[0].mxu0 %v4021
      %v4724 = vpop.f32.mrb[0].mxu0
      %v4725 = vadd.f32 0.0, %v4724
      %v4726 = vpop.f32.mrb[0].mxu0
      %4727 = vmatprep.mubr.f32.mxu0 0.0
      %4728 = vmatmul.mubr.f32.gmra.mrb[0].mxu0 %v4024
      %v4729 = vpop.f32.mrb[0].mxu0
      %v4730 = vadd.f32 0.0, %v4729
      %v4731 = vpop.f32.mrb[0].mxu0
      %4732 = vmatprep.mubr.f32.mxu0 0.0
      %4733 = vmatmul.mubr.f32.gmra.mrb[0].mxu0 %v4027
      %v4734 = vpop.f32.mrb[0].mxu0
      %v4735 = vadd.f32 0.0, %v4734
      %v4736 = vpop.f32.mrb[0].mxu0
      %4737 = vmatprep.mubr.f32.mxu0 0.0
      %4738 = vmatmul.mubr.f32.gmra.mrb[0].mxu0 %v4030
      %v4739 = vpop.f32.mrb[0].mxu0
      %v4740 = vadd.f32 0.0, %v4739
      %v4741 = vpop.f32.mrb[0].mxu0
      %4742 = vmatprep.mubr.f32.mxu0 0.0
      %4743 = vmatmul.mubr.f32.gmra.mrb[0].mxu0 %v4033
      %v4744 = vpop.f32.mrb[0].mxu0
      %v4745 = vadd.f32 0.0, %v4744
      %v4746 = vpop.f32.mrb[0].mxu0
      %4747 = vmatprep.mubr.f32.mxu0 0.0
      %4748 = vmatmul.mubr.f32.gmra.mrb[0].mxu0 %v4036
      %v4749 = vpop.f32.mrb[0].mxu0
      %v4750 = vadd.f32 0.0, %v4749
      %v4751 = vpop.f32.mrb[0].mxu0
      %4752 = vmatprep.mubr.f32.mxu0 0.0
      %4753 = vmatmul.mubr.f32.gmra.mrb[0].mxu0 %v4039
      %v4754 = vpop.f32.mrb[0].mxu0
      %v4755 = vadd.f32 0.0, %v4754
      %v4756 = vpop.f32.mrb[0].mxu0
      %4757 = vmatprep.mubr.f32.mxu0 0.0
      %4758 = vmatmul.mubr.f32.gmra.mrb[0].mxu0 %v4042
      %v4759 = vpop.f32.mrb[0].mxu0
      %v4760 = vadd.f32 0.0, %v4759
      %v4761 = vpop.f32.mrb[0].mxu0
      %4762 = vmatprep.mubr.f32.mxu0 0.0
      %4763 = vmatmul.mubr.f32.gmra.mrb[0].mxu0 %v4045
      %v4764 = vpop.f32.mrb[0].mxu0
      %v4765 = vadd.f32 0.0, %v4764
      %v4766 = vpop.f32.mrb[0].mxu0
      %4767 = vmatprep.mubr.f32.mxu0 0.0
      %4768 = vmatmul.mubr.f32.gmra.mrb[0].mxu0 %v4048
      %v4769 = vpop.f32.mrb[0].mxu0
      %v4770 = vadd.f32 0.0, %v4769
      %v4771 = vpop.f32.mrb[0].mxu0
      %4772 = vmatprep.mubr.f32.mxu0 0.0
      %4773 = vmatmul.mubr.f32.gmra.mrb[0].mxu0 %v4051
      %v4774 = vpop.f32.mrb[0].mxu0
      %v4775 = vadd.f32 0.0, %v4774
      %v4776 = vpop.f32.mrb[0].mxu0
      %4777 = vmatprep.mubr.f32.mxu0 0.0
      %4778 = vmatmul.mubr.f32.gmra.mrb[0].mxu0 %v4054
      %v4779 = vpop.f32.mrb[0].mxu0
      %v4780 = vadd.f32 0.0, %v4779
      %v4781 = vpop.f32.mrb[0].mxu0
      %4782 = vmatprep.mubr.f32.mxu0 0.0
      %4783 = vmatmul.mubr.f32.gmra.mrb[0].mxu0 %v4057
      %v4784 = vpop.f32.mrb[0].mxu0
      %v4785 = vadd.f32 0.0, %v4784
      %v4786 = vpop.f32.mrb[0].mxu0
      %4787 = vmatprep.mubr.f32.mxu0 0.0
      %4788 = vmatmul.mubr.f32.gmra.mrb[0].mxu0 %v4060
      %v4789 = vpop.f32.mrb[0].mxu0
      %v4790 = vadd.f32 0.0, %v4789
      %v4791 = vpop.f32.mrb[0].mxu0
      %4792 = vmatprep.mubr.f32.mxu0 0.0
      %4793 = vmatmul.mubr.f32.gmra.mrb[0].mxu0 %v4063
      %v4794 = vpop.f32.mrb[0].mxu0
      %v4795 = vadd.f32 0.0, %v4794
      %v4796 = vpop.f32.mrb[0].mxu0
      %4797 = vmatprep.mubr.f32.mxu0 0.0
      %4798 = vmatmul.mubr.f32.gmra.mrb[0].mxu0 %v4066
      %v4799 = vpop.f32.mrb[0].mxu0
      %v4800 = vadd.f32 0.0, %v4799
      %v4801 = vpop.f32.mrb[0].mxu0
      %4802 = vmatprep.mubr.f32.mxu0 0.0
      %4803 = vmatmul.mubr.f32.gmra.mrb[0].mxu0 %v4328
      %v4804 = vpop.f32.mrb[0].mxu0
      %v4805 = vadd.f32 0.0, %v4804
      %v4806 = vpop.f32.mrb[0].mxu0
      %4807 = vmatprep.mubr.f32.mxu0 0.0
      %4808 = vmatmul.mubr.f32.gmra.mrb[0].mxu0 %v4331
      %v4809 = vpop.f32.mrb[0].mxu0
      %v4810 = vadd.f32 0.0, %v4809
      %v4811 = vpop.f32.mrb[0].mxu0
      %4812 = vmatprep.mubr.f32.mxu0 0.0
      %4813 = vmatmul.mubr.f32.gmra.mrb[0].mxu0 %v4593
      %v4814 = vpop.f32.mrb[0].mxu0
      %v4815 = vadd.f32 0.0, %v4814
      %v4816 = vpop.f32.mrb[0].mxu0
      %4817 = vmatprep.mubr.f32.mxu0 0.0
      %4818 = vmatmul.mubr.f32.gmra.mrb[0].mxu0 %v4596
      %v4819 = vpop.f32.mrb[0].mxu0
      %v4820 = vadd.f32 0.0, %v4819
      %v4821 = vpop.f32.mrb[0].mxu0
      %4822 = vdwg.mxu0
      %v4823 = vadd.f32 %v4558, %v4665
      %v4824 = vadd.f32 %v4559, %v4670
      %v4825 = vadd.f32 %v4560, %v4675
      %v4826 = vadd.f32 %v4561, %v4680
      %v4827 = vadd.f32 %v4562, %v4685
      %v4828 = vadd.f32 %v4563, %v4690
      %v4829 = vadd.f32 %v4564, %v4695
      %v4830 = vadd.f32 %v4565, %v4700
      %v4831 = vadd.f32 %v4566, %v4705
      %v4832 = vadd.f32 %v4567, %v4710
      %v4833 = vadd.f32 %v4568, %v4715
      %v4834 = vadd.f32 %v4569, %v4720
      %v4835 = vadd.f32 %v4570, %v4725
      %v4836 = vadd.f32 %v4571, %v4730
      %v4837 = vadd.f32 %v4572, %v4735
      %v4838 = vadd.f32 %v4573, %v4740
      %v4839 = vadd.f32 %v4574, %v4745
      %v4840 = vadd.f32 %v4575, %v4750
      %v4841 = vadd.f32 %v4576, %v4755
      %v4842 = vadd.f32 %v4577, %v4760
      %v4843 = vadd.f32 %v4578, %v4765
      %v4844 = vadd.f32 %v4579, %v4770
      %v4845 = vadd.f32 %v4580, %v4775
      %v4846 = vadd.f32 %v4581, %v4780
      %v4847 = vadd.f32 %v4582, %v4785
      %v4848 = vadd.f32 %v4583, %v4790
      %v4849 = vadd.f32 %v4584, %v4795
      %v4850 = vadd.f32 %v4585, %v4800
      %v4851 = vadd.f32 %v4586, %v4805
      %v4852 = vadd.f32 %v4587, %v4810
      %v4853 = vadd.f32 %v4588, %v4815
      %v4854 = vadd.f32 %v4589, %v4820
      %v4855 = vld [vmem:[#allocation2 + $0x2] sm:$0xff]
      %v4856 = vld [vmem:[#allocation2 + $0xa] sm:$0xff]
      %v4857 = vld [vmem:[#allocation2 + $0x1a] sm:$0xff]
      %v4858 = vld [vmem:[#allocation2 + $0x22] sm:$0xff]
      %v4859 = vld [vmem:[#allocation2 + $0x32] sm:$0xff]
      %v4860 = vld [vmem:[#allocation2 + $0x3a] sm:$0xff]
      %v4861 = vld [vmem:[#allocation2 + $0x4a] sm:$0xff]
      %v4862 = vld [vmem:[#allocation2 + $0x52] sm:$0xff]
      %v4863 = vld [vmem:[#allocation2 + $0x62] sm:$0xff]
      %v4864 = vld [vmem:[#allocation2 + $0x6a] sm:$0xff]
      %v4865 = vld [vmem:[#allocation2 + $0x7a] sm:$0xff]
      %v4866 = vld [vmem:[#allocation2 + $0x82] sm:$0xff]
      %v4867 = vld [vmem:[#allocation2 + $0x92] sm:$0xff]
      %v4868 = vld [vmem:[#allocation2 + $0x9a] sm:$0xff]
      %v4869 = vld [vmem:[#allocation2 + $0xaa] sm:$0xff]
      %v4870 = vld [vmem:[#allocation2 + $0xb2] sm:$0xff]
      %v4871 = vld [vmem:[#allocation2 + $0xc2] sm:$0xff]
      %v4872 = vld [vmem:[#allocation2 + $0xca] sm:$0xff]
      %v4873 = vld [vmem:[#allocation2 + $0xda] sm:$0xff]
      %v4874 = vld [vmem:[#allocation2 + $0xe2] sm:$0xff]
      %v4875 = vld [vmem:[#allocation2 + $0xf2] sm:$0xff]
      %v4876 = vld [vmem:[#allocation2 + $0xfa] sm:$0xff]
      %v4877 = vld [vmem:[#allocation2 + $0x10a] sm:$0xff]
      %v4878 = vld [vmem:[#allocation2 + $0x112] sm:$0xff]
      %v4879 = vld [vmem:[#allocation2 + $0x122] sm:$0xff]
      %v4880 = vld [vmem:[#allocation2 + $0x12a] sm:$0xff]
      %v4881 = vld [vmem:[#allocation2 + $0x13a] sm:$0xff]
      %v4882 = vld [vmem:[#allocation2 + $0x142] sm:$0xff]
      %v4883 = vld [vmem:[#allocation2 + $0x152] sm:$0xff]
      %v4884 = vld [vmem:[#allocation2 + $0x15a] sm:$0xff]
      %v4885 = vld [vmem:[#allocation2 + $0x16a] sm:$0xff]
      %v4886 = vld [vmem:[#allocation2 + $0x172] sm:$0xff]
      %v4887 = vld [vmem:[#allocation2 + $0x182] sm:$0xff]
      %v4888 = vld [vmem:[#allocation2 + $0x18a] sm:$0xff]
      %v4889 = vld [vmem:[#allocation2 + $0x19a] sm:$0xff]
      %v4890 = vld [vmem:[#allocation2 + $0x1a2] sm:$0xff]
      %s4891 = scalar_lea.vmem %s3, 16
      %v4892 = vld [vmem:[%s4891] sm:$0xff]
      %v4894 = vsel %vm314, %v4855, 0
      %v4897 = vsel %vm314, %v4856, 0
      %v4900 = vsel %vm314, %v4857, 0
      %v4903 = vsel %vm314, %v4858, 0
      %v4906 = vsel %vm314, %v4859, 0
      %v4909 = vsel %vm314, %v4860, 0
      %v4912 = vsel %vm314, %v4861, 0
      %v4915 = vsel %vm314, %v4862, 0
      %v4918 = vsel %vm314, %v4863, 0
      %v4921 = vsel %vm314, %v4864, 0
      %v4924 = vsel %vm314, %v4865, 0
      %v4927 = vsel %vm314, %v4866, 0
      %v4930 = vsel %vm314, %v4867, 0
      %v4933 = vsel %vm314, %v4868, 0
      %v4936 = vsel %vm314, %v4869, 0
      %v4939 = vsel %vm314, %v4870, 0
      %v4942 = vsel %vm314, %v4871, 0
      %v4945 = vsel %vm314, %v4872, 0
      %v4948 = vsel %vm314, %v4873, 0
      %v4951 = vsel %vm314, %v4874, 0
      %v4954 = vsel %vm314, %v4875, 0
      %v4957 = vsel %vm314, %v4876, 0
      %v4960 = vsel %vm314, %v4877, 0
      %v4963 = vsel %vm314, %v4878, 0
      %v4966 = vsel %vm314, %v4879, 0
      %v4969 = vsel %vm314, %v4880, 0
      %v4972 = vsel %vm314, %v4881, 0
      %v4975 = vsel %vm314, %v4882, 0
      %v4978 = vsel %vm314, %v4883, 0
      %v4981 = vsel %vm314, %v4884, 0
      %v4984 = vsel %vm314, %v4885, 0
      %v4987 = vsel %vm314, %v4886, 0
      %4989 = vmatprep.subr.mxu0 0.0
      %4990 = vmatpush1.msra.mxu0 %v4892
      %4991 = vmatprep.subr.mxu0 0.0
      %4992 = vmatpush1.msra.mxu0 0.0
      %4993 = vmatprep.subr.mxu0 0.0
      %4994 = vmatpush1.msra.mxu0 0.0
      %4995 = vmatprep.subr.mxu0 0.0
      %4996 = vmatpush1.msra.mxu0 0.0
      %4997 = vmatprep.subr.mxu0 0.0
      %4998 = vmatpush1.msra.mxu0 0.0
      %4999 = vmatprep.subr.mxu0 0.0
      %5000 = vmatpush1.msra.mxu0 0.0
      %5001 = vmatprep.subr.mxu0 0.0
      %5002 = vmatpush1.msra.mxu0 0.0
      %5003 = vmatprep.subr.mxu0 0.0
      %5004 = vmatpush1.msra.mxu0 0.0
      %5005 = vmatprep.subr.mxu0 0.0
      %5006 = vmatpush1.msra.mxu0 0.0
      %5007 = vmatprep.subr.mxu0 0.0
      %5008 = vmatpush1.msra.mxu0 0.0
      %5009 = vmatprep.subr.mxu0 0.0
      %5010 = vmatpush1.msra.mxu0 0.0
      %5011 = vmatprep.subr.mxu0 0.0
      %5012 = vmatpush1.msra.mxu0 0.0
      %5013 = vmatprep.subr.mxu0 0.0
      %5014 = vmatpush1.msra.mxu0 0.0
      %5015 = vmatprep.subr.mxu0 0.0
      %5016 = vmatpush1.msra.mxu0 0.0
      %5017 = vmatprep.subr.mxu0 0.0
      %5018 = vmatpush1.msra.mxu0 0.0
      %5019 = vmatprep.subr.mxu0 0.0
      %5020 = vmatpush1.msra.mxu0 0.0
      %5021 = vmatprep.subr.mxu0 0.0
      %5022 = vmatpush1.msra.mxu0 0.0
      %5023 = vmatprep.subr.mxu0 0.0
      %5024 = vmatpush1.msra.mxu0 0.0
      %5025 = vmatprep.subr.mxu0 0.0
      %5026 = vmatpush1.msra.mxu0 0.0
      %5027 = vmatprep.subr.mxu0 0.0
      %5028 = vmatpush1.msra.mxu0 0.0
      %5029 = vmatprep.subr.mxu0 0.0
      %5030 = vmatpush1.msra.mxu0 0.0
      %5031 = vmatprep.subr.mxu0 0.0
      %5032 = vmatpush1.msra.mxu0 0.0
      %5033 = vmatprep.subr.mxu0 0.0
      %5034 = vmatpush1.msra.mxu0 0.0
      %5035 = vmatprep.subr.mxu0 0.0
      %5036 = vmatpush1.msra.mxu0 0.0
      %5037 = vmatprep.subr.mxu0 0.0
      %5038 = vmatpush1.msra.mxu0 0.0
      %5039 = vmatprep.subr.mxu0 0.0
      %5040 = vmatpush1.msra.mxu0 0.0
      %5041 = vmatprep.subr.mxu0 0.0
      %5042 = vmatpush1.msra.mxu0 0.0
      %5043 = vmatprep.subr.mxu0 0.0
      %5044 = vmatpush1.msra.mxu0 0.0
      %5045 = vmatprep.subr.mxu0 0.0
      %5046 = vmatpush1.msra.mxu0 0.0
      %5047 = vmatprep.subr.mxu0 0.0
      %5048 = vmatpush1.msra.mxu0 0.0
      %5049 = vmatprep.subr.mxu0 0.0
      %5050 = vmatpush1.msra.mxu0 0.0
      %5051 = vmatprep.subr.mxu0 0.0
      %5052 = vmatpush1.msra.mxu0 0.0
      %5053 = vmatprep.mubr.f32.mxu0 0.0
      %5054 = vmatmul.mubr.f32.gmra.mrb[0].mxu0 %v4894
      %v5055 = vpop.f32.mrb[0].mxu0
      %v5056 = vadd.f32 0.0, %v5055
      %v5057 = vpop.f32.mrb[0].mxu0
      %5058 = vmatprep.mubr.f32.mxu0 0.0
      %5059 = vmatmul.mubr.f32.gmra.mrb[0].mxu0 %v4897
      %v5060 = vpop.f32.mrb[0].mxu0
      %v5061 = vadd.f32 0.0, %v5060
      %v5062 = vpop.f32.mrb[0].mxu0
      %5063 = vmatprep.mubr.f32.mxu0 0.0
      %5064 = vmatmul.mubr.f32.gmra.mrb[0].mxu0 %v4900
      %v5065 = vpop.f32.mrb[0].mxu0
      %v5066 = vadd.f32 0.0, %v5065
      %v5067 = vpop.f32.mrb[0].mxu0
      %5068 = vmatprep.mubr.f32.mxu0 0.0
      %5069 = vmatmul.mubr.f32.gmra.mrb[0].mxu0 %v4903
      %v5070 = vpop.f32.mrb[0].mxu0
      %v5071 = vadd.f32 0.0, %v5070
      %v5072 = vpop.f32.mrb[0].mxu0
      %5073 = vmatprep.mubr.f32.mxu0 0.0
      %5074 = vmatmul.mubr.f32.gmra.mrb[0].mxu0 %v4906
      %v5075 = vpop.f32.mrb[0].mxu0
      %v5076 = vadd.f32 0.0, %v5075
      %v5077 = vpop.f32.mrb[0].mxu0
      %5078 = vmatprep.mubr.f32.mxu0 0.0
      %5079 = vmatmul.mubr.f32.gmra.mrb[0].mxu0 %v4909
      %v5080 = vpop.f32.mrb[0].mxu0
      %v5081 = vadd.f32 0.0, %v5080
      %v5082 = vpop.f32.mrb[0].mxu0
      %5083 = vmatprep.mubr.f32.mxu0 0.0
      %5084 = vmatmul.mubr.f32.gmra.mrb[0].mxu0 %v4912
      %v5085 = vpop.f32.mrb[0].mxu0
      %v5086 = vadd.f32 0.0, %v5085
      %v5087 = vpop.f32.mrb[0].mxu0
      %5088 = vmatprep.mubr.f32.mxu0 0.0
      %5089 = vmatmul.mubr.f32.gmra.mrb[0].mxu0 %v4915
      %v5090 = vpop.f32.mrb[0].mxu0
      %v5091 = vadd.f32 0.0, %v5090
      %v5092 = vpop.f32.mrb[0].mxu0
      %5093 = vmatprep.mubr.f32.mxu0 0.0
      %5094 = vmatmul.mubr.f32.gmra.mrb[0].mxu0 %v4918
      %v5095 = vpop.f32.mrb[0].mxu0
      %v5096 = vadd.f32 0.0, %v5095
      %v5097 = vpop.f32.mrb[0].mxu0
      %5098 = vmatprep.mubr.f32.mxu0 0.0
      %5099 = vmatmul.mubr.f32.gmra.mrb[0].mxu0 %v4921
      %v5100 = vpop.f32.mrb[0].mxu0
      %v5101 = vadd.f32 0.0, %v5100
      %v5102 = vpop.f32.mrb[0].mxu0
      %5103 = vmatprep.mubr.f32.mxu0 0.0
      %5104 = vmatmul.mubr.f32.gmra.mrb[0].mxu0 %v4924
      %v5105 = vpop.f32.mrb[0].mxu0
      %v5106 = vadd.f32 0.0, %v5105
      %v5107 = vpop.f32.mrb[0].mxu0
      %5108 = vmatprep.mubr.f32.mxu0 0.0
      %5109 = vmatmul.mubr.f32.gmra.mrb[0].mxu0 %v4927
      %v5110 = vpop.f32.mrb[0].mxu0
      %v5111 = vadd.f32 0.0, %v5110
      %v5112 = vpop.f32.mrb[0].mxu0
      %5113 = vmatprep.mubr.f32.mxu0 0.0
      %5114 = vmatmul.mubr.f32.gmra.mrb[0].mxu0 %v4930
      %v5115 = vpop.f32.mrb[0].mxu0
      %v5116 = vadd.f32 0.0, %v5115
      %v5117 = vpop.f32.mrb[0].mxu0
      %5118 = vmatprep.mubr.f32.mxu0 0.0
      %5119 = vmatmul.mubr.f32.gmra.mrb[0].mxu0 %v4933
      %v5120 = vpop.f32.mrb[0].mxu0
      %v5121 = vadd.f32 0.0, %v5120
      %v5122 = vpop.f32.mrb[0].mxu0
      %5123 = vmatprep.mubr.f32.mxu0 0.0
      %5124 = vmatmul.mubr.f32.gmra.mrb[0].mxu0 %v4936
      %v5125 = vpop.f32.mrb[0].mxu0
      %v5126 = vadd.f32 0.0, %v5125
      %v5127 = vpop.f32.mrb[0].mxu0
      %5128 = vmatprep.mubr.f32.mxu0 0.0
      %5129 = vmatmul.mubr.f32.gmra.mrb[0].mxu0 %v4939
      %v5130 = vpop.f32.mrb[0].mxu0
      %v5131 = vadd.f32 0.0, %v5130
      %v5132 = vpop.f32.mrb[0].mxu0
      %5133 = vmatprep.mubr.f32.mxu0 0.0
      %5134 = vmatmul.mubr.f32.gmra.mrb[0].mxu0 %v4942
      %v5135 = vpop.f32.mrb[0].mxu0
      %v5136 = vadd.f32 0.0, %v5135
      %v5137 = vpop.f32.mrb[0].mxu0
      %5138 = vmatprep.mubr.f32.mxu0 0.0
      %5139 = vmatmul.mubr.f32.gmra.mrb[0].mxu0 %v4945
      %v5140 = vpop.f32.mrb[0].mxu0
      %v5141 = vadd.f32 0.0, %v5140
      %v5142 = vpop.f32.mrb[0].mxu0
      %5143 = vmatprep.mubr.f32.mxu0 0.0
      %5144 = vmatmul.mubr.f32.gmra.mrb[0].mxu0 %v4948
      %v5145 = vpop.f32.mrb[0].mxu0
      %v5146 = vadd.f32 0.0, %v5145
      %v5147 = vpop.f32.mrb[0].mxu0
      %5148 = vmatprep.mubr.f32.mxu0 0.0
      %5149 = vmatmul.mubr.f32.gmra.mrb[0].mxu0 %v4951
      %v5150 = vpop.f32.mrb[0].mxu0
      %v5151 = vadd.f32 0.0, %v5150
      %v5152 = vpop.f32.mrb[0].mxu0
      %5153 = vmatprep.mubr.f32.mxu0 0.0
      %5154 = vmatmul.mubr.f32.gmra.mrb[0].mxu0 %v4954
      %v5155 = vpop.f32.mrb[0].mxu0
      %v5156 = vadd.f32 0.0, %v5155
      %v5157 = vpop.f32.mrb[0].mxu0
      %5158 = vmatprep.mubr.f32.mxu0 0.0
      %5159 = vmatmul.mubr.f32.gmra.mrb[0].mxu0 %v4957
      %v5160 = vpop.f32.mrb[0].mxu0
      %v5161 = vadd.f32 0.0, %v5160
      %v5162 = vpop.f32.mrb[0].mxu0
      %5163 = vmatprep.mubr.f32.mxu0 0.0
      %5164 = vmatmul.mubr.f32.gmra.mrb[0].mxu0 %v4960
      %v5165 = vpop.f32.mrb[0].mxu0
      %v5166 = vadd.f32 0.0, %v5165
      %v5167 = vpop.f32.mrb[0].mxu0
      %5168 = vmatprep.mubr.f32.mxu0 0.0
      %5169 = vmatmul.mubr.f32.gmra.mrb[0].mxu0 %v4963
      %v5170 = vpop.f32.mrb[0].mxu0
      %v5171 = vadd.f32 0.0, %v5170
      %v5172 = vpop.f32.mrb[0].mxu0
      %5173 = vmatprep.mubr.f32.mxu0 0.0
      %5174 = vmatmul.mubr.f32.gmra.mrb[0].mxu0 %v4966
      %v5175 = vpop.f32.mrb[0].mxu0
      %v5176 = vadd.f32 0.0, %v5175
      %v5177 = vpop.f32.mrb[0].mxu0
      %5178 = vmatprep.mubr.f32.mxu0 0.0
      %5179 = vmatmul.mubr.f32.gmra.mrb[0].mxu0 %v4969
      %v5180 = vpop.f32.mrb[0].mxu0
      %v5181 = vadd.f32 0.0, %v5180
      %v5182 = vpop.f32.mrb[0].mxu0
      %5183 = vmatprep.mubr.f32.mxu0 0.0
      %5184 = vmatmul.mubr.f32.gmra.mrb[0].mxu0 %v4972
      %v5185 = vpop.f32.mrb[0].mxu0
      %v5186 = vadd.f32 0.0, %v5185
      %v5187 = vpop.f32.mrb[0].mxu0
      %5188 = vmatprep.mubr.f32.mxu0 0.0
      %5189 = vmatmul.mubr.f32.gmra.mrb[0].mxu0 %v4975
      %v5190 = vpop.f32.mrb[0].mxu0
      %v5191 = vadd.f32 0.0, %v5190
      %v5192 = vpop.f32.mrb[0].mxu0
      %5193 = vmatprep.mubr.f32.mxu0 0.0
      %5194 = vmatmul.mubr.f32.gmra.mrb[0].mxu0 %v4978
      %v5195 = vpop.f32.mrb[0].mxu0
      %v5196 = vadd.f32 0.0, %v5195
      %v5197 = vpop.f32.mrb[0].mxu0
      %5198 = vmatprep.mubr.f32.mxu0 0.0
      %5199 = vmatmul.mubr.f32.gmra.mrb[0].mxu0 %v4981
      %v5200 = vpop.f32.mrb[0].mxu0
      %v5201 = vadd.f32 0.0, %v5200
      %v5202 = vpop.f32.mrb[0].mxu0
      %5203 = vmatprep.mubr.f32.mxu0 0.0
      %5204 = vmatmul.mubr.f32.gmra.mrb[0].mxu0 %v4984
      %v5205 = vpop.f32.mrb[0].mxu0
      %v5206 = vadd.f32 0.0, %v5205
      %v5207 = vpop.f32.mrb[0].mxu0
      %5208 = vmatprep.mubr.f32.mxu0 0.0
      %5209 = vmatmul.mubr.f32.gmra.mrb[0].mxu0 %v4987
      %v5210 = vpop.f32.mrb[0].mxu0
      %v5211 = vadd.f32 0.0, %v5210
      %v5212 = vpop.f32.mrb[0].mxu0
      %5213 = vdwg.mxu0
      %v5214 = vadd.f32 %v4823, %v5056
      %v5215 = vadd.f32 %v4824, %v5061
      %v5216 = vadd.f32 %v4825, %v5066
      %v5217 = vadd.f32 %v4826, %v5071
      %v5218 = vadd.f32 %v4827, %v5076
      %v5219 = vadd.f32 %v4828, %v5081
      %v5220 = vadd.f32 %v4829, %v5086
      %v5221 = vadd.f32 %v4830, %v5091
      %v5222 = vadd.f32 %v4831, %v5096
      %v5223 = vadd.f32 %v4832, %v5101
      %v5224 = vadd.f32 %v4833, %v5106
      %v5225 = vadd.f32 %v4834, %v5111
      %v5226 = vadd.f32 %v4835, %v5116
      %v5227 = vadd.f32 %v4836, %v5121
      %v5228 = vadd.f32 %v4837, %v5126
      %v5229 = vadd.f32 %v4838, %v5131
      %v5230 = vadd.f32 %v4839, %v5136
      %v5231 = vadd.f32 %v4840, %v5141
      %v5232 = vadd.f32 %v4841, %v5146
      %v5233 = vadd.f32 %v4842, %v5151
      %v5234 = vadd.f32 %v4843, %v5156
      %v5235 = vadd.f32 %v4844, %v5161
      %v5236 = vadd.f32 %v4845, %v5166
      %v5237 = vadd.f32 %v4846, %v5171
      %v5238 = vadd.f32 %v4847, %v5176
      %v5239 = vadd.f32 %v4848, %v5181
      %v5240 = vadd.f32 %v4849, %v5186
      %v5241 = vadd.f32 %v4850, %v5191
      %v5242 = vadd.f32 %v4851, %v5196
      %v5243 = vadd.f32 %v4852, %v5201
      %v5244 = vadd.f32 %v4853, %v5206
      %v5245 = vadd.f32 %v4854, %v5211
      %s5246 = scalar_lea.vmem %s3, 40
      %v5247 = vld [vmem:[%s5246] sm:$0xff]
      %v5249 = vsel %vm314, %v4887, 0
      %v5252 = vsel %vm314, %v4888, 0
      %5254 = vmatprep.subr.mxu0 0.0
      %5255 = vmatpush1.msra.mxu0 %v5247
      %5256 = vmatprep.subr.mxu0 0.0
      %5257 = vmatpush1.msra.mxu0 0.0
      %5258 = vmatprep.subr.mxu0 0.0
      %5259 = vmatpush1.msra.mxu0 0.0
      %5260 = vmatprep.subr.mxu0 0.0
      %5261 = vmatpush1.msra.mxu0 0.0
      %5262 = vmatprep.subr.mxu0 0.0
      %5263 = vmatpush1.msra.mxu0 0.0
      %5264 = vmatprep.subr.mxu0 0.0
      %5265 = vmatpush1.msra.mxu0 0.0
      %5266 = vmatprep.subr.mxu0 0.0
      %5267 = vmatpush1.msra.mxu0 0.0
      %5268 = vmatprep.subr.mxu0 0.0
      %5269 = vmatpush1.msra.mxu0 0.0
      %5270 = vmatprep.subr.mxu0 0.0
      %5271 = vmatpush1.msra.mxu0 0.0
      %5272 = vmatprep.subr.mxu0 0.0
      %5273 = vmatpush1.msra.mxu0 0.0
      %5274 = vmatprep.subr.mxu0 0.0
      %5275 = vmatpush1.msra.mxu0 0.0
      %5276 = vmatprep.subr.mxu0 0.0
      %5277 = vmatpush1.msra.mxu0 0.0
      %5278 = vmatprep.subr.mxu0 0.0
      %5279 = vmatpush1.msra.mxu0 0.0
      %5280 = vmatprep.subr.mxu0 0.0
      %5281 = vmatpush1.msra.mxu0 0.0
      %5282 = vmatprep.subr.mxu0 0.0
      %5283 = vmatpush1.msra.mxu0 0.0
      %5284 = vmatprep.subr.mxu0 0.0
      %5285 = vmatpush1.msra.mxu0 0.0
      %5286 = vmatprep.subr.mxu0 0.0
      %5287 = vmatpush1.msra.mxu0 0.0
      %5288 = vmatprep.subr.mxu0 0.0
      %5289 = vmatpush1.msra.mxu0 0.0
      %5290 = vmatprep.subr.mxu0 0.0
      %5291 = vmatpush1.msra.mxu0 0.0
      %5292 = vmatprep.subr.mxu0 0.0
      %5293 = vmatpush1.msra.mxu0 0.0
      %5294 = vmatprep.subr.mxu0 0.0
      %5295 = vmatpush1.msra.mxu0 0.0
      %5296 = vmatprep.subr.mxu0 0.0
      %5297 = vmatpush1.msra.mxu0 0.0
      %5298 = vmatprep.subr.mxu0 0.0
      %5299 = vmatpush1.msra.mxu0 0.0
      %5300 = vmatprep.subr.mxu0 0.0
      %5301 = vmatpush1.msra.mxu0 0.0
      %5302 = vmatprep.subr.mxu0 0.0
      %5303 = vmatpush1.msra.mxu0 0.0
      %5304 = vmatprep.subr.mxu0 0.0
      %5305 = vmatpush1.msra.mxu0 0.0
      %5306 = vmatprep.subr.mxu0 0.0
      %5307 = vmatpush1.msra.mxu0 0.0
      %5308 = vmatprep.subr.mxu0 0.0
      %5309 = vmatpush1.msra.mxu0 0.0
      %5310 = vmatprep.subr.mxu0 0.0
      %5311 = vmatpush1.msra.mxu0 0.0
      %5312 = vmatprep.subr.mxu0 0.0
      %5313 = vmatpush1.msra.mxu0 0.0
      %5314 = vmatprep.subr.mxu0 0.0
      %5315 = vmatpush1.msra.mxu0 0.0
      %5316 = vmatprep.subr.mxu0 0.0
      %5317 = vmatpush1.msra.mxu0 0.0
      %5318 = vmatprep.mubr.f32.mxu0 0.0
      %5319 = vmatmul.mubr.f32.gmra.mrb[0].mxu0 %v4900
      %v5320 = vpop.f32.mrb[0].mxu0
      %v5321 = vadd.f32 0.0, %v5320
      %v5322 = vpop.f32.mrb[0].mxu0
      %5323 = vmatprep.mubr.f32.mxu0 0.0
      %5324 = vmatmul.mubr.f32.gmra.mrb[0].mxu0 %v4903
      %v5325 = vpop.f32.mrb[0].mxu0
      %v5326 = vadd.f32 0.0, %v5325
      %v5327 = vpop.f32.mrb[0].mxu0
      %5328 = vmatprep.mubr.f32.mxu0 0.0
      %5329 = vmatmul.mubr.f32.gmra.mrb[0].mxu0 %v4906
      %v5330 = vpop.f32.mrb[0].mxu0
      %v5331 = vadd.f32 0.0, %v5330
      %v5332 = vpop.f32.mrb[0].mxu0
      %5333 = vmatprep.mubr.f32.mxu0 0.0
      %5334 = vmatmul.mubr.f32.gmra.mrb[0].mxu0 %v4909
      %v5335 = vpop.f32.mrb[0].mxu0
      %v5336 = vadd.f32 0.0, %v5335
      %v5337 = vpop.f32.mrb[0].mxu0
      %5338 = vmatprep.mubr.f32.mxu0 0.0
      %5339 = vmatmul.mubr.f32.gmra.mrb[0].mxu0 %v4912
      %v5340 = vpop.f32.mrb[0].mxu0
      %v5341 = vadd.f32 0.0, %v5340
      %v5342 = vpop.f32.mrb[0].mxu0
      %5343 = vmatprep.mubr.f32.mxu0 0.0
      %5344 = vmatmul.mubr.f32.gmra.mrb[0].mxu0 %v4915
      %v5345 = vpop.f32.mrb[0].mxu0
      %v5346 = vadd.f32 0.0, %v5345
      %v5347 = vpop.f32.mrb[0].mxu0
      %5348 = vmatprep.mubr.f32.mxu0 0.0
      %5349 = vmatmul.mubr.f32.gmra.mrb[0].mxu0 %v4918
      %v5350 = vpop.f32.mrb[0].mxu0
      %v5351 = vadd.f32 0.0, %v5350
      %v5352 = vpop.f32.mrb[0].mxu0
      %5353 = vmatprep.mubr.f32.mxu0 0.0
      %5354 = vmatmul.mubr.f32.gmra.mrb[0].mxu0 %v4921
      %v5355 = vpop.f32.mrb[0].mxu0
      %v5356 = vadd.f32 0.0, %v5355
      %v5357 = vpop.f32.mrb[0].mxu0
      %5358 = vmatprep.mubr.f32.mxu0 0.0
      %5359 = vmatmul.mubr.f32.gmra.mrb[0].mxu0 %v4924
      %v5360 = vpop.f32.mrb[0].mxu0
      %v5361 = vadd.f32 0.0, %v5360
      %v5362 = vpop.f32.mrb[0].mxu0
      %5363 = vmatprep.mubr.f32.mxu0 0.0
      %5364 = vmatmul.mubr.f32.gmra.mrb[0].mxu0 %v4927
      %v5365 = vpop.f32.mrb[0].mxu0
      %v5366 = vadd.f32 0.0, %v5365
      %v5367 = vpop.f32.mrb[0].mxu0
      %5368 = vmatprep.mubr.f32.mxu0 0.0
      %5369 = vmatmul.mubr.f32.gmra.mrb[0].mxu0 %v4930
      %v5370 = vpop.f32.mrb[0].mxu0
      %v5371 = vadd.f32 0.0, %v5370
      %v5372 = vpop.f32.mrb[0].mxu0
      %5373 = vmatprep.mubr.f32.mxu0 0.0
      %5374 = vmatmul.mubr.f32.gmra.mrb[0].mxu0 %v4933
      %v5375 = vpop.f32.mrb[0].mxu0
      %v5376 = vadd.f32 0.0, %v5375
      %v5377 = vpop.f32.mrb[0].mxu0
      %5378 = vmatprep.mubr.f32.mxu0 0.0
      %5379 = vmatmul.mubr.f32.gmra.mrb[0].mxu0 %v4936
      %v5380 = vpop.f32.mrb[0].mxu0
      %v5381 = vadd.f32 0.0, %v5380
      %v5382 = vpop.f32.mrb[0].mxu0
      %5383 = vmatprep.mubr.f32.mxu0 0.0
      %5384 = vmatmul.mubr.f32.gmra.mrb[0].mxu0 %v4939
      %v5385 = vpop.f32.mrb[0].mxu0
      %v5386 = vadd.f32 0.0, %v5385
      %v5387 = vpop.f32.mrb[0].mxu0
      %5388 = vmatprep.mubr.f32.mxu0 0.0
      %5389 = vmatmul.mubr.f32.gmra.mrb[0].mxu0 %v4942
      %v5390 = vpop.f32.mrb[0].mxu0
      %v5391 = vadd.f32 0.0, %v5390
      %v5392 = vpop.f32.mrb[0].mxu0
      %5393 = vmatprep.mubr.f32.mxu0 0.0
      %5394 = vmatmul.mubr.f32.gmra.mrb[0].mxu0 %v4945
      %v5395 = vpop.f32.mrb[0].mxu0
      %v5396 = vadd.f32 0.0, %v5395
      %v5397 = vpop.f32.mrb[0].mxu0
      %5398 = vmatprep.mubr.f32.mxu0 0.0
      %5399 = vmatmul.mubr.f32.gmra.mrb[0].mxu0 %v4948
      %v5400 = vpop.f32.mrb[0].mxu0
      %v5401 = vadd.f32 0.0, %v5400
      %v5402 = vpop.f32.mrb[0].mxu0
      %5403 = vmatprep.mubr.f32.mxu0 0.0
      %5404 = vmatmul.mubr.f32.gmra.mrb[0].mxu0 %v4951
      %v5405 = vpop.f32.mrb[0].mxu0
      %v5406 = vadd.f32 0.0, %v5405
      %v5407 = vpop.f32.mrb[0].mxu0
      %5408 = vmatprep.mubr.f32.mxu0 0.0
      %5409 = vmatmul.mubr.f32.gmra.mrb[0].mxu0 %v4954
      %v5410 = vpop.f32.mrb[0].mxu0
      %v5411 = vadd.f32 0.0, %v5410
      %v5412 = vpop.f32.mrb[0].mxu0
      %5413 = vmatprep.mubr.f32.mxu0 0.0
      %5414 = vmatmul.mubr.f32.gmra.mrb[0].mxu0 %v4957
      %v5415 = vpop.f32.mrb[0].mxu0
      %v5416 = vadd.f32 0.0, %v5415
      %v5417 = vpop.f32.mrb[0].mxu0
      %5418 = vmatprep.mubr.f32.mxu0 0.0
      %5419 = vmatmul.mubr.f32.gmra.mrb[0].mxu0 %v4960
      %v5420 = vpop.f32.mrb[0].mxu0
      %v5421 = vadd.f32 0.0, %v5420
      %v5422 = vpop.f32.mrb[0].mxu0
      %5423 = vmatprep.mubr.f32.mxu0 0.0
      %5424 = vmatmul.mubr.f32.gmra.mrb[0].mxu0 %v4963
      %v5425 = vpop.f32.mrb[0].mxu0
      %v5426 = vadd.f32 0.0, %v5425
      %v5427 = vpop.f32.mrb[0].mxu0
      %5428 = vmatprep.mubr.f32.mxu0 0.0
      %5429 = vmatmul.mubr.f32.gmra.mrb[0].mxu0 %v4966
      %v5430 = vpop.f32.mrb[0].mxu0
      %v5431 = vadd.f32 0.0, %v5430
      %v5432 = vpop.f32.mrb[0].mxu0
      %5433 = vmatprep.mubr.f32.mxu0 0.0
      %5434 = vmatmul.mubr.f32.gmra.mrb[0].mxu0 %v4969
      %v5435 = vpop.f32.mrb[0].mxu0
      %v5436 = vadd.f32 0.0, %v5435
      %v5437 = vpop.f32.mrb[0].mxu0
      %5438 = vmatprep.mubr.f32.mxu0 0.0
      %5439 = vmatmul.mubr.f32.gmra.mrb[0].mxu0 %v4972
      %v5440 = vpop.f32.mrb[0].mxu0
      %v5441 = vadd.f32 0.0, %v5440
      %v5442 = vpop.f32.mrb[0].mxu0
      %5443 = vmatprep.mubr.f32.mxu0 0.0
      %5444 = vmatmul.mubr.f32.gmra.mrb[0].mxu0 %v4975
      %v5445 = vpop.f32.mrb[0].mxu0
      %v5446 = vadd.f32 0.0, %v5445
      %v5447 = vpop.f32.mrb[0].mxu0
      %5448 = vmatprep.mubr.f32.mxu0 0.0
      %5449 = vmatmul.mubr.f32.gmra.mrb[0].mxu0 %v4978
      %v5450 = vpop.f32.mrb[0].mxu0
      %v5451 = vadd.f32 0.0, %v5450
      %v5452 = vpop.f32.mrb[0].mxu0
      %5453 = vmatprep.mubr.f32.mxu0 0.0
      %5454 = vmatmul.mubr.f32.gmra.mrb[0].mxu0 %v4981
      %v5455 = vpop.f32.mrb[0].mxu0
      %v5456 = vadd.f32 0.0, %v5455
      %v5457 = vpop.f32.mrb[0].mxu0
      %5458 = vmatprep.mubr.f32.mxu0 0.0
      %5459 = vmatmul.mubr.f32.gmra.mrb[0].mxu0 %v4984
      %v5460 = vpop.f32.mrb[0].mxu0
      %v5461 = vadd.f32 0.0, %v5460
      %v5462 = vpop.f32.mrb[0].mxu0
      %5463 = vmatprep.mubr.f32.mxu0 0.0
      %5464 = vmatmul.mubr.f32.gmra.mrb[0].mxu0 %v4987
      %v5465 = vpop.f32.mrb[0].mxu0
      %v5466 = vadd.f32 0.0, %v5465
      %v5467 = vpop.f32.mrb[0].mxu0
      %5468 = vmatprep.mubr.f32.mxu0 0.0
      %5469 = vmatmul.mubr.f32.gmra.mrb[0].mxu0 %v5249
      %v5470 = vpop.f32.mrb[0].mxu0
      %v5471 = vadd.f32 0.0, %v5470
      %v5472 = vpop.f32.mrb[0].mxu0
      %5473 = vmatprep.mubr.f32.mxu0 0.0
      %5474 = vmatmul.mubr.f32.gmra.mrb[0].mxu0 %v5252
      %v5475 = vpop.f32.mrb[0].mxu0
      %v5476 = vadd.f32 0.0, %v5475
      %v5477 = vpop.f32.mrb[0].mxu0
      %5478 = vdwg.mxu0
      %v5479 = vadd.f32 %v5214, %v5321
      %v5480 = vadd.f32 %v5215, %v5326
      %v5481 = vadd.f32 %v5216, %v5331
      %v5482 = vadd.f32 %v5217, %v5336
      %v5483 = vadd.f32 %v5218, %v5341
      %v5484 = vadd.f32 %v5219, %v5346
      %v5485 = vadd.f32 %v5220, %v5351
      %v5486 = vadd.f32 %v5221, %v5356
      %v5487 = vadd.f32 %v5222, %v5361
      %v5488 = vadd.f32 %v5223, %v5366
      %v5489 = vadd.f32 %v5224, %v5371
      %v5490 = vadd.f32 %v5225, %v5376
      %v5491 = vadd.f32 %v5226, %v5381
      %v5492 = vadd.f32 %v5227, %v5386
      %v5493 = vadd.f32 %v5228, %v5391
      %v5494 = vadd.f32 %v5229, %v5396
      %v5495 = vadd.f32 %v5230, %v5401
      %v5496 = vadd.f32 %v5231, %v5406
      %v5497 = vadd.f32 %v5232, %v5411
      %v5498 = vadd.f32 %v5233, %v5416
      %v5499 = vadd.f32 %v5234, %v5421
      %v5500 = vadd.f32 %v5235, %v5426
      %v5501 = vadd.f32 %v5236, %v5431
      %v5502 = vadd.f32 %v5237, %v5436
      %v5503 = vadd.f32 %v5238, %v5441
      %v5504 = vadd.f32 %v5239, %v5446
      %v5505 = vadd.f32 %v5240, %v5451
      %v5506 = vadd.f32 %v5241, %v5456
      %v5507 = vadd.f32 %v5242, %v5461
      %v5508 = vadd.f32 %v5243, %v5466
      %v5509 = vadd.f32 %v5244, %v5471
      %v5510 = vadd.f32 %v5245, %v5476
      %s5511 = scalar_lea.vmem %s3, 64
      %v5512 = vld [vmem:[%s5511] sm:$0xff]
      %v5514 = vsel %vm314, %v4889, 0
      %v5517 = vsel %vm314, %v4890, 0
      %5519 = vmatprep.subr.mxu0 0.0
      %5520 = vmatpush1.msra.mxu0 %v5512
      %5521 = vmatprep.subr.mxu0 0.0
      %5522 = vmatpush1.msra.mxu0 0.0
      %5523 = vmatprep.subr.mxu0 0.0
      %5524 = vmatpush1.msra.mxu0 0.0
      %5525 = vmatprep.subr.mxu0 0.0
      %5526 = vmatpush1.msra.mxu0 0.0
      %5527 = vmatprep.subr.mxu0 0.0
      %5528 = vmatpush1.msra.mxu0 0.0
      %5529 = vmatprep.subr.mxu0 0.0
      %5530 = vmatpush1.msra.mxu0 0.0
      %5531 = vmatprep.subr.mxu0 0.0
      %5532 = vmatpush1.msra.mxu0 0.0
      %5533 = vmatprep.subr.mxu0 0.0
      %5534 = vmatpush1.msra.mxu0 0.0
      %5535 = vmatprep.subr.mxu0 0.0
      %5536 = vmatpush1.msra.mxu0 0.0
      %5537 = vmatprep.subr.mxu0 0.0
      %5538 = vmatpush1.msra.mxu0 0.0
      %5539 = vmatprep.subr.mxu0 0.0
      %5540 = vmatpush1.msra.mxu0 0.0
      %5541 = vmatprep.subr.mxu0 0.0
      %5542 = vmatpush1.msra.mxu0 0.0
      %5543 = vmatprep.subr.mxu0 0.0
      %5544 = vmatpush1.msra.mxu0 0.0
      %5545 = vmatprep.subr.mxu0 0.0
      %5546 = vmatpush1.msra.mxu0 0.0
      %5547 = vmatprep.subr.mxu0 0.0
      %5548 = vmatpush1.msra.mxu0 0.0
      %5549 = vmatprep.subr.mxu0 0.0
      %5550 = vmatpush1.msra.mxu0 0.0
      %5551 = vmatprep.subr.mxu0 0.0
      %5552 = vmatpush1.msra.mxu0 0.0
      %5553 = vmatprep.subr.mxu0 0.0
      %5554 = vmatpush1.msra.mxu0 0.0
      %5555 = vmatprep.subr.mxu0 0.0
      %5556 = vmatpush1.msra.mxu0 0.0
      %5557 = vmatprep.subr.mxu0 0.0
      %5558 = vmatpush1.msra.mxu0 0.0
      %5559 = vmatprep.subr.mxu0 0.0
      %5560 = vmatpush1.msra.mxu0 0.0
      %5561 = vmatprep.subr.mxu0 0.0
      %5562 = vmatpush1.msra.mxu0 0.0
      %5563 = vmatprep.subr.mxu0 0.0
      %5564 = vmatpush1.msra.mxu0 0.0
      %5565 = vmatprep.subr.mxu0 0.0
      %5566 = vmatpush1.msra.mxu0 0.0
      %5567 = vmatprep.subr.mxu0 0.0
      %5568 = vmatpush1.msra.mxu0 0.0
      %5569 = vmatprep.subr.mxu0 0.0
      %5570 = vmatpush1.msra.mxu0 0.0
      %5571 = vmatprep.subr.mxu0 0.0
      %5572 = vmatpush1.msra.mxu0 0.0
      %5573 = vmatprep.subr.mxu0 0.0
      %5574 = vmatpush1.msra.mxu0 0.0
      %5575 = vmatprep.subr.mxu0 0.0
      %5576 = vmatpush1.msra.mxu0 0.0
      %5577 = vmatprep.subr.mxu0 0.0
      %5578 = vmatpush1.msra.mxu0 0.0
      %5579 = vmatprep.subr.mxu0 0.0
      %5580 = vmatpush1.msra.mxu0 0.0
      %5581 = vmatprep.subr.mxu0 0.0
      %5582 = vmatpush1.msra.mxu0 0.0
      %5583 = vmatprep.mubr.f32.mxu0 0.0
      %5584 = vmatmul.mubr.f32.gmra.mrb[0].mxu0 %v4906
      %v5585 = vpop.f32.mrb[0].mxu0
      %v5586 = vadd.f32 0.0, %v5585
      %v5587 = vpop.f32.mrb[0].mxu0
      %5588 = vmatprep.mubr.f32.mxu0 0.0
      %5589 = vmatmul.mubr.f32.gmra.mrb[0].mxu0 %v4909
      %v5590 = vpop.f32.mrb[0].mxu0
      %v5591 = vadd.f32 0.0, %v5590
      %v5592 = vpop.f32.mrb[0].mxu0
      %5593 = vmatprep.mubr.f32.mxu0 0.0
      %5594 = vmatmul.mubr.f32.gmra.mrb[0].mxu0 %v4912
      %v5595 = vpop.f32.mrb[0].mxu0
      %v5596 = vadd.f32 0.0, %v5595
      %v5597 = vpop.f32.mrb[0].mxu0
      %5598 = vmatprep.mubr.f32.mxu0 0.0
      %5599 = vmatmul.mubr.f32.gmra.mrb[0].mxu0 %v4915
      %v5600 = vpop.f32.mrb[0].mxu0
      %v5601 = vadd.f32 0.0, %v5600
      %v5602 = vpop.f32.mrb[0].mxu0
      %5603 = vmatprep.mubr.f32.mxu0 0.0
      %5604 = vmatmul.mubr.f32.gmra.mrb[0].mxu0 %v4918
      %v5605 = vpop.f32.mrb[0].mxu0
      %v5606 = vadd.f32 0.0, %v5605
      %v5607 = vpop.f32.mrb[0].mxu0
      %5608 = vmatprep.mubr.f32.mxu0 0.0
      %5609 = vmatmul.mubr.f32.gmra.mrb[0].mxu0 %v4921
      %v5610 = vpop.f32.mrb[0].mxu0
      %v5611 = vadd.f32 0.0, %v5610
      %v5612 = vpop.f32.mrb[0].mxu0
      %5613 = vmatprep.mubr.f32.mxu0 0.0
      %5614 = vmatmul.mubr.f32.gmra.mrb[0].mxu0 %v4924
      %v5615 = vpop.f32.mrb[0].mxu0
      %v5616 = vadd.f32 0.0, %v5615
      %v5617 = vpop.f32.mrb[0].mxu0
      %5618 = vmatprep.mubr.f32.mxu0 0.0
      %5619 = vmatmul.mubr.f32.gmra.mrb[0].mxu0 %v4927
      %v5620 = vpop.f32.mrb[0].mxu0
      %v5621 = vadd.f32 0.0, %v5620
      %v5622 = vpop.f32.mrb[0].mxu0
      %5623 = vmatprep.mubr.f32.mxu0 0.0
      %5624 = vmatmul.mubr.f32.gmra.mrb[0].mxu0 %v4930
      %v5625 = vpop.f32.mrb[0].mxu0
      %v5626 = vadd.f32 0.0, %v5625
      %v5627 = vpop.f32.mrb[0].mxu0
      %5628 = vmatprep.mubr.f32.mxu0 0.0
      %5629 = vmatmul.mubr.f32.gmra.mrb[0].mxu0 %v4933
      %v5630 = vpop.f32.mrb[0].mxu0
      %v5631 = vadd.f32 0.0, %v5630
      %v5632 = vpop.f32.mrb[0].mxu0
      %5633 = vmatprep.mubr.f32.mxu0 0.0
      %5634 = vmatmul.mubr.f32.gmra.mrb[0].mxu0 %v4936
      %v5635 = vpop.f32.mrb[0].mxu0
      %v5636 = vadd.f32 0.0, %v5635
      %v5637 = vpop.f32.mrb[0].mxu0
      %5638 = vmatprep.mubr.f32.mxu0 0.0
      %5639 = vmatmul.mubr.f32.gmra.mrb[0].mxu0 %v4939
      %v5640 = vpop.f32.mrb[0].mxu0
      %v5641 = vadd.f32 0.0, %v5640
      %v5642 = vpop.f32.mrb[0].mxu0
      %5643 = vmatprep.mubr.f32.mxu0 0.0
      %5644 = vmatmul.mubr.f32.gmra.mrb[0].mxu0 %v4942
      %v5645 = vpop.f32.mrb[0].mxu0
      %v5646 = vadd.f32 0.0, %v5645
      %v5647 = vpop.f32.mrb[0].mxu0
      %5648 = vmatprep.mubr.f32.mxu0 0.0
      %5649 = vmatmul.mubr.f32.gmra.mrb[0].mxu0 %v4945
      %v5650 = vpop.f32.mrb[0].mxu0
      %v5651 = vadd.f32 0.0, %v5650
      %v5652 = vpop.f32.mrb[0].mxu0
      %5653 = vmatprep.mubr.f32.mxu0 0.0
      %5654 = vmatmul.mubr.f32.gmra.mrb[0].mxu0 %v4948
      %v5655 = vpop.f32.mrb[0].mxu0
      %v5656 = vadd.f32 0.0, %v5655
      %v5657 = vpop.f32.mrb[0].mxu0
      %5658 = vmatprep.mubr.f32.mxu0 0.0
      %5659 = vmatmul.mubr.f32.gmra.mrb[0].mxu0 %v4951
      %v5660 = vpop.f32.mrb[0].mxu0
      %v5661 = vadd.f32 0.0, %v5660
      %v5662 = vpop.f32.mrb[0].mxu0
      %5663 = vmatprep.mubr.f32.mxu0 0.0
      %5664 = vmatmul.mubr.f32.gmra.mrb[0].mxu0 %v4954
      %v5665 = vpop.f32.mrb[0].mxu0
      %v5666 = vadd.f32 0.0, %v5665
      %v5667 = vpop.f32.mrb[0].mxu0
      %5668 = vmatprep.mubr.f32.mxu0 0.0
      %5669 = vmatmul.mubr.f32.gmra.mrb[0].mxu0 %v4957
      %v5670 = vpop.f32.mrb[0].mxu0
      %v5671 = vadd.f32 0.0, %v5670
      %v5672 = vpop.f32.mrb[0].mxu0
      %5673 = vmatprep.mubr.f32.mxu0 0.0
      %5674 = vmatmul.mubr.f32.gmra.mrb[0].mxu0 %v4960
      %v5675 = vpop.f32.mrb[0].mxu0
      %v5676 = vadd.f32 0.0, %v5675
      %v5677 = vpop.f32.mrb[0].mxu0
      %5678 = vmatprep.mubr.f32.mxu0 0.0
      %5679 = vmatmul.mubr.f32.gmra.mrb[0].mxu0 %v4963
      %v5680 = vpop.f32.mrb[0].mxu0
      %v5681 = vadd.f32 0.0, %v5680
      %v5682 = vpop.f32.mrb[0].mxu0
      %5683 = vmatprep.mubr.f32.mxu0 0.0
      %5684 = vmatmul.mubr.f32.gmra.mrb[0].mxu0 %v4966
      %v5685 = vpop.f32.mrb[0].mxu0
      %v5686 = vadd.f32 0.0, %v5685
      %v5687 = vpop.f32.mrb[0].mxu0
      %5688 = vmatprep.mubr.f32.mxu0 0.0
      %5689 = vmatmul.mubr.f32.gmra.mrb[0].mxu0 %v4969
      %v5690 = vpop.f32.mrb[0].mxu0
      %v5691 = vadd.f32 0.0, %v5690
      %v5692 = vpop.f32.mrb[0].mxu0
      %5693 = vmatprep.mubr.f32.mxu0 0.0
      %5694 = vmatmul.mubr.f32.gmra.mrb[0].mxu0 %v4972
      %v5695 = vpop.f32.mrb[0].mxu0
      %v5696 = vadd.f32 0.0, %v5695
      %v5697 = vpop.f32.mrb[0].mxu0
      %5698 = vmatprep.mubr.f32.mxu0 0.0
      %5699 = vmatmul.mubr.f32.gmra.mrb[0].mxu0 %v4975
      %v5700 = vpop.f32.mrb[0].mxu0
      %v5701 = vadd.f32 0.0, %v5700
      %v5702 = vpop.f32.mrb[0].mxu0
      %5703 = vmatprep.mubr.f32.mxu0 0.0
      %5704 = vmatmul.mubr.f32.gmra.mrb[0].mxu0 %v4978
      %v5705 = vpop.f32.mrb[0].mxu0
      %v5706 = vadd.f32 0.0, %v5705
      %v5707 = vpop.f32.mrb[0].mxu0
      %5708 = vmatprep.mubr.f32.mxu0 0.0
      %5709 = vmatmul.mubr.f32.gmra.mrb[0].mxu0 %v4981
      %v5710 = vpop.f32.mrb[0].mxu0
      %v5711 = vadd.f32 0.0, %v5710
      %v5712 = vpop.f32.mrb[0].mxu0
      %5713 = vmatprep.mubr.f32.mxu0 0.0
      %5714 = vmatmul.mubr.f32.gmra.mrb[0].mxu0 %v4984
      %v5715 = vpop.f32.mrb[0].mxu0
      %v5716 = vadd.f32 0.0, %v5715
      %v5717 = vpop.f32.mrb[0].mxu0
      %5718 = vmatprep.mubr.f32.mxu0 0.0
      %5719 = vmatmul.mubr.f32.gmra.mrb[0].mxu0 %v4987
      %v5720 = vpop.f32.mrb[0].mxu0
      %v5721 = vadd.f32 0.0, %v5720
      %v5722 = vpop.f32.mrb[0].mxu0
      %5723 = vmatprep.mubr.f32.mxu0 0.0
      %5724 = vmatmul.mubr.f32.gmra.mrb[0].mxu0 %v5249
      %v5725 = vpop.f32.mrb[0].mxu0
      %v5726 = vadd.f32 0.0, %v5725
      %v5727 = vpop.f32.mrb[0].mxu0
      %5728 = vmatprep.mubr.f32.mxu0 0.0
      %5729 = vmatmul.mubr.f32.gmra.mrb[0].mxu0 %v5252
      %v5730 = vpop.f32.mrb[0].mxu0
      %v5731 = vadd.f32 0.0, %v5730
      %v5732 = vpop.f32.mrb[0].mxu0
      %5733 = vmatprep.mubr.f32.mxu0 0.0
      %5734 = vmatmul.mubr.f32.gmra.mrb[0].mxu0 %v5514
      %v5735 = vpop.f32.mrb[0].mxu0
      %v5736 = vadd.f32 0.0, %v5735
      %v5737 = vpop.f32.mrb[0].mxu0
      %5738 = vmatprep.mubr.f32.mxu0 0.0
      %5739 = vmatmul.mubr.f32.gmra.mrb[0].mxu0 %v5517
      %v5740 = vpop.f32.mrb[0].mxu0
      %v5741 = vadd.f32 0.0, %v5740
      %v5742 = vpop.f32.mrb[0].mxu0
      %5743 = vdwg.mxu0
      %v5744 = vadd.f32 %v5479, %v5586
      %v5745 = vadd.f32 %v5480, %v5591
      %v5746 = vadd.f32 %v5481, %v5596
      %v5747 = vadd.f32 %v5482, %v5601
      %v5748 = vadd.f32 %v5483, %v5606
      %v5749 = vadd.f32 %v5484, %v5611
      %v5750 = vadd.f32 %v5485, %v5616
      %v5751 = vadd.f32 %v5486, %v5621
      %v5752 = vadd.f32 %v5487, %v5626
      %v5753 = vadd.f32 %v5488, %v5631
      %v5754 = vadd.f32 %v5489, %v5636
      %v5755 = vadd.f32 %v5490, %v5641
      %v5756 = vadd.f32 %v5491, %v5646
      %v5757 = vadd.f32 %v5492, %v5651
      %v5758 = vadd.f32 %v5493, %v5656
      %v5759 = vadd.f32 %v5494, %v5661
      %v5760 = vadd.f32 %v5495, %v5666
      %v5761 = vadd.f32 %v5496, %v5671
      %v5762 = vadd.f32 %v5497, %v5676
      %v5763 = vadd.f32 %v5498, %v5681
      %v5764 = vadd.f32 %v5499, %v5686
      %v5765 = vadd.f32 %v5500, %v5691
      %v5766 = vadd.f32 %v5501, %v5696
      %v5767 = vadd.f32 %v5502, %v5701
      %v5768 = vadd.f32 %v5503, %v5706
      %v5769 = vadd.f32 %v5504, %v5711
      %v5770 = vadd.f32 %v5505, %v5716
      %v5771 = vadd.f32 %v5506, %v5721
      %v5772 = vadd.f32 %v5507, %v5726
      %v5773 = vadd.f32 %v5508, %v5731
      %v5774 = vadd.f32 %v5509, %v5736
      %v5775 = vadd.f32 %v5510, %v5741
      %v5776 = vld [vmem:[%s4] sm:$0x1]
      %v5778 = vlaneseq
      %v5779 = vshrl.u32 %v5778, 7
      %v5780 = vsub.s32 0, %v5779
      %v5781 = vrot.slane %v5776, %v5780
      %v5783 = vadd.f32 %v5744, %v5781
      %v5784 = vadd.f32 %v5745, %v5781
      %v5785 = vadd.f32 %v5746, %v5781
      %v5786 = vadd.f32 %v5747, %v5781
      %v5787 = vadd.f32 %v5748, %v5781
      %v5788 = vadd.f32 %v5749, %v5781
      %v5789 = vadd.f32 %v5750, %v5781
      %v5790 = vadd.f32 %v5751, %v5781
      %v5791 = vadd.f32 %v5752, %v5781
      %v5792 = vadd.f32 %v5753, %v5781
      %v5793 = vadd.f32 %v5754, %v5781
      %v5794 = vadd.f32 %v5755, %v5781
      %v5795 = vadd.f32 %v5756, %v5781
      %v5796 = vadd.f32 %v5757, %v5781
      %v5797 = vadd.f32 %v5758, %v5781
      %v5798 = vadd.f32 %v5759, %v5781
      %v5799 = vadd.f32 %v5760, %v5781
      %v5800 = vadd.f32 %v5761, %v5781
      %v5801 = vadd.f32 %v5762, %v5781
      %v5802 = vadd.f32 %v5763, %v5781
      %v5803 = vadd.f32 %v5764, %v5781
      %v5804 = vadd.f32 %v5765, %v5781
      %v5805 = vadd.f32 %v5766, %v5781
      %v5806 = vadd.f32 %v5767, %v5781
      %v5807 = vadd.f32 %v5768, %v5781
      %v5808 = vadd.f32 %v5769, %v5781
      %v5809 = vadd.f32 %v5770, %v5781
      %v5810 = vadd.f32 %v5771, %v5781
      %v5811 = vadd.f32 %v5772, %v5781
      %v5812 = vadd.f32 %v5773, %v5781
      %v5813 = vadd.f32 %v5774, %v5781
      %v5814 = vadd.f32 %v5775, %v5781
      %v5815 = vmax.f32 %v5783, 0.0
      %v5816 = vmax.f32 %v5784, 0.0
      %v5817 = vmax.f32 %v5785, 0.0
      %v5818 = vmax.f32 %v5786, 0.0
      %v5819 = vmax.f32 %v5787, 0.0
      %v5820 = vmax.f32 %v5788, 0.0
      %v5821 = vmax.f32 %v5789, 0.0
      %v5822 = vmax.f32 %v5790, 0.0
      %v5823 = vmax.f32 %v5791, 0.0
      %v5824 = vmax.f32 %v5792, 0.0
      %v5825 = vmax.f32 %v5793, 0.0
      %v5826 = vmax.f32 %v5794, 0.0
      %v5827 = vmax.f32 %v5795, 0.0
      %v5828 = vmax.f32 %v5796, 0.0
      %v5829 = vmax.f32 %v5797, 0.0
      %v5830 = vmax.f32 %v5798, 0.0
      %v5831 = vmax.f32 %v5799, 0.0
      %v5832 = vmax.f32 %v5800, 0.0
      %v5833 = vmax.f32 %v5801, 0.0
      %v5834 = vmax.f32 %v5802, 0.0
      %v5835 = vmax.f32 %v5803, 0.0
      %v5836 = vmax.f32 %v5804, 0.0
      %v5837 = vmax.f32 %v5805, 0.0
      %v5838 = vmax.f32 %v5806, 0.0
      %v5839 = vmax.f32 %v5807, 0.0
      %v5840 = vmax.f32 %v5808, 0.0
      %v5841 = vmax.f32 %v5809, 0.0
      %v5842 = vmax.f32 %v5810, 0.0
      %v5843 = vmax.f32 %v5811, 0.0
      %v5844 = vmax.f32 %v5812, 0.0
      %v5845 = vmax.f32 %v5813, 0.0
      %v5846 = vmax.f32 %v5814, 0.0
      %5847 = vst.msk [vmem:[%s224] sm:$0xff] %vm314, %v5815
      %5848 = vst.msk [vmem:[%s224 + $0x8] sm:$0xff] %vm314, %v5816
      %5849 = vst.msk [vmem:[%s224 + $0x10] sm:$0xff] %vm314, %v5817
      %5850 = vst.msk [vmem:[%s224 + $0x18] sm:$0xff] %vm314, %v5818
      %5851 = vst.msk [vmem:[%s224 + $0x20] sm:$0xff] %vm314, %v5819
      %5852 = vst.msk [vmem:[%s224 + $0x28] sm:$0xff] %vm314, %v5820
      %5853 = vst.msk [vmem:[%s224 + $0x30] sm:$0xff] %vm314, %v5821
      %5854 = vst.msk [vmem:[%s224 + $0x38] sm:$0xff] %vm314, %v5822
      %5855 = vst.msk [vmem:[%s224 + $0x40] sm:$0xff] %vm314, %v5823
      %5856 = vst.msk [vmem:[%s224 + $0x48] sm:$0xff] %vm314, %v5824
      %5857 = vst.msk [vmem:[%s224 + $0x50] sm:$0xff] %vm314, %v5825
      %5858 = vst.msk [vmem:[%s224 + $0x58] sm:$0xff] %vm314, %v5826
      %5859 = vst.msk [vmem:[%s224 + $0x60] sm:$0xff] %vm314, %v5827
      %5860 = vst.msk [vmem:[%s224 + $0x68] sm:$0xff] %vm314, %v5828
      %5861 = vst.msk [vmem:[%s224 + $0x70] sm:$0xff] %vm314, %v5829
      %5862 = vst.msk [vmem:[%s224 + $0x78] sm:$0xff] %vm314, %v5830
      %5863 = vst.msk [vmem:[%s224 + $0x80] sm:$0xff] %vm314, %v5831
      %5864 = vst.msk [vmem:[%s224 + $0x88] sm:$0xff] %vm314, %v5832
      %5865 = vst.msk [vmem:[%s224 + $0x90] sm:$0xff] %vm314, %v5833
      %5866 = vst.msk [vmem:[%s224 + $0x98] sm:$0xff] %vm314, %v5834
      %5867 = vst.msk [vmem:[%s224 + $0xa0] sm:$0xff] %vm314, %v5835
      %5868 = vst.msk [vmem:[%s224 + $0xa8] sm:$0xff] %vm314, %v5836
      %5869 = vst.msk [vmem:[%s224 + $0xb0] sm:$0xff] %vm314, %v5837
      %5870 = vst.msk [vmem:[%s224 + $0xb8] sm:$0xff] %vm314, %v5838
      %5871 = vst.msk [vmem:[%s224 + $0xc0] sm:$0xff] %vm314, %v5839
      %5872 = vst.msk [vmem:[%s224 + $0xc8] sm:$0xff] %vm314, %v5840
      %5873 = vst.msk [vmem:[%s224 + $0xd0] sm:$0xff] %vm314, %v5841
      %5874 = vst.msk [vmem:[%s224 + $0xd8] sm:$0xff] %vm314, %v5842
      %5875 = vst.msk [vmem:[%s224 + $0xe0] sm:$0xff] %vm314, %v5843
      %5876 = vst.msk [vmem:[%s224 + $0xe8] sm:$0xff] %vm314, %v5844
      %5877 = vst.msk [vmem:[%s224 + $0xf0] sm:$0xff] %vm314, %v5845
      %5878 = vst.msk [vmem:[%s224 + $0xf8] sm:$0xff] %vm314, %v5846
      %p5879 = scmp.lt.s32.totalorder %s16, 1
      %s5880 = scalar_select %p5879, %s16, 1
      %s5881 = smul.addr %s5880, 32
      %s5882 = smul.addr %s5881, 8
      %s5883 = scalar_lea.vmem %s5, %s5882
      // Predicated region
      $region45: #{tpu_custom_call.1} parent=39 // pred_check
        %p5884 = pneg %p144
      $region46: #{tpu_custom_call.1} parent=39 // pred_check_branch
        %5886 = sbr.rel (%p5884) target = $region48
      $region47: #{tpu_custom_call.1} parent=39 // pred_region
        _
      $region48: #{tpu_custom_call.1} parent=39 // pred_fallthru
        _
    $region40: #{tpu_custom_call.1} parent=5 // pred_fallthru
      _
    %p5887 = scmp.le.s32.totalorder 2, %s11
    // Predicated region
    $region49: #{tpu_custom_call.1} parent=5 // pred_check
      %p5888 = pneg %p5887
    $region50: #{tpu_custom_call.1} parent=5 // pred_check_branch
      %5890 = sbr.rel (%p5888) target = $region52
    $region51: #{tpu_custom_call.1} parent=5 // pred_region
      %s5891 = ssub.s32 %s11, 2
      // Predicated region
      $region53: #{tpu_custom_call.1} parent=51 // pred_check
        %p5892 = pneg %p150
      $region54: #{tpu_custom_call.1} parent=51 // pred_check_branch
        %5894 = sbr.rel (%p5892) target = $region56
      $region55: #{tpu_custom_call.1} parent=51 // pred_region
        %p5895 = scmp.lt.s32.totalorder %s17, 1
        %s5896 = scalar_select %p5895, %s17, 1
        %s5897 = smul.addr %s5896, 32
        %s5898 = smul.addr %s5897, 8
        %s5899 = scalar_lea.vmem %s5, %s5898
      $region56: #{tpu_custom_call.1} parent=51 // pred_fallthru
        _
    $region52: #{tpu_custom_call.1} parent=5 // pred_fallthru
      _
  $region6: #{tpu_custom_call.1} parent=0 // loop_footer
    %s15 = sadd.s32 1, %s11
  $region7: #{tpu_custom_call.1} parent=0 // loop_footer_branch
    %10 = sbr.rel target = $region3
  $region8: #{tpu_custom_call.1} parent=0 // loop_exit
    _

</llo_original>
